<compile_context>
chip_gen: v7x
topology: tpu7x:2x2x1
jax: 0.10.0
libtpu: 0.0.40
codegen_flags: <defaults>
</compile_context>

<pallas_src>
import jax
import jax.numpy as jnp
import numpy as np
from jax.experimental import pallas as pl
from jax.experimental.pallas import tpu as pltpu

LANE = 128
VMEM_SPEC = pl.BlockSpec(memory_space=pltpu.MemorySpace.VMEM)


def _round_up(x, m):
    return ((x + m - 1) // m) * m


def _pad_to(a, shape):
    pads = [(0, t - s) for s, t in zip(a.shape, shape)]
    return jnp.pad(a, pads)


# ----------------------------- fused Pallas kernel -----------------------------

def _fused_forward_kernel(
        # encoders: Linear weights pre-transposed & padded, embeddings pre-gathered
        prot_x_ref, wpT_ref, bp_ref, pemb_ref,
        term_x_ref, wtT_ref, bt_ref, temb_ref,
        # dense row-normalized adjacency (mean aggregation)
        a_pt_ref, a_tp_ref,
        # SAGE weights: pre-concatenated [W_l^T ; W_r^T] (2H, H) + bias (1, H)
        w1_pt_ref, b1_pt_ref, w1_tp_ref, b1_tp_ref,
        w2_pt_ref, b2_pt_ref, w2_tp_ref, b2_tp_ref,
        # classifier edge-endpoint one-hot selectors
        sel_p_ref, sel_t_ref,
        # output: per-edge sigmoid score
        o_ref):
    f32 = jnp.float32

    # --- node encoders: Linear(x) + Embedding(node_id) ---
    x_prot = (jnp.dot(prot_x_ref[...], wpT_ref[...], preferred_element_type=f32)
              + bp_ref[...] + pemb_ref[...])
    x_term = (jnp.dot(term_x_ref[...], wtT_ref[...], preferred_element_type=f32)
              + bt_ref[...] + temb_ref[...])

    def sage(adj, x_src, x_dst, w_cat, b):
        # PyG SAGEConv (mean aggr, root_weight=True):
        #   lin_l(mean_{j in N(i)} x_src_j) + lin_r(x_dst_i)
        # fused into one K=2H MXU matmul via feature-axis concat.
        agg = jnp.dot(adj, x_src, preferred_element_type=f32)
        cat = jnp.concatenate([agg, x_dst], axis=-1)
        return jnp.dot(cat, w_cat, preferred_element_type=f32) + b

    # --- hetero GNN layer 1 (+ ReLU) ---
    h_term = jnp.maximum(
        sage(a_pt_ref[...], x_prot, x_term, w1_pt_ref[...], b1_pt_ref[...]), 0.0)
    h_prot = jnp.maximum(
        sage(a_tp_ref[...], x_term, x_prot, w1_tp_ref[...], b1_tp_ref[...]), 0.0)

    # --- hetero GNN layer 2 ---
    o_term = sage(a_pt_ref[...], h_prot, h_term, w2_pt_ref[...], b2_pt_ref[...])
    o_prot = sage(a_tp_ref[...], h_term, h_prot, w2_tp_ref[...], b2_tp_ref[...])

    # --- classifier: endpoint gather (one-hot matmul), dot product, sigmoid ---
    ep = jnp.dot(sel_p_ref[...], o_prot, preferred_element_type=f32)
    et = jnp.dot(sel_t_ref[...], o_term, preferred_element_type=f32)
    s = jnp.sum(ep * et, axis=-1, keepdims=True)
    o_ref[...] = jax.nn.sigmoid(s)


# ------------------------------- JAX glue ---------------------------------

def build_mean_adj(edge_index, n_src, n_dst):
    """Dense row-normalized adjacency A[dst, src]; A @ x_src == mean aggr."""
    src, dst = edge_index[0], edge_index[1]
    a = jnp.zeros((n_dst, n_src), jnp.float32).at[dst, src].add(1.0)
    deg = a.sum(axis=1, keepdims=True)
    return a / jnp.where(deg > 0.0, deg, 1.0)


def init_params(key, hidden, n_prot, n_term):
    """Torch-style parameter init (shared by kernel params and the reference)."""
    ks = iter(jax.random.split(key, 32))

    def lin(out_d, in_d, bias=True):
        bound = 1.0 / np.sqrt(in_d)
        w = jax.random.uniform(next(ks), (out_d, in_d), jnp.float32, -bound, bound)
        b = (jax.random.uniform(next(ks), (out_d,), jnp.float32, -bound, bound)
             if bias else None)
        return w, b

    def sage(h):
        w_l, b_l = lin(h, h, bias=True)    # lin_l (aggregated neighbors), bias
        w_r, _ = lin(h, h, bias=False)     # lin_r (root), no bias
        return (w_l, b_l, w_r)

    params = {}
    params["prot_lin_w"], params["prot_lin_b"] = lin(hidden, 1024)
    params["term_lin_w"], params["term_lin_b"] = lin(hidden, 200)
    params["prot_emb"] = jax.random.normal(next(ks), (n_prot, hidden), jnp.float32)
    params["term_emb"] = jax.random.normal(next(ks), (n_term, hidden), jnp.float32)
    # to_hetero: one SAGEConv per edge type per layer.
    params["conv1_pt"] = sage(hidden)   # protein -> term
    params["conv1_tp"] = sage(hidden)   # term -> protein (reverse edge type)
    params["conv2_pt"] = sage(hidden)
    params["conv2_tp"] = sage(hidden)
    return params


def prepare_kernel_params(params):
    """One-time layout prep: pre-transpose, pad hidden->128, concat SAGE weights."""
    hidden = params["prot_lin_w"].shape[0]
    h_pad = _round_up(hidden, LANE)
    prot_in_pad = _round_up(params["prot_lin_w"].shape[1], LANE)   # 1024
    term_in_pad = _round_up(params["term_lin_w"].shape[1], LANE)   # 200 -> 256

    kp = {}
    kp["wpT"] = _pad_to(params["prot_lin_w"].T, (prot_in_pad, h_pad))
    kp["bp"] = _pad_to(params["prot_lin_b"].reshape(1, -1), (1, h_pad))
    kp["wtT"] = _pad_to(params["term_lin_w"].T, (term_in_pad, h_pad))
    kp["bt"] = _pad_to(params["term_lin_b"].reshape(1, -1), (1, h_pad))
    kp["prot_emb"] = _pad_to(params["prot_emb"],
                             (params["prot_emb"].shape[0], h_pad))
    kp["term_emb"] = _pad_to(params["term_emb"],
                             (params["term_emb"].shape[0], h_pad))

    def sage_cat(w_l, b_l, w_r):
        wl = _pad_to(w_l.T, (h_pad, h_pad))
        wr = _pad_to(w_r.T, (h_pad, h_pad))
        w_cat = jnp.concatenate([wl, wr], axis=0)          # (2H, H)
        return w_cat, _pad_to(b_l.reshape(1, -1), (1, h_pad))

    kp["w1_pt"], kp["b1_pt"] = sage_cat(*params["conv1_pt"])
    kp["w1_tp"], kp["b1_tp"] = sage_cat(*params["conv1_tp"])
    kp["w2_pt"], kp["b2_pt"] = sage_cat(*params["conv2_pt"])
    kp["w2_tp"], kp["b2_tp"] = sage_cat(*params["conv2_tp"])
    return kp


def model_forward(kparams, prot_x, term_x, prot_id, term_id,
                  edge_pt, edge_tp, edge_label_index):
    n_prot = prot_x.shape[0]
    n_term = term_x.shape[0]
    n_label = edge_label_index.shape[1]

    h_pad = kparams["wpT"].shape[1]
    prot_in_pad = kparams["wpT"].shape[0]
    term_in_pad = kparams["wtT"].shape[0]
    np_pad = _round_up(n_prot, LANE)
    nt_pad = _round_up(n_term, LANE)
    e_pad = _round_up(n_label, LANE)

    # Zero-padding of data / gathered embeddings.  Padded (fake) nodes have no
    # edges (zero adjacency columns) and are never selected by
    # edge_label_index, so they cannot contaminate real outputs.
    prot_x_p = _pad_to(prot_x, (np_pad, prot_in_pad))
    term_x_p = _pad_to(term_x, (nt_pad, term_in_pad))
    pemb = _pad_to(jnp.take(kparams["prot_emb"], prot_id, axis=0), (np_pad, h_pad))
    temb = _pad_to(jnp.take(kparams["term_emb"], term_id, axis=0), (nt_pad, h_pad))

    # Dense mean-aggregation adjacency (built padded; zero rows/cols for pads).
    a_pt = build_mean_adj(edge_pt, np_pad, nt_pad)   # [nt_pad, np_pad]
    a_tp = build_mean_adj(edge_tp, nt_pad, np_pad)   # [np_pad, nt_pad]

    # One-hot edge-endpoint selectors so the classifier gather is an MXU matmul
    # inside the kernel (GNN outputs never round-trip through HBM).
    rows = jnp.arange(n_label)
    sel_p = jnp.zeros((e_pad, np_pad), jnp.float32).at[
        rows, edge_label_index[0]].set(1.0)
    sel_t = jnp.zeros((e_pad, nt_pad), jnp.float32).at[
        rows, edge_label_index[1]].set(1.0)

    args = (prot_x_p, kparams["wpT"], kparams["bp"], pemb,
            term_x_p, kparams["wtT"], kparams["bt"], temb,
            a_pt, a_tp,
            kparams["w1_pt"], kparams["b1_pt"], kparams["w1_tp"], kparams["b1_tp"],
            kparams["w2_pt"], kparams["b2_pt"], kparams["w2_tp"], kparams["b2_tp"],
            sel_p, sel_t)

    pred = pl.pallas_call(
        _fused_forward_kernel,
        out_shape=jax.ShapeDtypeStruct((e_pad, 1), jnp.float32),
        in_specs=[VMEM_SPEC] * len(args),
        out_specs=VMEM_SPEC,
        compiler_params=pltpu.CompilerParams(
            vmem_limit_bytes=32 * 1024 * 1024),
    )(*args)
    return pred[:n_label, 0]


def model_forward_ref(params, prot_x, term_x, prot_id, term_id,
                      edge_pt, edge_tp, edge_label_index):
    """Pure-JAX reference (unpadded) for sanity checking."""
    def lin(x, w, b):
        return x @ w.T + b

    def sage(adj, xs, xd, w_l, b_l, w_r):
        return (adj @ xs) @ w_l.T + b_l + xd @ w_r.T

    n_prot, n_term = prot_x.shape[0], term_x.shape[0]
    x_prot = lin(prot_x, params["prot_lin_w"], params["prot_lin_b"]) + \
        jnp.take(params["prot_emb"], prot_id, axis=0)
    x_term = lin(term_x, params["term_lin_w"], params["term_lin_b"]) + \
        jnp.take(params["term_emb"], term_id, axis=0)
    a_pt = build_mean_adj(edge_pt, n_prot, n_term)
    a_tp = build_mean_adj(edge_tp, n_term, n_prot)
    h_term = jax.nn.relu(sage(a_pt, x_prot, x_term, *params["conv1_pt"]))
    h_prot = jax.nn.relu(sage(a_tp, x_term, x_prot, *params["conv1_tp"]))
    o_term = sage(a_pt, h_prot, h_term, *params["conv2_pt"])
    o_prot = sage(a_tp, h_term, h_prot, *params["conv2_tp"])
    ep = jnp.take(o_prot, edge_label_index[0], axis=0)
    et = jnp.take(o_term, edge_label_index[1], axis=0)
    return jax.nn.sigmoid(jnp.sum(ep * et, axis=-1))


# --------------------------------- main ------------------------------------

if __name__ == "__main__":
    hidden = 32
    n_prot, n_term = 8, 8
    n_edges, n_label = 16, 12

    key = jax.random.PRNGKey(0)
    k_params, k_px, k_tx, k_e1, k_e2, k_l1, k_l2 = jax.random.split(key, 7)

    params = init_params(k_params, hidden, n_prot, n_term)
    kparams = prepare_kernel_params(params)   # one-time transpose/pad/concat

    prot_x = jax.random.normal(k_px, (n_prot, 1024), jnp.float32)
    term_x = jax.random.normal(k_tx, (n_term, 200), jnp.float32)
    prot_id = jnp.arange(n_prot, dtype=jnp.int32)
    term_id = jnp.arange(n_term, dtype=jnp.int32)

    # ('protein','function','term') edges and their reverse edge type.
    edge_pt = jnp.stack([
        jax.random.randint(k_e1, (n_edges,), 0, n_prot, dtype=jnp.int32),
        jax.random.randint(k_e2, (n_edges,), 0, n_term, dtype=jnp.int32),
    ])
    edge_tp = jnp.stack([edge_pt[1], edge_pt[0]])

    edge_label_index = jnp.stack([
        jax.random.randint(k_l1, (n_label,), 0, n_prot, dtype=jnp.int32),
        jax.random.randint(k_l2, (n_label,), 0, n_term, dtype=jnp.int32),
    ])

    fwd = jax.jit(model_forward)
    pred = jax.block_until_ready(
        fwd(kparams, prot_x, term_x, prot_id, term_id,
            edge_pt, edge_tp, edge_label_index))

    ref = jax.block_until_ready(
        model_forward_ref(params, prot_x, term_x, prot_id, term_id,
                          edge_pt, edge_tp, edge_label_index))

    assert pred.shape == (n_label,)
    np.testing.assert_allclose(np.asarray(pred), np.asarray(ref),
                               rtol=1e-2, atol=1e-3)
    print("KERNEL_OK")
</pallas_src>

<mosaic_0001>
module attributes {stable_mosaic.version = 11 : i64} {
  func.func private @main(%arg0: i32) attributes {dimension_semantics = [#tpu.dimension_semantics<core_parallel>], iteration_bounds = array<i64: 2>, tpu.core_type = #tpu.core_type<sc_scalar_subcore>, window_params = []} {
    return
  }
}

module attributes {stable_mosaic.version = 11 : i64} {
  func.func private @main(%arg0: i32) attributes {dimension_semantics = [#tpu.dimension_semantics<core_parallel>], iteration_bounds = array<i64: 2>, tpu.core_type = #tpu.core_type<sc_scalar_subcore>, window_params = []} {
    return
  }
}

module attributes {stable_mosaic.version = 11 : i64} {
  func.func @_fused_forward_kernel(%arg0: memref<128x1024xf32, #tpu.memory_space<vmem>>, %arg1: memref<1024x128xf32, #tpu.memory_space<vmem>>, %arg2: memref<1x128xf32, #tpu.memory_space<vmem>>, %arg3: memref<128x128xf32, #tpu.memory_space<vmem>>, %arg4: memref<128x256xf32, #tpu.memory_space<vmem>>, %arg5: memref<256x128xf32, #tpu.memory_space<vmem>>, %arg6: memref<1x128xf32, #tpu.memory_space<vmem>>, %arg7: memref<128x128xf32, #tpu.memory_space<vmem>>, %arg8: memref<128x128xf32, #tpu.memory_space<vmem>>, %arg9: memref<128x128xf32, #tpu.memory_space<vmem>>, %arg10: memref<256x128xf32, #tpu.memory_space<vmem>>, %arg11: memref<1x128xf32, #tpu.memory_space<vmem>>, %arg12: memref<256x128xf32, #tpu.memory_space<vmem>>, %arg13: memref<1x128xf32, #tpu.memory_space<vmem>>, %arg14: memref<256x128xf32, #tpu.memory_space<vmem>>, %arg15: memref<1x128xf32, #tpu.memory_space<vmem>>, %arg16: memref<256x128xf32, #tpu.memory_space<vmem>>, %arg17: memref<1x128xf32, #tpu.memory_space<vmem>>, %arg18: memref<128x128xf32, #tpu.memory_space<vmem>>, %arg19: memref<128x128xf32, #tpu.memory_space<vmem>>, %arg20: memref<128x1xf32, #tpu.memory_space<vmem>>) attributes {dimension_semantics = [], scalar_prefetch = 0 : i64, scratch_operands = 0 : i64, tpu.core_type = #tpu.core_type<tc>} {
    %c0 = arith.constant 0 : index
    %c0_0 = arith.constant 0 : index
    %0 = vector.load %arg0[%c0, %c0_0] : memref<128x1024xf32, #tpu.memory_space<vmem>>, vector<128x1024xf32>
    %c0_1 = arith.constant 0 : index
    %c0_2 = arith.constant 0 : index
    %1 = vector.load %arg1[%c0_1, %c0_2] : memref<1024x128xf32, #tpu.memory_space<vmem>>, vector<1024x128xf32>
    %cst = arith.constant dense<0.000000e+00> : vector<128x128xf32>
    %2 = tpu.matmul %0, %1, %cst {dimension_numbers = #tpu.dot_dimension_numbers<[1], [0], [0], [1], [0, 0, 1, 1], [], []>} : vector<128x1024xf32>, vector<1024x128xf32>, vector<128x128xf32> -> vector<128x128xf32>
    %c0_3 = arith.constant 0 : index
    %c0_4 = arith.constant 0 : index
    %3 = vector.load %arg2[%c0_3, %c0_4] : memref<1x128xf32, #tpu.memory_space<vmem>>, vector<1x128xf32>
    %4 = vector.broadcast %3 : vector<1x128xf32> to vector<128x128xf32>
    %5 = arith.addf %2, %4 : vector<128x128xf32>
    %c0_5 = arith.constant 0 : index
    %c0_6 = arith.constant 0 : index
    %6 = vector.load %arg3[%c0_5, %c0_6] : memref<128x128xf32, #tpu.memory_space<vmem>>, vector<128x128xf32>
    %7 = arith.addf %5, %6 : vector<128x128xf32>
    %c0_7 = arith.constant 0 : index
    %c0_8 = arith.constant 0 : index
    %8 = vector.load %arg4[%c0_7, %c0_8] : memref<128x256xf32, #tpu.memory_space<vmem>>, vector<128x256xf32>
    %c0_9 = arith.constant 0 : index
    %c0_10 = arith.constant 0 : index
    %9 = vector.load %arg5[%c0_9, %c0_10] : memref<256x128xf32, #tpu.memory_space<vmem>>, vector<256x128xf32>
    %cst_11 = arith.constant dense<0.000000e+00> : vector<128x128xf32>
    %10 = tpu.matmul %8, %9, %cst_11 {dimension_numbers = #tpu.dot_dimension_numbers<[1], [0], [0], [1], [0, 0, 1, 1], [], []>} : vector<128x256xf32>, vector<256x128xf32>, vector<128x128xf32> -> vector<128x128xf32>
    %c0_12 = arith.constant 0 : index
    %c0_13 = arith.constant 0 : index
    %11 = vector.load %arg6[%c0_12, %c0_13] : memref<1x128xf32, #tpu.memory_space<vmem>>, vector<1x128xf32>
    %12 = vector.broadcast %11 : vector<1x128xf32> to vector<128x128xf32>
    %13 = arith.addf %10, %12 : vector<128x128xf32>
    %c0_14 = arith.constant 0 : index
    %c0_15 = arith.constant 0 : index
    %14 = vector.load %arg7[%c0_14, %c0_15] : memref<128x128xf32, #tpu.memory_space<vmem>>, vector<128x128xf32>
    %15 = arith.addf %13, %14 : vector<128x128xf32>
    %c0_16 = arith.constant 0 : index
    %c0_17 = arith.constant 0 : index
    %16 = vector.load %arg8[%c0_16, %c0_17] : memref<128x128xf32, #tpu.memory_space<vmem>>, vector<128x128xf32>
    %c0_18 = arith.constant 0 : index
    %c0_19 = arith.constant 0 : index
    %17 = vector.load %arg10[%c0_18, %c0_19] : memref<256x128xf32, #tpu.memory_space<vmem>>, vector<256x128xf32>
    %c0_20 = arith.constant 0 : index
    %c0_21 = arith.constant 0 : index
    %18 = vector.load %arg11[%c0_20, %c0_21] : memref<1x128xf32, #tpu.memory_space<vmem>>, vector<1x128xf32>
    %cst_22 = arith.constant dense<0.000000e+00> : vector<128x128xf32>
    %19 = tpu.matmul %16, %7, %cst_22 {dimension_numbers = #tpu.dot_dimension_numbers<[1], [0], [0], [1], [0, 0, 1, 1], [], []>} : vector<128x128xf32>, vector<128x128xf32>, vector<128x128xf32> -> vector<128x128xf32>
    %20 = tpu.concatenate %19, %15 in 1 : vector<128x128xf32>, vector<128x128xf32> -> vector<128x256xf32>
    %cst_23 = arith.constant dense<0.000000e+00> : vector<128x128xf32>
    %21 = tpu.matmul %20, %17, %cst_23 {dimension_numbers = #tpu.dot_dimension_numbers<[1], [0], [0], [1], [0, 0, 1, 1], [], []>} : vector<128x256xf32>, vector<256x128xf32>, vector<128x128xf32> -> vector<128x128xf32>
    %22 = vector.broadcast %18 : vector<1x128xf32> to vector<128x128xf32>
    %23 = arith.addf %21, %22 : vector<128x128xf32>
    %cst_24 = arith.constant 0.000000e+00 : f32
    %24 = vector.broadcast %cst_24 : f32 to vector<128x128xf32>
    %25 = arith.maximumf %23, %24 : vector<128x128xf32>
    %c0_25 = arith.constant 0 : index
    %c0_26 = arith.constant 0 : index
    %26 = vector.load %arg9[%c0_25, %c0_26] : memref<128x128xf32, #tpu.memory_space<vmem>>, vector<128x128xf32>
    %c0_27 = arith.constant 0 : index
    %c0_28 = arith.constant 0 : index
    %27 = vector.load %arg12[%c0_27, %c0_28] : memref<256x128xf32, #tpu.memory_space<vmem>>, vector<256x128xf32>
    %c0_29 = arith.constant 0 : index
    %c0_30 = arith.constant 0 : index
    %28 = vector.load %arg13[%c0_29, %c0_30] : memref<1x128xf32, #tpu.memory_space<vmem>>, vector<1x128xf32>
    %cst_31 = arith.constant dense<0.000000e+00> : vector<128x128xf32>
    %29 = tpu.matmul %26, %15, %cst_31 {dimension_numbers = #tpu.dot_dimension_numbers<[1], [0], [0], [1], [0, 0, 1, 1], [], []>} : vector<128x128xf32>, vector<128x128xf32>, vector<128x128xf32> -> vector<128x128xf32>
    %30 = tpu.concatenate %29, %7 in 1 : vector<128x128xf32>, vector<128x128xf32> -> vector<128x256xf32>
    %cst_32 = arith.constant dense<0.000000e+00> : vector<128x128xf32>
    %31 = tpu.matmul %30, %27, %cst_32 {dimension_numbers = #tpu.dot_dimension_numbers<[1], [0], [0], [1], [0, 0, 1, 1], [], []>} : vector<128x256xf32>, vector<256x128xf32>, vector<128x128xf32> -> vector<128x128xf32>
    %32 = vector.broadcast %28 : vector<1x128xf32> to vector<128x128xf32>
    %33 = arith.addf %31, %32 : vector<128x128xf32>
    %cst_33 = arith.constant 0.000000e+00 : f32
    %34 = vector.broadcast %cst_33 : f32 to vector<128x128xf32>
    %35 = arith.maximumf %33, %34 : vector<128x128xf32>
    %c0_34 = arith.constant 0 : index
    %c0_35 = arith.constant 0 : index
    %36 = vector.load %arg8[%c0_34, %c0_35] : memref<128x128xf32, #tpu.memory_space<vmem>>, vector<128x128xf32>
    %c0_36 = arith.constant 0 : index
    %c0_37 = arith.constant 0 : index
    %37 = vector.load %arg14[%c0_36, %c0_37] : memref<256x128xf32, #tpu.memory_space<vmem>>, vector<256x128xf32>
    %c0_38 = arith.constant 0 : index
    %c0_39 = arith.constant 0 : index
    %38 = vector.load %arg15[%c0_38, %c0_39] : memref<1x128xf32, #tpu.memory_space<vmem>>, vector<1x128xf32>
    %cst_40 = arith.constant dense<0.000000e+00> : vector<128x128xf32>
    %39 = tpu.matmul %36, %35, %cst_40 {dimension_numbers = #tpu.dot_dimension_numbers<[1], [0], [0], [1], [0, 0, 1, 1], [], []>} : vector<128x128xf32>, vector<128x128xf32>, vector<128x128xf32> -> vector<128x128xf32>
    %40 = tpu.concatenate %39, %25 in 1 : vector<128x128xf32>, vector<128x128xf32> -> vector<128x256xf32>
    %cst_41 = arith.constant dense<0.000000e+00> : vector<128x128xf32>
    %41 = tpu.matmul %40, %37, %cst_41 {dimension_numbers = #tpu.dot_dimension_numbers<[1], [0], [0], [1], [0, 0, 1, 1], [], []>} : vector<128x256xf32>, vector<256x128xf32>, vector<128x128xf32> -> vector<128x128xf32>
    %42 = vector.broadcast %38 : vector<1x128xf32> to vector<128x128xf32>
    %43 = arith.addf %41, %42 : vector<128x128xf32>
    %c0_42 = arith.constant 0 : index
    %c0_43 = arith.constant 0 : index
    %44 = vector.load %arg9[%c0_42, %c0_43] : memref<128x128xf32, #tpu.memory_space<vmem>>, vector<128x128xf32>
    %c0_44 = arith.constant 0 : index
    %c0_45 = arith.constant 0 : index
    %45 = vector.load %arg16[%c0_44, %c0_45] : memref<256x128xf32, #tpu.memory_space<vmem>>, vector<256x128xf32>
    %c0_46 = arith.constant 0 : index
    %c0_47 = arith.constant 0 : index
    %46 = vector.load %arg17[%c0_46, %c0_47] : memref<1x128xf32, #tpu.memory_space<vmem>>, vector<1x128xf32>
    %cst_48 = arith.constant dense<0.000000e+00> : vector<128x128xf32>
    %47 = tpu.matmul %44, %25, %cst_48 {dimension_numbers = #tpu.dot_dimension_numbers<[1], [0], [0], [1], [0, 0, 1, 1], [], []>} : vector<128x128xf32>, vector<128x128xf32>, vector<128x128xf32> -> vector<128x128xf32>
    %48 = tpu.concatenate %47, %35 in 1 : vector<128x128xf32>, vector<128x128xf32> -> vector<128x256xf32>
    %cst_49 = arith.constant dense<0.000000e+00> : vector<128x128xf32>
    %49 = tpu.matmul %48, %45, %cst_49 {dimension_numbers = #tpu.dot_dimension_numbers<[1], [0], [0], [1], [0, 0, 1, 1], [], []>} : vector<128x256xf32>, vector<256x128xf32>, vector<128x128xf32> -> vector<128x128xf32>
    %50 = vector.broadcast %46 : vector<1x128xf32> to vector<128x128xf32>
    %51 = arith.addf %49, %50 : vector<128x128xf32>
    %c0_50 = arith.constant 0 : index
    %c0_51 = arith.constant 0 : index
    %52 = vector.load %arg18[%c0_50, %c0_51] : memref<128x128xf32, #tpu.memory_space<vmem>>, vector<128x128xf32>
    %cst_52 = arith.constant dense<0.000000e+00> : vector<128x128xf32>
    %53 = tpu.matmul %52, %51, %cst_52 {dimension_numbers = #tpu.dot_dimension_numbers<[1], [0], [0], [1], [0, 0, 1, 1], [], []>} : vector<128x128xf32>, vector<128x128xf32>, vector<128x128xf32> -> vector<128x128xf32>
    %c0_53 = arith.constant 0 : index
    %c0_54 = arith.constant 0 : index
    %54 = vector.load %arg19[%c0_53, %c0_54] : memref<128x128xf32, #tpu.memory_space<vmem>>, vector<128x128xf32>
    %cst_55 = arith.constant dense<0.000000e+00> : vector<128x128xf32>
    %55 = tpu.matmul %54, %43, %cst_55 {dimension_numbers = #tpu.dot_dimension_numbers<[1], [0], [0], [1], [0, 0, 1, 1], [], []>} : vector<128x128xf32>, vector<128x128xf32>, vector<128x128xf32> -> vector<128x128xf32>
    %56 = arith.mulf %53, %55 : vector<128x128xf32>
    %cst_56 = arith.constant dense<0.000000e+00> : vector<128xf32>
    %57 = vector.multi_reduction <add>, %56, %cst_56 [1] : vector<128x128xf32> to vector<128xf32>
    %58 = vector.shape_cast %57 : vector<128xf32> to vector<128x1xf32>
    %59 = arith.negf %58 : vector<128x1xf32>
    %60 = math.exp %59 : vector<128x1xf32>
    %cst_57 = arith.constant 1.000000e+00 : f32
    %61 = vector.broadcast %cst_57 : f32 to vector<128x1xf32>
    %62 = arith.addf %61, %60 : vector<128x1xf32>
    %63 = arith.divf %61, %62 : vector<128x1xf32>
    %c0_58 = arith.constant 0 : index
    %c0_59 = arith.constant 0 : index
    %64 = vector.load %arg20[%c0_58, %c0_59] : memref<128x1xf32, #tpu.memory_space<vmem>>, vector<128x1xf32>
    tpu.vector_store %arg20[%c0_58, %c0_59], %63 {strides = array<i32>} : memref<128x1xf32, #tpu.memory_space<vmem>>, vector<128x1xf32>,
    return
  }
}

</mosaic_0001>

<llo_original>
// kernel: model_forward.1
$region0: #{model_forward.1}
  #allocation0 [shape = 'u32[]', space=smem, size = 0x4, offset = 0x4, fixed_abs, tag = 'smem constant byte address 0x4 - core index']
  #allocation1 [shape = 'u32[144,128]{1,0:T(1,128)}', space=vmem, size = 0x12000, scoped, tag = 'internal scratch']
  %s0 = inlined_call_operand.vmem [shape: f32[128,1024], index: 0, kind: input, shape index: {}]
  %s1 = inlined_call_operand.vmem [shape: f32[1024,128], index: 1, kind: input, shape index: {}]
  %s2 = inlined_call_operand.vmem [shape: f32[1,128], index: 2, kind: input, shape index: {}]
  %s3 = inlined_call_operand.vmem [shape: f32[128,128], index: 3, kind: input, shape index: {}]
  %s4 = inlined_call_operand.vmem [shape: f32[128,256], index: 4, kind: input, shape index: {}]
  %s5 = inlined_call_operand.vmem [shape: f32[256,128], index: 5, kind: input, shape index: {}]
  %s6 = inlined_call_operand.vmem [shape: f32[1,128], index: 6, kind: input, shape index: {}]
  %s7 = inlined_call_operand.vmem [shape: f32[128,128], index: 7, kind: input, shape index: {}]
  %s8 = inlined_call_operand.vmem [shape: f32[128,128], index: 8, kind: input, shape index: {}]
  %s9 = inlined_call_operand.vmem [shape: f32[128,128], index: 9, kind: input, shape index: {}]
  %s10 = inlined_call_operand.vmem [shape: f32[256,128], index: 10, kind: input, shape index: {}]
  %s11 = inlined_call_operand.vmem [shape: f32[1,128], index: 11, kind: input, shape index: {}]
  %s12 = inlined_call_operand.vmem [shape: f32[256,128], index: 12, kind: input, shape index: {}]
  %s13 = inlined_call_operand.vmem [shape: f32[1,128], index: 13, kind: input, shape index: {}]
  %s14 = inlined_call_operand.vmem [shape: f32[256,128], index: 14, kind: input, shape index: {}]
  %s15 = inlined_call_operand.vmem [shape: f32[1,128], index: 15, kind: input, shape index: {}]
  %s16 = inlined_call_operand.vmem [shape: f32[256,128], index: 16, kind: input, shape index: {}]
  %s17 = inlined_call_operand.vmem [shape: f32[1,128], index: 17, kind: input, shape index: {}]
  %s18 = inlined_call_operand.vmem [shape: f32[128,128], index: 18, kind: input, shape index: {}]
  %s19 = inlined_call_operand.vmem [shape: f32[128,128], index: 19, kind: input, shape index: {}]
  %s20 = inlined_call_operand.vmem [shape: f32[128,1], index: 20, kind: output, shape index: {}]
  %s21 = sld [smem:[#allocation0]]
  $region90: #{model_forward.1} parent=0
    _
  %s23 = ssub.s32 1, %s21
  %s24 = scalar_select 0, %s23, %s21
  // Predicated region
  $region2: #{model_forward.1} parent=0 // pred_check
    _
  $region3: #{model_forward.1} parent=0 // pred_check_branch
    %26 = sbr.rel (0) target = $region5
  $region4: #{model_forward.1} parent=0 // pred_region
    _
  $region5: #{model_forward.1} parent=0 // pred_fallthru
    _
  // Predicated region
  $region6: #{model_forward.1} parent=0 // pred_check
    _
  $region7: #{model_forward.1} parent=0 // pred_check_branch
    %28 = sbr.rel (0) target = $region9
  $region8: #{model_forward.1} parent=0 // pred_region
    _
  $region9: #{model_forward.1} parent=0 // pred_fallthru
    _
  // Predicated region
  $region10: #{model_forward.1} parent=0 // pred_check
    _
  $region11: #{model_forward.1} parent=0 // pred_check_branch
    %30 = sbr.rel (0) target = $region13
  $region12: #{model_forward.1} parent=0 // pred_region
    _
  $region13: #{model_forward.1} parent=0 // pred_fallthru
    _
  // Predicated region
  $region14: #{model_forward.1} parent=0 // pred_check
    _
  $region15: #{model_forward.1} parent=0 // pred_check_branch
    %32 = sbr.rel (0) target = $region17
  $region16: #{model_forward.1} parent=0 // pred_region
    _
  $region17: #{model_forward.1} parent=0 // pred_fallthru
    _
  // Predicated region
  $region18: #{model_forward.1} parent=0 // pred_check
    _
  $region19: #{model_forward.1} parent=0 // pred_check_branch
    %34 = sbr.rel (0) target = $region21
  $region20: #{model_forward.1} parent=0 // pred_region
    _
  $region21: #{model_forward.1} parent=0 // pred_fallthru
    _
  // Predicated region
  $region22: #{model_forward.1} parent=0 // pred_check
    _
  $region23: #{model_forward.1} parent=0 // pred_check_branch
    %36 = sbr.rel (0) target = $region25
  $region24: #{model_forward.1} parent=0 // pred_region
    _
  $region25: #{model_forward.1} parent=0 // pred_fallthru
    _
  // Predicated region
  $region26: #{model_forward.1} parent=0 // pred_check
    _
  $region27: #{model_forward.1} parent=0 // pred_check_branch
    %38 = sbr.rel (0) target = $region29
  $region28: #{model_forward.1} parent=0 // pred_region
    _
  $region29: #{model_forward.1} parent=0 // pred_fallthru
    _
  // Predicated region
  $region30: #{model_forward.1} parent=0 // pred_check
    _
  $region31: #{model_forward.1} parent=0 // pred_check_branch
    %40 = sbr.rel (0) target = $region33
  $region32: #{model_forward.1} parent=0 // pred_region
    _
  $region33: #{model_forward.1} parent=0 // pred_fallthru
    _
  // Predicated region
  $region34: #{model_forward.1} parent=0 // pred_check
    _
  $region35: #{model_forward.1} parent=0 // pred_check_branch
    %42 = sbr.rel (0) target = $region37
  $region36: #{model_forward.1} parent=0 // pred_region
    _
  $region37: #{model_forward.1} parent=0 // pred_fallthru
    _
  // Predicated region
  $region38: #{model_forward.1} parent=0 // pred_check
    _
  $region39: #{model_forward.1} parent=0 // pred_check_branch
    %44 = sbr.rel (0) target = $region41
  $region40: #{model_forward.1} parent=0 // pred_region
    _
  $region41: #{model_forward.1} parent=0 // pred_fallthru
    _
  // Predicated region
  $region42: #{model_forward.1} parent=0 // pred_check
    _
  $region43: #{model_forward.1} parent=0 // pred_check_branch
    %46 = sbr.rel (0) target = $region45
  $region44: #{model_forward.1} parent=0 // pred_region
    _
  $region45: #{model_forward.1} parent=0 // pred_fallthru
    _
  // Predicated region
  $region46: #{model_forward.1} parent=0 // pred_check
    _
  $region47: #{model_forward.1} parent=0 // pred_check_branch
    %48 = sbr.rel (0) target = $region49
  $region48: #{model_forward.1} parent=0 // pred_region
    _
  $region49: #{model_forward.1} parent=0 // pred_fallthru
    _
  // Predicated region
  $region50: #{model_forward.1} parent=0 // pred_check
    _
  $region51: #{model_forward.1} parent=0 // pred_check_branch
    %50 = sbr.rel (0) target = $region53
  $region52: #{model_forward.1} parent=0 // pred_region
    _
  $region53: #{model_forward.1} parent=0 // pred_fallthru
    _
  // Predicated region
  $region54: #{model_forward.1} parent=0 // pred_check
    _
  $region55: #{model_forward.1} parent=0 // pred_check_branch
    %52 = sbr.rel (0) target = $region57
  $region56: #{model_forward.1} parent=0 // pred_region
    _
  $region57: #{model_forward.1} parent=0 // pred_fallthru
    _
  // Predicated region
  $region58: #{model_forward.1} parent=0 // pred_check
    _
  $region59: #{model_forward.1} parent=0 // pred_check_branch
    %54 = sbr.rel (0) target = $region61
  $region60: #{model_forward.1} parent=0 // pred_region
    _
  $region61: #{model_forward.1} parent=0 // pred_fallthru
    _
  // Predicated region
  $region62: #{model_forward.1} parent=0 // pred_check
    _
  $region63: #{model_forward.1} parent=0 // pred_check_branch
    %56 = sbr.rel (0) target = $region65
  $region64: #{model_forward.1} parent=0 // pred_region
    _
  $region65: #{model_forward.1} parent=0 // pred_fallthru
    _
  // Predicated region
  $region66: #{model_forward.1} parent=0 // pred_check
    _
  $region67: #{model_forward.1} parent=0 // pred_check_branch
    %58 = sbr.rel (0) target = $region69
  $region68: #{model_forward.1} parent=0 // pred_region
    _
  $region69: #{model_forward.1} parent=0 // pred_fallthru
    _
  // Predicated region
  $region70: #{model_forward.1} parent=0 // pred_check
    _
  $region71: #{model_forward.1} parent=0 // pred_check_branch
    %60 = sbr.rel (0) target = $region73
  $region72: #{model_forward.1} parent=0 // pred_region
    _
  $region73: #{model_forward.1} parent=0 // pred_fallthru
    _
  // Predicated region
  $region74: #{model_forward.1} parent=0 // pred_check
    _
  $region75: #{model_forward.1} parent=0 // pred_check_branch
    %62 = sbr.rel (0) target = $region77
  $region76: #{model_forward.1} parent=0 // pred_region
    _
  $region77: #{model_forward.1} parent=0 // pred_fallthru
    _
  // Predicated region
  $region78: #{model_forward.1} parent=0 // pred_check
    _
  $region79: #{model_forward.1} parent=0 // pred_check_branch
    %64 = sbr.rel (0) target = $region81
  $region80: #{model_forward.1} parent=0 // pred_region
    _
  $region81: #{model_forward.1} parent=0 // pred_fallthru
    _
  %v65 = vld [vmem:[%s0] sm:$0xff]
  %v66 = vld [vmem:[%s0 + $0x8] sm:$0xff]
  %v67 = vld [vmem:[%s0 + $0x10] sm:$0xff]
  %v68 = vld [vmem:[%s0 + $0x18] sm:$0xff]
  %v69 = vld [vmem:[%s0 + $0x20] sm:$0xff]
  %v70 = vld [vmem:[%s0 + $0x28] sm:$0xff]
  %v71 = vld [vmem:[%s0 + $0x30] sm:$0xff]
  %v72 = vld [vmem:[%s0 + $0x38] sm:$0xff]
  %v73 = vld [vmem:[%s0 + $0x40] sm:$0xff]
  %v74 = vld [vmem:[%s0 + $0x48] sm:$0xff]
  %v75 = vld [vmem:[%s0 + $0x50] sm:$0xff]
  %v76 = vld [vmem:[%s0 + $0x58] sm:$0xff]
  %v77 = vld [vmem:[%s0 + $0x60] sm:$0xff]
  %v78 = vld [vmem:[%s0 + $0x68] sm:$0xff]
  %v79 = vld [vmem:[%s0 + $0x70] sm:$0xff]
  %v80 = vld [vmem:[%s0 + $0x78] sm:$0xff]
  %v81 = vld [vmem:[%s0 + $0x80] sm:$0xff]
  %v82 = vld [vmem:[%s0 + $0x88] sm:$0xff]
  %v83 = vld [vmem:[%s0 + $0x90] sm:$0xff]
  %v84 = vld [vmem:[%s0 + $0x98] sm:$0xff]
  %v85 = vld [vmem:[%s0 + $0xa0] sm:$0xff]
  %v86 = vld [vmem:[%s0 + $0xa8] sm:$0xff]
  %v87 = vld [vmem:[%s0 + $0xb0] sm:$0xff]
  %v88 = vld [vmem:[%s0 + $0xb8] sm:$0xff]
  %v89 = vld [vmem:[%s0 + $0xc0] sm:$0xff]
  %v90 = vld [vmem:[%s0 + $0xc8] sm:$0xff]
  %v91 = vld [vmem:[%s0 + $0xd0] sm:$0xff]
  %v92 = vld [vmem:[%s0 + $0xd8] sm:$0xff]
  %v93 = vld [vmem:[%s0 + $0xe0] sm:$0xff]
  %v94 = vld [vmem:[%s0 + $0xe8] sm:$0xff]
  %v95 = vld [vmem:[%s0 + $0xf0] sm:$0xff]
  %v96 = vld [vmem:[%s0 + $0xf8] sm:$0xff]
  %v97 = vld [vmem:[%s0 + $0x100] sm:$0xff]
  %v98 = vld [vmem:[%s0 + $0x108] sm:$0xff]
  %v99 = vld [vmem:[%s0 + $0x110] sm:$0xff]
  %v100 = vld [vmem:[%s0 + $0x118] sm:$0xff]
  %v101 = vld [vmem:[%s0 + $0x120] sm:$0xff]
  %v102 = vld [vmem:[%s0 + $0x128] sm:$0xff]
  %v103 = vld [vmem:[%s0 + $0x130] sm:$0xff]
  %v104 = vld [vmem:[%s0 + $0x138] sm:$0xff]
  %v105 = vld [vmem:[%s0 + $0x140] sm:$0xff]
  %v106 = vld [vmem:[%s0 + $0x148] sm:$0xff]
  %v107 = vld [vmem:[%s0 + $0x150] sm:$0xff]
  %v108 = vld [vmem:[%s0 + $0x158] sm:$0xff]
  %v109 = vld [vmem:[%s0 + $0x160] sm:$0xff]
  %v110 = vld [vmem:[%s0 + $0x168] sm:$0xff]
  %v111 = vld [vmem:[%s0 + $0x170] sm:$0xff]
  %v112 = vld [vmem:[%s0 + $0x178] sm:$0xff]
  %v113 = vld [vmem:[%s0 + $0x180] sm:$0xff]
  %v114 = vld [vmem:[%s0 + $0x188] sm:$0xff]
  %v115 = vld [vmem:[%s0 + $0x190] sm:$0xff]
  %v116 = vld [vmem:[%s0 + $0x198] sm:$0xff]
  %v117 = vld [vmem:[%s0 + $0x1a0] sm:$0xff]
  %v118 = vld [vmem:[%s0 + $0x1a8] sm:$0xff]
  %v119 = vld [vmem:[%s0 + $0x1b0] sm:$0xff]
  %v120 = vld [vmem:[%s0 + $0x1b8] sm:$0xff]
  %v121 = vld [vmem:[%s0 + $0x1c0] sm:$0xff]
  %v122 = vld [vmem:[%s0 + $0x1c8] sm:$0xff]
  %v123 = vld [vmem:[%s0 + $0x1d0] sm:$0xff]
  %v124 = vld [vmem:[%s0 + $0x1d8] sm:$0xff]
  %v125 = vld [vmem:[%s0 + $0x1e0] sm:$0xff]
  %v126 = vld [vmem:[%s0 + $0x1e8] sm:$0xff]
  %v127 = vld [vmem:[%s0 + $0x1f0] sm:$0xff]
  %v128 = vld [vmem:[%s0 + $0x1f8] sm:$0xff]
  %v129 = vld [vmem:[%s0 + $0x200] sm:$0xff]
  %v130 = vld [vmem:[%s0 + $0x208] sm:$0xff]
  %v131 = vld [vmem:[%s0 + $0x210] sm:$0xff]
  %v132 = vld [vmem:[%s0 + $0x218] sm:$0xff]
  %v133 = vld [vmem:[%s0 + $0x220] sm:$0xff]
  %v134 = vld [vmem:[%s0 + $0x228] sm:$0xff]
  %v135 = vld [vmem:[%s0 + $0x230] sm:$0xff]
  %v136 = vld [vmem:[%s0 + $0x238] sm:$0xff]
  %v137 = vld [vmem:[%s0 + $0x240] sm:$0xff]
  %v138 = vld [vmem:[%s0 + $0x248] sm:$0xff]
  %v139 = vld [vmem:[%s0 + $0x250] sm:$0xff]
  %v140 = vld [vmem:[%s0 + $0x258] sm:$0xff]
  %v141 = vld [vmem:[%s0 + $0x260] sm:$0xff]
  %v142 = vld [vmem:[%s0 + $0x268] sm:$0xff]
  %v143 = vld [vmem:[%s0 + $0x270] sm:$0xff]
  %v144 = vld [vmem:[%s0 + $0x278] sm:$0xff]
  %v145 = vld [vmem:[%s0 + $0x280] sm:$0xff]
  %v146 = vld [vmem:[%s0 + $0x288] sm:$0xff]
  %v147 = vld [vmem:[%s0 + $0x290] sm:$0xff]
  %v148 = vld [vmem:[%s0 + $0x298] sm:$0xff]
  %v149 = vld [vmem:[%s0 + $0x2a0] sm:$0xff]
  %v150 = vld [vmem:[%s0 + $0x2a8] sm:$0xff]
  %v151 = vld [vmem:[%s0 + $0x2b0] sm:$0xff]
  %v152 = vld [vmem:[%s0 + $0x2b8] sm:$0xff]
  %v153 = vld [vmem:[%s0 + $0x2c0] sm:$0xff]
  %v154 = vld [vmem:[%s0 + $0x2c8] sm:$0xff]
  %v155 = vld [vmem:[%s0 + $0x2d0] sm:$0xff]
  %v156 = vld [vmem:[%s0 + $0x2d8] sm:$0xff]
  %v157 = vld [vmem:[%s0 + $0x2e0] sm:$0xff]
  %v158 = vld [vmem:[%s0 + $0x2e8] sm:$0xff]
  %v159 = vld [vmem:[%s0 + $0x2f0] sm:$0xff]
  %v160 = vld [vmem:[%s0 + $0x2f8] sm:$0xff]
  %v161 = vld [vmem:[%s0 + $0x300] sm:$0xff]
  %v162 = vld [vmem:[%s0 + $0x308] sm:$0xff]
  %v163 = vld [vmem:[%s0 + $0x310] sm:$0xff]
  %v164 = vld [vmem:[%s0 + $0x318] sm:$0xff]
  %v165 = vld [vmem:[%s0 + $0x320] sm:$0xff]
  %v166 = vld [vmem:[%s0 + $0x328] sm:$0xff]
  %v167 = vld [vmem:[%s0 + $0x330] sm:$0xff]
  %v168 = vld [vmem:[%s0 + $0x338] sm:$0xff]
  %v169 = vld [vmem:[%s0 + $0x340] sm:$0xff]
  %v170 = vld [vmem:[%s0 + $0x348] sm:$0xff]
  %v171 = vld [vmem:[%s0 + $0x350] sm:$0xff]
  %v172 = vld [vmem:[%s0 + $0x358] sm:$0xff]
  %v173 = vld [vmem:[%s0 + $0x360] sm:$0xff]
  %v174 = vld [vmem:[%s0 + $0x368] sm:$0xff]
  %v175 = vld [vmem:[%s0 + $0x370] sm:$0xff]
  %v176 = vld [vmem:[%s0 + $0x378] sm:$0xff]
  %v177 = vld [vmem:[%s0 + $0x380] sm:$0xff]
  %v178 = vld [vmem:[%s0 + $0x388] sm:$0xff]
  %v179 = vld [vmem:[%s0 + $0x390] sm:$0xff]
  %v180 = vld [vmem:[%s0 + $0x398] sm:$0xff]
  %v181 = vld [vmem:[%s0 + $0x3a0] sm:$0xff]
  %v182 = vld [vmem:[%s0 + $0x3a8] sm:$0xff]
  %v183 = vld [vmem:[%s0 + $0x3b0] sm:$0xff]
  %v184 = vld [vmem:[%s0 + $0x3b8] sm:$0xff]
  %v185 = vld [vmem:[%s0 + $0x3c0] sm:$0xff]
  %v186 = vld [vmem:[%s0 + $0x3c8] sm:$0xff]
  %v187 = vld [vmem:[%s0 + $0x3d0] sm:$0xff]
  %v188 = vld [vmem:[%s0 + $0x3d8] sm:$0xff]
  %v189 = vld [vmem:[%s0 + $0x3e0] sm:$0xff]
  %v190 = vld [vmem:[%s0 + $0x3e8] sm:$0xff]
  %v191 = vld [vmem:[%s0 + $0x3f0] sm:$0xff]
  %v192 = vld [vmem:[%s0 + $0x3f8] sm:$0xff]
  %v193 = vld [vmem:[%s1] sm:$0xff]
  %v194 = vld [vmem:[%s1 + $0x8] sm:$0xff]
  %v195 = vld [vmem:[%s1 + $0x10] sm:$0xff]
  %v196 = vld [vmem:[%s1 + $0x18] sm:$0xff]
  %v197 = vld [vmem:[%s1 + $0x20] sm:$0xff]
  %v198 = vld [vmem:[%s1 + $0x28] sm:$0xff]
  %v199 = vld [vmem:[%s1 + $0x30] sm:$0xff]
  %v200 = vld [vmem:[%s1 + $0x38] sm:$0xff]
  %v201 = vld [vmem:[%s1 + $0x40] sm:$0xff]
  %v202 = vld [vmem:[%s1 + $0x48] sm:$0xff]
  %v203 = vld [vmem:[%s1 + $0x50] sm:$0xff]
  %v204 = vld [vmem:[%s1 + $0x58] sm:$0xff]
  %v205 = vld [vmem:[%s1 + $0x60] sm:$0xff]
  %v206 = vld [vmem:[%s1 + $0x68] sm:$0xff]
  %v207 = vld [vmem:[%s1 + $0x70] sm:$0xff]
  %v208 = vld [vmem:[%s1 + $0x78] sm:$0xff]
  %v209 = vld [vmem:[%s1 + $0x80] sm:$0xff]
  %v210 = vld [vmem:[%s1 + $0x88] sm:$0xff]
  %v211 = vld [vmem:[%s1 + $0x90] sm:$0xff]
  %v212 = vld [vmem:[%s1 + $0x98] sm:$0xff]
  %v213 = vld [vmem:[%s1 + $0xa0] sm:$0xff]
  %v214 = vld [vmem:[%s1 + $0xa8] sm:$0xff]
  %v215 = vld [vmem:[%s1 + $0xb0] sm:$0xff]
  %v216 = vld [vmem:[%s1 + $0xb8] sm:$0xff]
  %v217 = vld [vmem:[%s1 + $0xc0] sm:$0xff]
  %v218 = vld [vmem:[%s1 + $0xc8] sm:$0xff]
  %v219 = vld [vmem:[%s1 + $0xd0] sm:$0xff]
  %v220 = vld [vmem:[%s1 + $0xd8] sm:$0xff]
  %v221 = vld [vmem:[%s1 + $0xe0] sm:$0xff]
  %v222 = vld [vmem:[%s1 + $0xe8] sm:$0xff]
  %v223 = vld [vmem:[%s1 + $0xf0] sm:$0xff]
  %v224 = vld [vmem:[%s1 + $0xf8] sm:$0xff]
  %v225 = vld [vmem:[%s1 + $0x100] sm:$0xff]
  %v226 = vld [vmem:[%s1 + $0x108] sm:$0xff]
  %v227 = vld [vmem:[%s1 + $0x110] sm:$0xff]
  %v228 = vld [vmem:[%s1 + $0x118] sm:$0xff]
  %v229 = vld [vmem:[%s1 + $0x120] sm:$0xff]
  %v230 = vld [vmem:[%s1 + $0x128] sm:$0xff]
  %v231 = vld [vmem:[%s1 + $0x130] sm:$0xff]
  %v232 = vld [vmem:[%s1 + $0x138] sm:$0xff]
  %v233 = vld [vmem:[%s1 + $0x140] sm:$0xff]
  %v234 = vld [vmem:[%s1 + $0x148] sm:$0xff]
  %v235 = vld [vmem:[%s1 + $0x150] sm:$0xff]
  %v236 = vld [vmem:[%s1 + $0x158] sm:$0xff]
  %v237 = vld [vmem:[%s1 + $0x160] sm:$0xff]
  %v238 = vld [vmem:[%s1 + $0x168] sm:$0xff]
  %v239 = vld [vmem:[%s1 + $0x170] sm:$0xff]
  %v240 = vld [vmem:[%s1 + $0x178] sm:$0xff]
  %v241 = vld [vmem:[%s1 + $0x180] sm:$0xff]
  %v242 = vld [vmem:[%s1 + $0x188] sm:$0xff]
  %v243 = vld [vmem:[%s1 + $0x190] sm:$0xff]
  %v244 = vld [vmem:[%s1 + $0x198] sm:$0xff]
  %v245 = vld [vmem:[%s1 + $0x1a0] sm:$0xff]
  %v246 = vld [vmem:[%s1 + $0x1a8] sm:$0xff]
  %v247 = vld [vmem:[%s1 + $0x1b0] sm:$0xff]
  %v248 = vld [vmem:[%s1 + $0x1b8] sm:$0xff]
  %v249 = vld [vmem:[%s1 + $0x1c0] sm:$0xff]
  %v250 = vld [vmem:[%s1 + $0x1c8] sm:$0xff]
  %v251 = vld [vmem:[%s1 + $0x1d0] sm:$0xff]
  %v252 = vld [vmem:[%s1 + $0x1d8] sm:$0xff]
  %v253 = vld [vmem:[%s1 + $0x1e0] sm:$0xff]
  %v254 = vld [vmem:[%s1 + $0x1e8] sm:$0xff]
  %v255 = vld [vmem:[%s1 + $0x1f0] sm:$0xff]
  %v256 = vld [vmem:[%s1 + $0x1f8] sm:$0xff]
  %v257 = vld [vmem:[%s1 + $0x200] sm:$0xff]
  %v258 = vld [vmem:[%s1 + $0x208] sm:$0xff]
  %v259 = vld [vmem:[%s1 + $0x210] sm:$0xff]
  %v260 = vld [vmem:[%s1 + $0x218] sm:$0xff]
  %v261 = vld [vmem:[%s1 + $0x220] sm:$0xff]
  %v262 = vld [vmem:[%s1 + $0x228] sm:$0xff]
  %v263 = vld [vmem:[%s1 + $0x230] sm:$0xff]
  %v264 = vld [vmem:[%s1 + $0x238] sm:$0xff]
  %v265 = vld [vmem:[%s1 + $0x240] sm:$0xff]
  %v266 = vld [vmem:[%s1 + $0x248] sm:$0xff]
  %v267 = vld [vmem:[%s1 + $0x250] sm:$0xff]
  %v268 = vld [vmem:[%s1 + $0x258] sm:$0xff]
  %v269 = vld [vmem:[%s1 + $0x260] sm:$0xff]
  %v270 = vld [vmem:[%s1 + $0x268] sm:$0xff]
  %v271 = vld [vmem:[%s1 + $0x270] sm:$0xff]
  %v272 = vld [vmem:[%s1 + $0x278] sm:$0xff]
  %v273 = vld [vmem:[%s1 + $0x280] sm:$0xff]
  %v274 = vld [vmem:[%s1 + $0x288] sm:$0xff]
  %v275 = vld [vmem:[%s1 + $0x290] sm:$0xff]
  %v276 = vld [vmem:[%s1 + $0x298] sm:$0xff]
  %v277 = vld [vmem:[%s1 + $0x2a0] sm:$0xff]
  %v278 = vld [vmem:[%s1 + $0x2a8] sm:$0xff]
  %v279 = vld [vmem:[%s1 + $0x2b0] sm:$0xff]
  %v280 = vld [vmem:[%s1 + $0x2b8] sm:$0xff]
  %v281 = vld [vmem:[%s1 + $0x2c0] sm:$0xff]
  %v282 = vld [vmem:[%s1 + $0x2c8] sm:$0xff]
  %v283 = vld [vmem:[%s1 + $0x2d0] sm:$0xff]
  %v284 = vld [vmem:[%s1 + $0x2d8] sm:$0xff]
  %v285 = vld [vmem:[%s1 + $0x2e0] sm:$0xff]
  %v286 = vld [vmem:[%s1 + $0x2e8] sm:$0xff]
  %v287 = vld [vmem:[%s1 + $0x2f0] sm:$0xff]
  %v288 = vld [vmem:[%s1 + $0x2f8] sm:$0xff]
  %v289 = vld [vmem:[%s1 + $0x300] sm:$0xff]
  %v290 = vld [vmem:[%s1 + $0x308] sm:$0xff]
  %v291 = vld [vmem:[%s1 + $0x310] sm:$0xff]
  %v292 = vld [vmem:[%s1 + $0x318] sm:$0xff]
  %v293 = vld [vmem:[%s1 + $0x320] sm:$0xff]
  %v294 = vld [vmem:[%s1 + $0x328] sm:$0xff]
  %v295 = vld [vmem:[%s1 + $0x330] sm:$0xff]
  %v296 = vld [vmem:[%s1 + $0x338] sm:$0xff]
  %v297 = vld [vmem:[%s1 + $0x340] sm:$0xff]
  %v298 = vld [vmem:[%s1 + $0x348] sm:$0xff]
  %v299 = vld [vmem:[%s1 + $0x350] sm:$0xff]
  %v300 = vld [vmem:[%s1 + $0x358] sm:$0xff]
  %v301 = vld [vmem:[%s1 + $0x360] sm:$0xff]
  %v302 = vld [vmem:[%s1 + $0x368] sm:$0xff]
  %v303 = vld [vmem:[%s1 + $0x370] sm:$0xff]
  %v304 = vld [vmem:[%s1 + $0x378] sm:$0xff]
  %v305 = vld [vmem:[%s1 + $0x380] sm:$0xff]
  %v306 = vld [vmem:[%s1 + $0x388] sm:$0xff]
  %v307 = vld [vmem:[%s1 + $0x390] sm:$0xff]
  %v308 = vld [vmem:[%s1 + $0x398] sm:$0xff]
  %v309 = vld [vmem:[%s1 + $0x3a0] sm:$0xff]
  %v310 = vld [vmem:[%s1 + $0x3a8] sm:$0xff]
  %v311 = vld [vmem:[%s1 + $0x3b0] sm:$0xff]
  %v312 = vld [vmem:[%s1 + $0x3b8] sm:$0xff]
  %v313 = vld [vmem:[%s1 + $0x3c0] sm:$0xff]
  %v314 = vld [vmem:[%s1 + $0x3c8] sm:$0xff]
  %v315 = vld [vmem:[%s1 + $0x3d0] sm:$0xff]
  %v316 = vld [vmem:[%s1 + $0x3d8] sm:$0xff]
  %v317 = vld [vmem:[%s1 + $0x3e0] sm:$0xff]
  %v318 = vld [vmem:[%s1 + $0x3e8] sm:$0xff]
  %v319 = vld [vmem:[%s1 + $0x3f0] sm:$0xff]
  %v320 = vld [vmem:[%s1 + $0x3f8] sm:$0xff]
  %v321 = vld [vmem:[%s2] sm:$0x1]
  %v323 = vlaneseq
  %v324 = vshrl.u32 %v323, 7
  %v325 = vsub.s32 0, %v324
  %v326 = vrot.slane %v321, %v325
  %328 = vmatprep.subr.mxu0 0.0
  %329 = vmatpush1.msra.mxu0 %v193
  %330 = vmatprep.subr.mxu0 0.0
  %331 = vmatpush1.msra.mxu0 %v194
  %332 = vmatprep.subr.mxu0 0.0
  %333 = vmatpush1.msra.mxu0 %v195
  %334 = vmatprep.subr.mxu0 0.0
  %335 = vmatpush1.msra.mxu0 %v196
  %336 = vmatprep.subr.mxu0 0.0
  %337 = vmatpush1.msra.mxu0 %v197
  %338 = vmatprep.subr.mxu0 0.0
  %339 = vmatpush1.msra.mxu0 %v198
  %340 = vmatprep.subr.mxu0 0.0
  %341 = vmatpush1.msra.mxu0 %v199
  %342 = vmatprep.subr.mxu0 0.0
  %343 = vmatpush1.msra.mxu0 %v200
  %344 = vmatprep.subr.mxu0 0.0
  %345 = vmatpush1.msra.mxu0 %v201
  %346 = vmatprep.subr.mxu0 0.0
  %347 = vmatpush1.msra.mxu0 %v202
  %348 = vmatprep.subr.mxu0 0.0
  %349 = vmatpush1.msra.mxu0 %v203
  %350 = vmatprep.subr.mxu0 0.0
  %351 = vmatpush1.msra.mxu0 %v204
  %352 = vmatprep.subr.mxu0 0.0
  %353 = vmatpush1.msra.mxu0 %v205
  %354 = vmatprep.subr.mxu0 0.0
  %355 = vmatpush1.msra.mxu0 %v206
  %356 = vmatprep.subr.mxu0 0.0
  %357 = vmatpush1.msra.mxu0 %v207
  %358 = vmatprep.subr.mxu0 0.0
  %359 = vmatpush1.msra.mxu0 %v208
  %360 = vmatprep.subr.mxu0 0.0
  %361 = vmatpush1.msra.mxu0 %v209
  %362 = vmatprep.subr.mxu0 0.0
  %363 = vmatpush1.msra.mxu0 %v210
  %364 = vmatprep.subr.mxu0 0.0
  %365 = vmatpush1.msra.mxu0 %v211
  %366 = vmatprep.subr.mxu0 0.0
  %367 = vmatpush1.msra.mxu0 %v212
  %368 = vmatprep.subr.mxu0 0.0
  %369 = vmatpush1.msra.mxu0 %v213
  %370 = vmatprep.subr.mxu0 0.0
  %371 = vmatpush1.msra.mxu0 %v214
  %372 = vmatprep.subr.mxu0 0.0
  %373 = vmatpush1.msra.mxu0 %v215
  %374 = vmatprep.subr.mxu0 0.0
  %375 = vmatpush1.msra.mxu0 %v216
  %376 = vmatprep.subr.mxu0 0.0
  %377 = vmatpush1.msra.mxu0 %v217
  %378 = vmatprep.subr.mxu0 0.0
  %379 = vmatpush1.msra.mxu0 %v218
  %380 = vmatprep.subr.mxu0 0.0
  %381 = vmatpush1.msra.mxu0 %v219
  %382 = vmatprep.subr.mxu0 0.0
  %383 = vmatpush1.msra.mxu0 %v220
  %384 = vmatprep.subr.mxu0 0.0
  %385 = vmatpush1.msra.mxu0 %v221
  %386 = vmatprep.subr.mxu0 0.0
  %387 = vmatpush1.msra.mxu0 %v222
  %388 = vmatprep.subr.mxu0 0.0
  %389 = vmatpush1.msra.mxu0 %v223
  %390 = vmatprep.subr.mxu0 0.0
  %391 = vmatpush1.msra.mxu0 %v224
  %392 = vmatprep.mubr.f32.mxu0 %v66
  %393 = vmatmul.mubr.f32.gmra.mrb[0].mxu0 %v65
  %v394 = vpop.f32.mrb[0].mxu0
  %v395 = vadd.f32 %v326, %v394
  %v396 = vpop.f32.mrb[0].mxu0
  %397 = vmatprep.mubr.f32.mxu0 %v74
  %398 = vmatmul.mubr.f32.gmra.mrb[0].mxu0 %v73
  %v399 = vpop.f32.mrb[0].mxu0
  %v400 = vadd.f32 %v326, %v399
  %v401 = vpop.f32.mrb[0].mxu0
  %402 = vmatprep.mubr.f32.mxu0 %v82
  %403 = vmatmul.mubr.f32.gmra.mrb[0].mxu0 %v81
  %v404 = vpop.f32.mrb[0].mxu0
  %v405 = vadd.f32 %v326, %v404
  %v406 = vpop.f32.mrb[0].mxu0
  %407 = vmatprep.mubr.f32.mxu0 %v90
  %408 = vmatmul.mubr.f32.gmra.mrb[0].mxu0 %v89
  %v409 = vpop.f32.mrb[0].mxu0
  %v410 = vadd.f32 %v326, %v409
  %v411 = vpop.f32.mrb[0].mxu0
  %412 = vmatprep.mubr.f32.mxu0 %v98
  %413 = vmatmul.mubr.f32.gmra.mrb[0].mxu0 %v97
  %v414 = vpop.f32.mrb[0].mxu0
  %v415 = vadd.f32 %v326, %v414
  %v416 = vpop.f32.mrb[0].mxu0
  %417 = vmatprep.mubr.f32.mxu0 %v106
  %418 = vmatmul.mubr.f32.gmra.mrb[0].mxu0 %v105
  %v419 = vpop.f32.mrb[0].mxu0
  %v420 = vadd.f32 %v326, %v419
  %v421 = vpop.f32.mrb[0].mxu0
  %422 = vmatprep.mubr.f32.mxu0 %v114
  %423 = vmatmul.mubr.f32.gmra.mrb[0].mxu0 %v113
  %v424 = vpop.f32.mrb[0].mxu0
  %v425 = vadd.f32 %v326, %v424
  %v426 = vpop.f32.mrb[0].mxu0
  %427 = vmatprep.mubr.f32.mxu0 %v122
  %428 = vmatmul.mubr.f32.gmra.mrb[0].mxu0 %v121
  %v429 = vpop.f32.mrb[0].mxu0
  %v430 = vadd.f32 %v326, %v429
  %v431 = vpop.f32.mrb[0].mxu0
  %432 = vmatprep.mubr.f32.mxu0 %v130
  %433 = vmatmul.mubr.f32.gmra.mrb[0].mxu0 %v129
  %v434 = vpop.f32.mrb[0].mxu0
  %v435 = vadd.f32 %v326, %v434
  %v436 = vpop.f32.mrb[0].mxu0
  %437 = vmatprep.mubr.f32.mxu0 %v138
  %438 = vmatmul.mubr.f32.gmra.mrb[0].mxu0 %v137
  %v439 = vpop.f32.mrb[0].mxu0
  %v440 = vadd.f32 %v326, %v439
  %v441 = vpop.f32.mrb[0].mxu0
  %442 = vmatprep.mubr.f32.mxu0 %v146
  %443 = vmatmul.mubr.f32.gmra.mrb[0].mxu0 %v145
  %v444 = vpop.f32.mrb[0].mxu0
  %v445 = vadd.f32 %v326, %v444
  %v446 = vpop.f32.mrb[0].mxu0
  %447 = vmatprep.mubr.f32.mxu0 %v154
  %448 = vmatmul.mubr.f32.gmra.mrb[0].mxu0 %v153
  %v449 = vpop.f32.mrb[0].mxu0
  %v450 = vadd.f32 %v326, %v449
  %v451 = vpop.f32.mrb[0].mxu0
  %452 = vmatprep.mubr.f32.mxu0 %v162
  %453 = vmatmul.mubr.f32.gmra.mrb[0].mxu0 %v161
  %v454 = vpop.f32.mrb[0].mxu0
  %v455 = vadd.f32 %v326, %v454
  %v456 = vpop.f32.mrb[0].mxu0
  %457 = vmatprep.mubr.f32.mxu0 %v170
  %458 = vmatmul.mubr.f32.gmra.mrb[0].mxu0 %v169
  %v459 = vpop.f32.mrb[0].mxu0
  %v460 = vadd.f32 %v326, %v459
  %v461 = vpop.f32.mrb[0].mxu0
  %462 = vmatprep.mubr.f32.mxu0 %v178
  %463 = vmatmul.mubr.f32.gmra.mrb[0].mxu0 %v177
  %v464 = vpop.f32.mrb[0].mxu0
  %v465 = vadd.f32 %v326, %v464
  %v466 = vpop.f32.mrb[0].mxu0
  %467 = vmatprep.mubr.f32.mxu0 %v186
  %468 = vmatmul.mubr.f32.gmra.mrb[0].mxu0 %v185
  %v469 = vpop.f32.mrb[0].mxu0
  %v470 = vadd.f32 %v326, %v469
  %v471 = vpop.f32.mrb[0].mxu0
  %472 = vdwg.mxu0
  %473 = vmatprep.subr.mxu0 0.0
  %474 = vmatpush1.msra.mxu0 %v225
  %475 = vmatprep.subr.mxu0 0.0
  %476 = vmatpush1.msra.mxu0 %v226
  %477 = vmatprep.subr.mxu0 0.0
  %478 = vmatpush1.msra.mxu0 %v227
  %479 = vmatprep.subr.mxu0 0.0
  %480 = vmatpush1.msra.mxu0 %v228
  %481 = vmatprep.subr.mxu0 0.0
  %482 = vmatpush1.msra.mxu0 %v229
  %483 = vmatprep.subr.mxu0 0.0
  %484 = vmatpush1.msra.mxu0 %v230
  %485 = vmatprep.subr.mxu0 0.0
  %486 = vmatpush1.msra.mxu0 %v231
  %487 = vmatprep.subr.mxu0 0.0
  %488 = vmatpush1.msra.mxu0 %v232
  %489 = vmatprep.subr.mxu0 0.0
  %490 = vmatpush1.msra.mxu0 %v233
  %491 = vmatprep.subr.mxu0 0.0
  %492 = vmatpush1.msra.mxu0 %v234
  %493 = vmatprep.subr.mxu0 0.0
  %494 = vmatpush1.msra.mxu0 %v235
  %495 = vmatprep.subr.mxu0 0.0
  %496 = vmatpush1.msra.mxu0 %v236
  %497 = vmatprep.subr.mxu0 0.0
  %498 = vmatpush1.msra.mxu0 %v237
  %499 = vmatprep.subr.mxu0 0.0
  %500 = vmatpush1.msra.mxu0 %v238
  %501 = vmatprep.subr.mxu0 0.0
  %502 = vmatpush1.msra.mxu0 %v239
  %503 = vmatprep.subr.mxu0 0.0
  %504 = vmatpush1.msra.mxu0 %v240
  %505 = vmatprep.subr.mxu0 0.0
  %506 = vmatpush1.msra.mxu0 %v241
  %507 = vmatprep.subr.mxu0 0.0
  %508 = vmatpush1.msra.mxu0 %v242
  %509 = vmatprep.subr.mxu0 0.0
  %510 = vmatpush1.msra.mxu0 %v243
  %511 = vmatprep.subr.mxu0 0.0
  %512 = vmatpush1.msra.mxu0 %v244
  %513 = vmatprep.subr.mxu0 0.0
  %514 = vmatpush1.msra.mxu0 %v245
  %515 = vmatprep.subr.mxu0 0.0
  %516 = vmatpush1.msra.mxu0 %v246
  %517 = vmatprep.subr.mxu0 0.0
  %518 = vmatpush1.msra.mxu0 %v247
  %519 = vmatprep.subr.mxu0 0.0
  %520 = vmatpush1.msra.mxu0 %v248
  %521 = vmatprep.subr.mxu0 0.0
  %522 = vmatpush1.msra.mxu0 %v249
  %523 = vmatprep.subr.mxu0 0.0
  %524 = vmatpush1.msra.mxu0 %v250
  %525 = vmatprep.subr.mxu0 0.0
  %526 = vmatpush1.msra.mxu0 %v251
  %527 = vmatprep.subr.mxu0 0.0
  %528 = vmatpush1.msra.mxu0 %v252
  %529 = vmatprep.subr.mxu0 0.0
  %530 = vmatpush1.msra.mxu0 %v253
  %531 = vmatprep.subr.mxu0 0.0
  %532 = vmatpush1.msra.mxu0 %v254
  %533 = vmatprep.subr.mxu0 0.0
  %534 = vmatpush1.msra.mxu0 %v255
  %535 = vmatprep.subr.mxu0 0.0
  %536 = vmatpush1.msra.mxu0 %v256
  %537 = vmatprep.mubr.f32.mxu0 %v68
  %538 = vmatmul.mubr.f32.gmra.mrb[0].mxu0 %v67
  %v539 = vpop.f32.mrb[0].mxu0
  %v540 = vadd.f32 %v395, %v539
  %v541 = vpop.f32.mrb[0].mxu0
  %542 = vmatprep.mubr.f32.mxu0 %v76
  %543 = vmatmul.mubr.f32.gmra.mrb[0].mxu0 %v75
  %v544 = vpop.f32.mrb[0].mxu0
  %v545 = vadd.f32 %v400, %v544
  %v546 = vpop.f32.mrb[0].mxu0
  %547 = vmatprep.mubr.f32.mxu0 %v84
  %548 = vmatmul.mubr.f32.gmra.mrb[0].mxu0 %v83
  %v549 = vpop.f32.mrb[0].mxu0
  %v550 = vadd.f32 %v405, %v549
  %v551 = vpop.f32.mrb[0].mxu0
  %552 = vmatprep.mubr.f32.mxu0 %v92
  %553 = vmatmul.mubr.f32.gmra.mrb[0].mxu0 %v91
  %v554 = vpop.f32.mrb[0].mxu0
  %v555 = vadd.f32 %v410, %v554
  %v556 = vpop.f32.mrb[0].mxu0
  %557 = vmatprep.mubr.f32.mxu0 %v100
  %558 = vmatmul.mubr.f32.gmra.mrb[0].mxu0 %v99
  %v559 = vpop.f32.mrb[0].mxu0
  %v560 = vadd.f32 %v415, %v559
  %v561 = vpop.f32.mrb[0].mxu0
  %562 = vmatprep.mubr.f32.mxu0 %v108
  %563 = vmatmul.mubr.f32.gmra.mrb[0].mxu0 %v107
  %v564 = vpop.f32.mrb[0].mxu0
  %v565 = vadd.f32 %v420, %v564
  %v566 = vpop.f32.mrb[0].mxu0
  %567 = vmatprep.mubr.f32.mxu0 %v116
  %568 = vmatmul.mubr.f32.gmra.mrb[0].mxu0 %v115
  %v569 = vpop.f32.mrb[0].mxu0
  %v570 = vadd.f32 %v425, %v569
  %v571 = vpop.f32.mrb[0].mxu0
  %572 = vmatprep.mubr.f32.mxu0 %v124
  %573 = vmatmul.mubr.f32.gmra.mrb[0].mxu0 %v123
  %v574 = vpop.f32.mrb[0].mxu0
  %v575 = vadd.f32 %v430, %v574
  %v576 = vpop.f32.mrb[0].mxu0
  %577 = vmatprep.mubr.f32.mxu0 %v132
  %578 = vmatmul.mubr.f32.gmra.mrb[0].mxu0 %v131
  %v579 = vpop.f32.mrb[0].mxu0
  %v580 = vadd.f32 %v435, %v579
  %v581 = vpop.f32.mrb[0].mxu0
  %582 = vmatprep.mubr.f32.mxu0 %v140
  %583 = vmatmul.mubr.f32.gmra.mrb[0].mxu0 %v139
  %v584 = vpop.f32.mrb[0].mxu0
  %v585 = vadd.f32 %v440, %v584
  %v586 = vpop.f32.mrb[0].mxu0
  %587 = vmatprep.mubr.f32.mxu0 %v148
  %588 = vmatmul.mubr.f32.gmra.mrb[0].mxu0 %v147
  %v589 = vpop.f32.mrb[0].mxu0
  %v590 = vadd.f32 %v445, %v589
  %v591 = vpop.f32.mrb[0].mxu0
  %592 = vmatprep.mubr.f32.mxu0 %v156
  %593 = vmatmul.mubr.f32.gmra.mrb[0].mxu0 %v155
  %v594 = vpop.f32.mrb[0].mxu0
  %v595 = vadd.f32 %v450, %v594
  %v596 = vpop.f32.mrb[0].mxu0
  %597 = vmatprep.mubr.f32.mxu0 %v164
  %598 = vmatmul.mubr.f32.gmra.mrb[0].mxu0 %v163
  %v599 = vpop.f32.mrb[0].mxu0
  %v600 = vadd.f32 %v455, %v599
  %v601 = vpop.f32.mrb[0].mxu0
  %602 = vmatprep.mubr.f32.mxu0 %v172
  %603 = vmatmul.mubr.f32.gmra.mrb[0].mxu0 %v171
  %v604 = vpop.f32.mrb[0].mxu0
  %v605 = vadd.f32 %v460, %v604
  %v606 = vpop.f32.mrb[0].mxu0
  %607 = vmatprep.mubr.f32.mxu0 %v180
  %608 = vmatmul.mubr.f32.gmra.mrb[0].mxu0 %v179
  %v609 = vpop.f32.mrb[0].mxu0
  %v610 = vadd.f32 %v465, %v609
  %v611 = vpop.f32.mrb[0].mxu0
  %612 = vmatprep.mubr.f32.mxu0 %v188
  %613 = vmatmul.mubr.f32.gmra.mrb[0].mxu0 %v187
  %v614 = vpop.f32.mrb[0].mxu0
  %v615 = vadd.f32 %v470, %v614
  %v616 = vpop.f32.mrb[0].mxu0
  %617 = vdwg.mxu0
  %618 = vmatprep.subr.mxu0 0.0
  %619 = vmatpush1.msra.mxu0 %v257
  %620 = vmatprep.subr.mxu0 0.0
  %621 = vmatpush1.msra.mxu0 %v258
  %622 = vmatprep.subr.mxu0 0.0
  %623 = vmatpush1.msra.mxu0 %v259
  %624 = vmatprep.subr.mxu0 0.0
  %625 = vmatpush1.msra.mxu0 %v260
  %626 = vmatprep.subr.mxu0 0.0
  %627 = vmatpush1.msra.mxu0 %v261
  %628 = vmatprep.subr.mxu0 0.0
  %629 = vmatpush1.msra.mxu0 %v262
  %630 = vmatprep.subr.mxu0 0.0
  %631 = vmatpush1.msra.mxu0 %v263
  %632 = vmatprep.subr.mxu0 0.0
  %633 = vmatpush1.msra.mxu0 %v264
  %634 = vmatprep.subr.mxu0 0.0
  %635 = vmatpush1.msra.mxu0 %v265
  %636 = vmatprep.subr.mxu0 0.0
  %637 = vmatpush1.msra.mxu0 %v266
  %638 = vmatprep.subr.mxu0 0.0
  %639 = vmatpush1.msra.mxu0 %v267
  %640 = vmatprep.subr.mxu0 0.0
  %641 = vmatpush1.msra.mxu0 %v268
  %642 = vmatprep.subr.mxu0 0.0
  %643 = vmatpush1.msra.mxu0 %v269
  %644 = vmatprep.subr.mxu0 0.0
  %645 = vmatpush1.msra.mxu0 %v270
  %646 = vmatprep.subr.mxu0 0.0
  %647 = vmatpush1.msra.mxu0 %v271
  %648 = vmatprep.subr.mxu0 0.0
  %649 = vmatpush1.msra.mxu0 %v272
  %650 = vmatprep.subr.mxu0 0.0
  %651 = vmatpush1.msra.mxu0 %v273
  %652 = vmatprep.subr.mxu0 0.0
  %653 = vmatpush1.msra.mxu0 %v274
  %654 = vmatprep.subr.mxu0 0.0
  %655 = vmatpush1.msra.mxu0 %v275
  %656 = vmatprep.subr.mxu0 0.0
  %657 = vmatpush1.msra.mxu0 %v276
  %658 = vmatprep.subr.mxu0 0.0
  %659 = vmatpush1.msra.mxu0 %v277
  %660 = vmatprep.subr.mxu0 0.0
  %661 = vmatpush1.msra.mxu0 %v278
  %662 = vmatprep.subr.mxu0 0.0
  %663 = vmatpush1.msra.mxu0 %v279
  %664 = vmatprep.subr.mxu0 0.0
  %665 = vmatpush1.msra.mxu0 %v280
  %666 = vmatprep.subr.mxu0 0.0
  %667 = vmatpush1.msra.mxu0 %v281
  %668 = vmatprep.subr.mxu0 0.0
  %669 = vmatpush1.msra.mxu0 %v282
  %670 = vmatprep.subr.mxu0 0.0
  %671 = vmatpush1.msra.mxu0 %v283
  %672 = vmatprep.subr.mxu0 0.0
  %673 = vmatpush1.msra.mxu0 %v284
  %674 = vmatprep.subr.mxu0 0.0
  %675 = vmatpush1.msra.mxu0 %v285
  %676 = vmatprep.subr.mxu0 0.0
  %677 = vmatpush1.msra.mxu0 %v286
  %678 = vmatprep.subr.mxu0 0.0
  %679 = vmatpush1.msra.mxu0 %v287
  %680 = vmatprep.subr.mxu0 0.0
  %681 = vmatpush1.msra.mxu0 %v288
  %682 = vmatprep.mubr.f32.mxu0 %v70
  %683 = vmatmul.mubr.f32.gmra.mrb[0].mxu0 %v69
  %v684 = vpop.f32.mrb[0].mxu0
  %v685 = vadd.f32 %v540, %v684
  %v686 = vpop.f32.mrb[0].mxu0
  %687 = vmatprep.mubr.f32.mxu0 %v78
  %688 = vmatmul.mubr.f32.gmra.mrb[0].mxu0 %v77
  %v689 = vpop.f32.mrb[0].mxu0
  %v690 = vadd.f32 %v545, %v689
  %v691 = vpop.f32.mrb[0].mxu0
  %692 = vmatprep.mubr.f32.mxu0 %v86
  %693 = vmatmul.mubr.f32.gmra.mrb[0].mxu0 %v85
  %v694 = vpop.f32.mrb[0].mxu0
  %v695 = vadd.f32 %v550, %v694
  %v696 = vpop.f32.mrb[0].mxu0
  %697 = vmatprep.mubr.f32.mxu0 %v94
  %698 = vmatmul.mubr.f32.gmra.mrb[0].mxu0 %v93
  %v699 = vpop.f32.mrb[0].mxu0
  %v700 = vadd.f32 %v555, %v699
  %v701 = vpop.f32.mrb[0].mxu0
  %702 = vmatprep.mubr.f32.mxu0 %v102
  %703 = vmatmul.mubr.f32.gmra.mrb[0].mxu0 %v101
  %v704 = vpop.f32.mrb[0].mxu0
  %v705 = vadd.f32 %v560, %v704
  %v706 = vpop.f32.mrb[0].mxu0
  %707 = vmatprep.mubr.f32.mxu0 %v110
  %708 = vmatmul.mubr.f32.gmra.mrb[0].mxu0 %v109
  %v709 = vpop.f32.mrb[0].mxu0
  %v710 = vadd.f32 %v565, %v709
  %v711 = vpop.f32.mrb[0].mxu0
  %712 = vmatprep.mubr.f32.mxu0 %v118
  %713 = vmatmul.mubr.f32.gmra.mrb[0].mxu0 %v117
  %v714 = vpop.f32.mrb[0].mxu0
  %v715 = vadd.f32 %v570, %v714
  %v716 = vpop.f32.mrb[0].mxu0
  %717 = vmatprep.mubr.f32.mxu0 %v126
  %718 = vmatmul.mubr.f32.gmra.mrb[0].mxu0 %v125
  %v719 = vpop.f32.mrb[0].mxu0
  %v720 = vadd.f32 %v575, %v719
  %v721 = vpop.f32.mrb[0].mxu0
  %722 = vmatprep.mubr.f32.mxu0 %v134
  %723 = vmatmul.mubr.f32.gmra.mrb[0].mxu0 %v133
  %v724 = vpop.f32.mrb[0].mxu0
  %v725 = vadd.f32 %v580, %v724
  %v726 = vpop.f32.mrb[0].mxu0
  %727 = vmatprep.mubr.f32.mxu0 %v142
  %728 = vmatmul.mubr.f32.gmra.mrb[0].mxu0 %v141
  %v729 = vpop.f32.mrb[0].mxu0
  %v730 = vadd.f32 %v585, %v729
  %v731 = vpop.f32.mrb[0].mxu0
  %732 = vmatprep.mubr.f32.mxu0 %v150
  %733 = vmatmul.mubr.f32.gmra.mrb[0].mxu0 %v149
  %v734 = vpop.f32.mrb[0].mxu0
  %v735 = vadd.f32 %v590, %v734
  %v736 = vpop.f32.mrb[0].mxu0
  %737 = vmatprep.mubr.f32.mxu0 %v158
  %738 = vmatmul.mubr.f32.gmra.mrb[0].mxu0 %v157
  %v739 = vpop.f32.mrb[0].mxu0
  %v740 = vadd.f32 %v595, %v739
  %v741 = vpop.f32.mrb[0].mxu0
  %742 = vmatprep.mubr.f32.mxu0 %v166
  %743 = vmatmul.mubr.f32.gmra.mrb[0].mxu0 %v165
  %v744 = vpop.f32.mrb[0].mxu0
  %v745 = vadd.f32 %v600, %v744
  %v746 = vpop.f32.mrb[0].mxu0
  %747 = vmatprep.mubr.f32.mxu0 %v174
  %748 = vmatmul.mubr.f32.gmra.mrb[0].mxu0 %v173
  %v749 = vpop.f32.mrb[0].mxu0
  %v750 = vadd.f32 %v605, %v749
  %v751 = vpop.f32.mrb[0].mxu0
  %752 = vmatprep.mubr.f32.mxu0 %v182
  %753 = vmatmul.mubr.f32.gmra.mrb[0].mxu0 %v181
  %v754 = vpop.f32.mrb[0].mxu0
  %v755 = vadd.f32 %v610, %v754
  %v756 = vpop.f32.mrb[0].mxu0
  %757 = vmatprep.mubr.f32.mxu0 %v190
  %758 = vmatmul.mubr.f32.gmra.mrb[0].mxu0 %v189
  %v759 = vpop.f32.mrb[0].mxu0
  %v760 = vadd.f32 %v615, %v759
  %v761 = vpop.f32.mrb[0].mxu0
  %762 = vdwg.mxu0
  %763 = vmatprep.subr.mxu0 0.0
  %764 = vmatpush1.msra.mxu0 %v289
  %765 = vmatprep.subr.mxu0 0.0
  %766 = vmatpush1.msra.mxu0 %v290
  %767 = vmatprep.subr.mxu0 0.0
  %768 = vmatpush1.msra.mxu0 %v291
  %769 = vmatprep.subr.mxu0 0.0
  %770 = vmatpush1.msra.mxu0 %v292
  %771 = vmatprep.subr.mxu0 0.0
  %772 = vmatpush1.msra.mxu0 %v293
  %773 = vmatprep.subr.mxu0 0.0
  %774 = vmatpush1.msra.mxu0 %v294
  %775 = vmatprep.subr.mxu0 0.0
  %776 = vmatpush1.msra.mxu0 %v295
  %777 = vmatprep.subr.mxu0 0.0
  %778 = vmatpush1.msra.mxu0 %v296
  %779 = vmatprep.subr.mxu0 0.0
  %780 = vmatpush1.msra.mxu0 %v297
  %781 = vmatprep.subr.mxu0 0.0
  %782 = vmatpush1.msra.mxu0 %v298
  %783 = vmatprep.subr.mxu0 0.0
  %784 = vmatpush1.msra.mxu0 %v299
  %785 = vmatprep.subr.mxu0 0.0
  %786 = vmatpush1.msra.mxu0 %v300
  %787 = vmatprep.subr.mxu0 0.0
  %788 = vmatpush1.msra.mxu0 %v301
  %789 = vmatprep.subr.mxu0 0.0
  %790 = vmatpush1.msra.mxu0 %v302
  %791 = vmatprep.subr.mxu0 0.0
  %792 = vmatpush1.msra.mxu0 %v303
  %793 = vmatprep.subr.mxu0 0.0
  %794 = vmatpush1.msra.mxu0 %v304
  %795 = vmatprep.subr.mxu0 0.0
  %796 = vmatpush1.msra.mxu0 %v305
  %797 = vmatprep.subr.mxu0 0.0
  %798 = vmatpush1.msra.mxu0 %v306
  %799 = vmatprep.subr.mxu0 0.0
  %800 = vmatpush1.msra.mxu0 %v307
  %801 = vmatprep.subr.mxu0 0.0
  %802 = vmatpush1.msra.mxu0 %v308
  %803 = vmatprep.subr.mxu0 0.0
  %804 = vmatpush1.msra.mxu0 %v309
  %805 = vmatprep.subr.mxu0 0.0
  %806 = vmatpush1.msra.mxu0 %v310
  %807 = vmatprep.subr.mxu0 0.0
  %808 = vmatpush1.msra.mxu0 %v311
  %809 = vmatprep.subr.mxu0 0.0
  %810 = vmatpush1.msra.mxu0 %v312
  %811 = vmatprep.subr.mxu0 0.0
  %812 = vmatpush1.msra.mxu0 %v313
  %813 = vmatprep.subr.mxu0 0.0
  %814 = vmatpush1.msra.mxu0 %v314
  %815 = vmatprep.subr.mxu0 0.0
  %816 = vmatpush1.msra.mxu0 %v315
  %817 = vmatprep.subr.mxu0 0.0
  %818 = vmatpush1.msra.mxu0 %v316
  %819 = vmatprep.subr.mxu0 0.0
  %820 = vmatpush1.msra.mxu0 %v317
  %821 = vmatprep.subr.mxu0 0.0
  %822 = vmatpush1.msra.mxu0 %v318
  %823 = vmatprep.subr.mxu0 0.0
  %824 = vmatpush1.msra.mxu0 %v319
  %825 = vmatprep.subr.mxu0 0.0
  %826 = vmatpush1.msra.mxu0 %v320
  %827 = vmatprep.mubr.f32.mxu0 %v72
  %828 = vmatmul.mubr.f32.gmra.mrb[0].mxu0 %v71
  %v829 = vpop.f32.mrb[0].mxu0
  %v830 = vadd.f32 %v685, %v829
  %v831 = vpop.f32.mrb[0].mxu0
  %832 = vmatprep.mubr.f32.mxu0 %v80
  %833 = vmatmul.mubr.f32.gmra.mrb[0].mxu0 %v79
  %v834 = vpop.f32.mrb[0].mxu0
  %v835 = vadd.f32 %v690, %v834
  %v836 = vpop.f32.mrb[0].mxu0
  %837 = vmatprep.mubr.f32.mxu0 %v88
  %838 = vmatmul.mubr.f32.gmra.mrb[0].mxu0 %v87
  %v839 = vpop.f32.mrb[0].mxu0
  %v840 = vadd.f32 %v695, %v839
  %v841 = vpop.f32.mrb[0].mxu0
  %842 = vmatprep.mubr.f32.mxu0 %v96
  %843 = vmatmul.mubr.f32.gmra.mrb[0].mxu0 %v95
  %v844 = vpop.f32.mrb[0].mxu0
  %v845 = vadd.f32 %v700, %v844
  %v846 = vpop.f32.mrb[0].mxu0
  %847 = vmatprep.mubr.f32.mxu0 %v104
  %848 = vmatmul.mubr.f32.gmra.mrb[0].mxu0 %v103
  %v849 = vpop.f32.mrb[0].mxu0
  %v850 = vadd.f32 %v705, %v849
  %v851 = vpop.f32.mrb[0].mxu0
  %852 = vmatprep.mubr.f32.mxu0 %v112
  %853 = vmatmul.mubr.f32.gmra.mrb[0].mxu0 %v111
  %v854 = vpop.f32.mrb[0].mxu0
  %v855 = vadd.f32 %v710, %v854
  %v856 = vpop.f32.mrb[0].mxu0
  %857 = vmatprep.mubr.f32.mxu0 %v120
  %858 = vmatmul.mubr.f32.gmra.mrb[0].mxu0 %v119
  %v859 = vpop.f32.mrb[0].mxu0
  %v860 = vadd.f32 %v715, %v859
  %v861 = vpop.f32.mrb[0].mxu0
  %862 = vmatprep.mubr.f32.mxu0 %v128
  %863 = vmatmul.mubr.f32.gmra.mrb[0].mxu0 %v127
  %v864 = vpop.f32.mrb[0].mxu0
  %v865 = vadd.f32 %v720, %v864
  %v866 = vpop.f32.mrb[0].mxu0
  %867 = vmatprep.mubr.f32.mxu0 %v136
  %868 = vmatmul.mubr.f32.gmra.mrb[0].mxu0 %v135
  %v869 = vpop.f32.mrb[0].mxu0
  %v870 = vadd.f32 %v725, %v869
  %v871 = vpop.f32.mrb[0].mxu0
  %872 = vmatprep.mubr.f32.mxu0 %v144
  %873 = vmatmul.mubr.f32.gmra.mrb[0].mxu0 %v143
  %v874 = vpop.f32.mrb[0].mxu0
  %v875 = vadd.f32 %v730, %v874
  %v876 = vpop.f32.mrb[0].mxu0
  %877 = vmatprep.mubr.f32.mxu0 %v152
  %878 = vmatmul.mubr.f32.gmra.mrb[0].mxu0 %v151
  %v879 = vpop.f32.mrb[0].mxu0
  %v880 = vadd.f32 %v735, %v879
  %v881 = vpop.f32.mrb[0].mxu0
  %882 = vmatprep.mubr.f32.mxu0 %v160
  %883 = vmatmul.mubr.f32.gmra.mrb[0].mxu0 %v159
  %v884 = vpop.f32.mrb[0].mxu0
  %v885 = vadd.f32 %v740, %v884
  %v886 = vpop.f32.mrb[0].mxu0
  %887 = vmatprep.mubr.f32.mxu0 %v168
  %888 = vmatmul.mubr.f32.gmra.mrb[0].mxu0 %v167
  %v889 = vpop.f32.mrb[0].mxu0
  %v890 = vadd.f32 %v745, %v889
  %v891 = vpop.f32.mrb[0].mxu0
  %892 = vmatprep.mubr.f32.mxu0 %v176
  %893 = vmatmul.mubr.f32.gmra.mrb[0].mxu0 %v175
  %v894 = vpop.f32.mrb[0].mxu0
  %v895 = vadd.f32 %v750, %v894
  %v896 = vpop.f32.mrb[0].mxu0
  %897 = vmatprep.mubr.f32.mxu0 %v184
  %898 = vmatmul.mubr.f32.gmra.mrb[0].mxu0 %v183
  %v899 = vpop.f32.mrb[0].mxu0
  %v900 = vadd.f32 %v755, %v899
  %v901 = vpop.f32.mrb[0].mxu0
  %902 = vmatprep.mubr.f32.mxu0 %v192
  %903 = vmatmul.mubr.f32.gmra.mrb[0].mxu0 %v191
  %v904 = vpop.f32.mrb[0].mxu0
  %v905 = vadd.f32 %v760, %v904
  %v906 = vpop.f32.mrb[0].mxu0
  %907 = vdwg.mxu0
  %v908 = vld [vmem:[%s3] sm:$0xff]
  %v909 = vld [vmem:[%s3 + $0x8] sm:$0xff]
  %v910 = vld [vmem:[%s3 + $0x10] sm:$0xff]
  %v911 = vld [vmem:[%s3 + $0x18] sm:$0xff]
  %v912 = vld [vmem:[%s3 + $0x20] sm:$0xff]
  %v913 = vld [vmem:[%s3 + $0x28] sm:$0xff]
  %v914 = vld [vmem:[%s3 + $0x30] sm:$0xff]
  %v915 = vld [vmem:[%s3 + $0x38] sm:$0xff]
  %v916 = vld [vmem:[%s3 + $0x40] sm:$0xff]
  %v917 = vld [vmem:[%s3 + $0x48] sm:$0xff]
  %v918 = vld [vmem:[%s3 + $0x50] sm:$0xff]
  %v919 = vld [vmem:[%s3 + $0x58] sm:$0xff]
  %v920 = vld [vmem:[%s3 + $0x60] sm:$0xff]
  %v921 = vld [vmem:[%s3 + $0x68] sm:$0xff]
  %v922 = vld [vmem:[%s3 + $0x70] sm:$0xff]
  %v923 = vld [vmem:[%s3 + $0x78] sm:$0xff]
  %v924 = vadd.f32 %v830, %v908
  %v925 = vadd.f32 %v835, %v909
  %v926 = vadd.f32 %v840, %v910
  %v927 = vadd.f32 %v845, %v911
  %v928 = vadd.f32 %v850, %v912
  %v929 = vadd.f32 %v855, %v913
  %v930 = vadd.f32 %v860, %v914
  %v931 = vadd.f32 %v865, %v915
  %v932 = vadd.f32 %v870, %v916
  %v933 = vadd.f32 %v875, %v917
  %v934 = vadd.f32 %v880, %v918
  %v935 = vadd.f32 %v885, %v919
  %v936 = vadd.f32 %v890, %v920
  %v937 = vadd.f32 %v895, %v921
  %v938 = vadd.f32 %v900, %v922
  %v939 = vadd.f32 %v905, %v923
  %v940 = vld [vmem:[%s4] sm:$0xff]
  %v941 = vld [vmem:[%s4 + $0x8] sm:$0xff]
  %v942 = vld [vmem:[%s4 + $0x10] sm:$0xff]
  %v943 = vld [vmem:[%s4 + $0x18] sm:$0xff]
  %v944 = vld [vmem:[%s4 + $0x20] sm:$0xff]
  %v945 = vld [vmem:[%s4 + $0x28] sm:$0xff]
  %v946 = vld [vmem:[%s4 + $0x30] sm:$0xff]
  %v947 = vld [vmem:[%s4 + $0x38] sm:$0xff]
  %v948 = vld [vmem:[%s4 + $0x40] sm:$0xff]
  %v949 = vld [vmem:[%s4 + $0x48] sm:$0xff]
  %v950 = vld [vmem:[%s4 + $0x50] sm:$0xff]
  %v951 = vld [vmem:[%s4 + $0x58] sm:$0xff]
  %v952 = vld [vmem:[%s4 + $0x60] sm:$0xff]
  %v953 = vld [vmem:[%s4 + $0x68] sm:$0xff]
  %v954 = vld [vmem:[%s4 + $0x70] sm:$0xff]
  %v955 = vld [vmem:[%s4 + $0x78] sm:$0xff]
  %v956 = vld [vmem:[%s4 + $0x80] sm:$0xff]
  %v957 = vld [vmem:[%s4 + $0x88] sm:$0xff]
  %v958 = vld [vmem:[%s4 + $0x90] sm:$0xff]
  %v959 = vld [vmem:[%s4 + $0x98] sm:$0xff]
  %v960 = vld [vmem:[%s4 + $0xa0] sm:$0xff]
  %v961 = vld [vmem:[%s4 + $0xa8] sm:$0xff]
  %v962 = vld [vmem:[%s4 + $0xb0] sm:$0xff]
  %v963 = vld [vmem:[%s4 + $0xb8] sm:$0xff]
  %v964 = vld [vmem:[%s4 + $0xc0] sm:$0xff]
  %v965 = vld [vmem:[%s4 + $0xc8] sm:$0xff]
  %v966 = vld [vmem:[%s4 + $0xd0] sm:$0xff]
  %v967 = vld [vmem:[%s4 + $0xd8] sm:$0xff]
  %v968 = vld [vmem:[%s4 + $0xe0] sm:$0xff]
  %v969 = vld [vmem:[%s4 + $0xe8] sm:$0xff]
  %v970 = vld [vmem:[%s4 + $0xf0] sm:$0xff]
  %v971 = vld [vmem:[%s4 + $0xf8] sm:$0xff]
  %v972 = vld [vmem:[%s5] sm:$0xff]
  %v973 = vld [vmem:[%s5 + $0x8] sm:$0xff]
  %v974 = vld [vmem:[%s5 + $0x10] sm:$0xff]
  %v975 = vld [vmem:[%s5 + $0x18] sm:$0xff]
  %v976 = vld [vmem:[%s5 + $0x20] sm:$0xff]
  %v977 = vld [vmem:[%s5 + $0x28] sm:$0xff]
  %v978 = vld [vmem:[%s5 + $0x30] sm:$0xff]
  %v979 = vld [vmem:[%s5 + $0x38] sm:$0xff]
  %v980 = vld [vmem:[%s5 + $0x40] sm:$0xff]
  %v981 = vld [vmem:[%s5 + $0x48] sm:$0xff]
  %v982 = vld [vmem:[%s5 + $0x50] sm:$0xff]
  %v983 = vld [vmem:[%s5 + $0x58] sm:$0xff]
  %v984 = vld [vmem:[%s5 + $0x60] sm:$0xff]
  %v985 = vld [vmem:[%s5 + $0x68] sm:$0xff]
  %v986 = vld [vmem:[%s5 + $0x70] sm:$0xff]
  %v987 = vld [vmem:[%s5 + $0x78] sm:$0xff]
  %v988 = vld [vmem:[%s5 + $0x80] sm:$0xff]
  %v989 = vld [vmem:[%s5 + $0x88] sm:$0xff]
  %v990 = vld [vmem:[%s5 + $0x90] sm:$0xff]
  %v991 = vld [vmem:[%s5 + $0x98] sm:$0xff]
  %v992 = vld [vmem:[%s5 + $0xa0] sm:$0xff]
  %v993 = vld [vmem:[%s5 + $0xa8] sm:$0xff]
  %v994 = vld [vmem:[%s5 + $0xb0] sm:$0xff]
  %v995 = vld [vmem:[%s5 + $0xb8] sm:$0xff]
  %v996 = vld [vmem:[%s5 + $0xc0] sm:$0xff]
  %v997 = vld [vmem:[%s5 + $0xc8] sm:$0xff]
  %v998 = vld [vmem:[%s5 + $0xd0] sm:$0xff]
  %v999 = vld [vmem:[%s5 + $0xd8] sm:$0xff]
  %v1000 = vld [vmem:[%s5 + $0xe0] sm:$0xff]
  %v1001 = vld [vmem:[%s5 + $0xe8] sm:$0xff]
  %v1002 = vld [vmem:[%s5 + $0xf0] sm:$0xff]
  %v1003 = vld [vmem:[%s5 + $0xf8] sm:$0xff]
  %v1004 = vld [vmem:[%s6] sm:$0x1]
  %v1006 = vlaneseq
  %v1007 = vshrl.u32 %v1006, 7
  %v1008 = vsub.s32 0, %v1007
  %v1009 = vrot.slane %v1004, %v1008
  %1011 = vmatprep.subr.mxu0 0.0
  %1012 = vmatpush1.msra.mxu0 %v972
  %1013 = vmatprep.subr.mxu0 0.0
  %1014 = vmatpush1.msra.mxu0 %v973
  %1015 = vmatprep.subr.mxu0 0.0
  %1016 = vmatpush1.msra.mxu0 %v974
  %1017 = vmatprep.subr.mxu0 0.0
  %1018 = vmatpush1.msra.mxu0 %v975
  %1019 = vmatprep.subr.mxu0 0.0
  %1020 = vmatpush1.msra.mxu0 %v976
  %1021 = vmatprep.subr.mxu0 0.0
  %1022 = vmatpush1.msra.mxu0 %v977
  %1023 = vmatprep.subr.mxu0 0.0
  %1024 = vmatpush1.msra.mxu0 %v978
  %1025 = vmatprep.subr.mxu0 0.0
  %1026 = vmatpush1.msra.mxu0 %v979
  %1027 = vmatprep.subr.mxu0 0.0
  %1028 = vmatpush1.msra.mxu0 %v980
  %1029 = vmatprep.subr.mxu0 0.0
  %1030 = vmatpush1.msra.mxu0 %v981
  %1031 = vmatprep.subr.mxu0 0.0
  %1032 = vmatpush1.msra.mxu0 %v982
  %1033 = vmatprep.subr.mxu0 0.0
  %1034 = vmatpush1.msra.mxu0 %v983
  %1035 = vmatprep.subr.mxu0 0.0
  %1036 = vmatpush1.msra.mxu0 %v984
  %1037 = vmatprep.subr.mxu0 0.0
  %1038 = vmatpush1.msra.mxu0 %v985
  %1039 = vmatprep.subr.mxu0 0.0
  %1040 = vmatpush1.msra.mxu0 %v986
  %1041 = vmatprep.subr.mxu0 0.0
  %1042 = vmatpush1.msra.mxu0 %v987
  %1043 = vmatprep.subr.mxu0 0.0
  %1044 = vmatpush1.msra.mxu0 %v988
  %1045 = vmatprep.subr.mxu0 0.0
  %1046 = vmatpush1.msra.mxu0 %v989
  %1047 = vmatprep.subr.mxu0 0.0
  %1048 = vmatpush1.msra.mxu0 %v990
  %1049 = vmatprep.subr.mxu0 0.0
  %1050 = vmatpush1.msra.mxu0 %v991
  %1051 = vmatprep.subr.mxu0 0.0
  %1052 = vmatpush1.msra.mxu0 %v992
  %1053 = vmatprep.subr.mxu0 0.0
  %1054 = vmatpush1.msra.mxu0 %v993
  %1055 = vmatprep.subr.mxu0 0.0
  %1056 = vmatpush1.msra.mxu0 %v994
  %1057 = vmatprep.subr.mxu0 0.0
  %1058 = vmatpush1.msra.mxu0 %v995
  %1059 = vmatprep.subr.mxu0 0.0
  %1060 = vmatpush1.msra.mxu0 %v996
  %1061 = vmatprep.subr.mxu0 0.0
  %1062 = vmatpush1.msra.mxu0 %v997
  %1063 = vmatprep.subr.mxu0 0.0
  %1064 = vmatpush1.msra.mxu0 %v998
  %1065 = vmatprep.subr.mxu0 0.0
  %1066 = vmatpush1.msra.mxu0 %v999
  %1067 = vmatprep.subr.mxu0 0.0
  %1068 = vmatpush1.msra.mxu0 %v1000
  %1069 = vmatprep.subr.mxu0 0.0
  %1070 = vmatpush1.msra.mxu0 %v1001
  %1071 = vmatprep.subr.mxu0 0.0
  %1072 = vmatpush1.msra.mxu0 %v1002
  %1073 = vmatprep.subr.mxu0 0.0
  %1074 = vmatpush1.msra.mxu0 %v1003
  %1075 = vmatprep.mubr.f32.mxu0 %v941
  %1076 = vmatmul.mubr.f32.gmra.mrb[0].mxu0 %v940
  %v1077 = vpop.f32.mrb[0].mxu0
  %v1078 = vadd.f32 %v1009, %v1077
  %v1079 = vpop.f32.mrb[0].mxu0
  %1080 = vmatprep.mubr.f32.mxu0 %v943
  %1081 = vmatmul.mubr.f32.gmra.mrb[0].mxu0 %v942
  %v1082 = vpop.f32.mrb[0].mxu0
  %v1083 = vadd.f32 %v1009, %v1082
  %v1084 = vpop.f32.mrb[0].mxu0
  %1085 = vmatprep.mubr.f32.mxu0 %v945
  %1086 = vmatmul.mubr.f32.gmra.mrb[0].mxu0 %v944
  %v1087 = vpop.f32.mrb[0].mxu0
  %v1088 = vadd.f32 %v1009, %v1087
  %v1089 = vpop.f32.mrb[0].mxu0
  %1090 = vmatprep.mubr.f32.mxu0 %v947
  %1091 = vmatmul.mubr.f32.gmra.mrb[0].mxu0 %v946
  %v1092 = vpop.f32.mrb[0].mxu0
  %v1093 = vadd.f32 %v1009, %v1092
  %v1094 = vpop.f32.mrb[0].mxu0
  %1095 = vmatprep.mubr.f32.mxu0 %v949
  %1096 = vmatmul.mubr.f32.gmra.mrb[0].mxu0 %v948
  %v1097 = vpop.f32.mrb[0].mxu0
  %v1098 = vadd.f32 %v1009, %v1097
  %v1099 = vpop.f32.mrb[0].mxu0
  %1100 = vmatprep.mubr.f32.mxu0 %v951
  %1101 = vmatmul.mubr.f32.gmra.mrb[0].mxu0 %v950
  %v1102 = vpop.f32.mrb[0].mxu0
  %v1103 = vadd.f32 %v1009, %v1102
  %v1104 = vpop.f32.mrb[0].mxu0
  %1105 = vmatprep.mubr.f32.mxu0 %v953
  %1106 = vmatmul.mubr.f32.gmra.mrb[0].mxu0 %v952
  %v1107 = vpop.f32.mrb[0].mxu0
  %v1108 = vadd.f32 %v1009, %v1107
  %v1109 = vpop.f32.mrb[0].mxu0
  %1110 = vmatprep.mubr.f32.mxu0 %v955
  %1111 = vmatmul.mubr.f32.gmra.mrb[0].mxu0 %v954
  %v1112 = vpop.f32.mrb[0].mxu0
  %v1113 = vadd.f32 %v1009, %v1112
  %v1114 = vpop.f32.mrb[0].mxu0
  %1115 = vmatprep.mubr.f32.mxu0 %v957
  %1116 = vmatmul.mubr.f32.gmra.mrb[0].mxu0 %v956
  %v1117 = vpop.f32.mrb[0].mxu0
  %v1118 = vadd.f32 %v1009, %v1117
  %v1119 = vpop.f32.mrb[0].mxu0
  %1120 = vmatprep.mubr.f32.mxu0 %v959
  %1121 = vmatmul.mubr.f32.gmra.mrb[0].mxu0 %v958
  %v1122 = vpop.f32.mrb[0].mxu0
  %v1123 = vadd.f32 %v1009, %v1122
  %v1124 = vpop.f32.mrb[0].mxu0
  %1125 = vmatprep.mubr.f32.mxu0 %v961
  %1126 = vmatmul.mubr.f32.gmra.mrb[0].mxu0 %v960
  %v1127 = vpop.f32.mrb[0].mxu0
  %v1128 = vadd.f32 %v1009, %v1127
  %v1129 = vpop.f32.mrb[0].mxu0
  %1130 = vmatprep.mubr.f32.mxu0 %v963
  %1131 = vmatmul.mubr.f32.gmra.mrb[0].mxu0 %v962
  %v1132 = vpop.f32.mrb[0].mxu0
  %v1133 = vadd.f32 %v1009, %v1132
  %v1134 = vpop.f32.mrb[0].mxu0
  %1135 = vmatprep.mubr.f32.mxu0 %v965
  %1136 = vmatmul.mubr.f32.gmra.mrb[0].mxu0 %v964
  %v1137 = vpop.f32.mrb[0].mxu0
  %v1138 = vadd.f32 %v1009, %v1137
  %v1139 = vpop.f32.mrb[0].mxu0
  %1140 = vmatprep.mubr.f32.mxu0 %v967
  %1141 = vmatmul.mubr.f32.gmra.mrb[0].mxu0 %v966
  %v1142 = vpop.f32.mrb[0].mxu0
  %v1143 = vadd.f32 %v1009, %v1142
  %v1144 = vpop.f32.mrb[0].mxu0
  %1145 = vmatprep.mubr.f32.mxu0 %v969
  %1146 = vmatmul.mubr.f32.gmra.mrb[0].mxu0 %v968
  %v1147 = vpop.f32.mrb[0].mxu0
  %v1148 = vadd.f32 %v1009, %v1147
  %v1149 = vpop.f32.mrb[0].mxu0
  %1150 = vmatprep.mubr.f32.mxu0 %v971
  %1151 = vmatmul.mubr.f32.gmra.mrb[0].mxu0 %v970
  %v1152 = vpop.f32.mrb[0].mxu0
  %v1153 = vadd.f32 %v1009, %v1152
  %v1154 = vpop.f32.mrb[0].mxu0
  %1155 = vdwg.mxu0
  %v1156 = vld [vmem:[%s7] sm:$0xff]
  %v1157 = vld [vmem:[%s7 + $0x8] sm:$0xff]
  %v1158 = vld [vmem:[%s7 + $0x10] sm:$0xff]
  %v1159 = vld [vmem:[%s7 + $0x18] sm:$0xff]
  %v1160 = vld [vmem:[%s7 + $0x20] sm:$0xff]
  %v1161 = vld [vmem:[%s7 + $0x28] sm:$0xff]
  %v1162 = vld [vmem:[%s7 + $0x30] sm:$0xff]
  %v1163 = vld [vmem:[%s7 + $0x38] sm:$0xff]
  %v1164 = vld [vmem:[%s7 + $0x40] sm:$0xff]
  %v1165 = vld [vmem:[%s7 + $0x48] sm:$0xff]
  %v1166 = vld [vmem:[%s7 + $0x50] sm:$0xff]
  %v1167 = vld [vmem:[%s7 + $0x58] sm:$0xff]
  %v1168 = vld [vmem:[%s7 + $0x60] sm:$0xff]
  %v1169 = vld [vmem:[%s7 + $0x68] sm:$0xff]
  %v1170 = vld [vmem:[%s7 + $0x70] sm:$0xff]
  %v1171 = vld [vmem:[%s7 + $0x78] sm:$0xff]
  %v1172 = vadd.f32 %v1078, %v1156
  %v1173 = vadd.f32 %v1083, %v1157
  %v1174 = vadd.f32 %v1088, %v1158
  %v1175 = vadd.f32 %v1093, %v1159
  %v1176 = vadd.f32 %v1098, %v1160
  %v1177 = vadd.f32 %v1103, %v1161
  %v1178 = vadd.f32 %v1108, %v1162
  %v1179 = vadd.f32 %v1113, %v1163
  %v1180 = vadd.f32 %v1118, %v1164
  %v1181 = vadd.f32 %v1123, %v1165
  %v1182 = vadd.f32 %v1128, %v1166
  %v1183 = vadd.f32 %v1133, %v1167
  %v1184 = vadd.f32 %v1138, %v1168
  %v1185 = vadd.f32 %v1143, %v1169
  %v1186 = vadd.f32 %v1148, %v1170
  %v1187 = vadd.f32 %v1153, %v1171
  %v1188 = vld [vmem:[%s8] sm:$0xff]
  %v1189 = vld [vmem:[%s8 + $0x8] sm:$0xff]
  %v1190 = vld [vmem:[%s8 + $0x10] sm:$0xff]
  %v1191 = vld [vmem:[%s8 + $0x18] sm:$0xff]
  %v1192 = vld [vmem:[%s8 + $0x20] sm:$0xff]
  %v1193 = vld [vmem:[%s8 + $0x28] sm:$0xff]
  %v1194 = vld [vmem:[%s8 + $0x30] sm:$0xff]
  %v1195 = vld [vmem:[%s8 + $0x38] sm:$0xff]
  %v1196 = vld [vmem:[%s8 + $0x40] sm:$0xff]
  %v1197 = vld [vmem:[%s8 + $0x48] sm:$0xff]
  %v1198 = vld [vmem:[%s8 + $0x50] sm:$0xff]
  %v1199 = vld [vmem:[%s8 + $0x58] sm:$0xff]
  %v1200 = vld [vmem:[%s8 + $0x60] sm:$0xff]
  %v1201 = vld [vmem:[%s8 + $0x68] sm:$0xff]
  %v1202 = vld [vmem:[%s8 + $0x70] sm:$0xff]
  %v1203 = vld [vmem:[%s8 + $0x78] sm:$0xff]
  %v1204 = vld [vmem:[%s10] sm:$0xff]
  %v1205 = vld [vmem:[%s10 + $0x8] sm:$0xff]
  %v1206 = vld [vmem:[%s10 + $0x10] sm:$0xff]
  %v1207 = vld [vmem:[%s10 + $0x18] sm:$0xff]
  %v1208 = vld [vmem:[%s10 + $0x20] sm:$0xff]
  %v1209 = vld [vmem:[%s10 + $0x28] sm:$0xff]
  %v1210 = vld [vmem:[%s10 + $0x30] sm:$0xff]
  %v1211 = vld [vmem:[%s10 + $0x38] sm:$0xff]
  %v1212 = vld [vmem:[%s10 + $0x40] sm:$0xff]
  %v1213 = vld [vmem:[%s10 + $0x48] sm:$0xff]
  %v1214 = vld [vmem:[%s10 + $0x50] sm:$0xff]
  %v1215 = vld [vmem:[%s10 + $0x58] sm:$0xff]
  %v1216 = vld [vmem:[%s10 + $0x60] sm:$0xff]
  %v1217 = vld [vmem:[%s10 + $0x68] sm:$0xff]
  %v1218 = vld [vmem:[%s10 + $0x70] sm:$0xff]
  %v1219 = vld [vmem:[%s10 + $0x78] sm:$0xff]
  %v1220 = vld [vmem:[%s10 + $0x80] sm:$0xff]
  %v1221 = vld [vmem:[%s10 + $0x88] sm:$0xff]
  %v1222 = vld [vmem:[%s10 + $0x90] sm:$0xff]
  %v1223 = vld [vmem:[%s10 + $0x98] sm:$0xff]
  %v1224 = vld [vmem:[%s10 + $0xa0] sm:$0xff]
  %v1225 = vld [vmem:[%s10 + $0xa8] sm:$0xff]
  %v1226 = vld [vmem:[%s10 + $0xb0] sm:$0xff]
  %v1227 = vld [vmem:[%s10 + $0xb8] sm:$0xff]
  %v1228 = vld [vmem:[%s10 + $0xc0] sm:$0xff]
  %v1229 = vld [vmem:[%s10 + $0xc8] sm:$0xff]
  %v1230 = vld [vmem:[%s10 + $0xd0] sm:$0xff]
  %v1231 = vld [vmem:[%s10 + $0xd8] sm:$0xff]
  %v1232 = vld [vmem:[%s10 + $0xe0] sm:$0xff]
  %v1233 = vld [vmem:[%s10 + $0xe8] sm:$0xff]
  %v1234 = vld [vmem:[%s10 + $0xf0] sm:$0xff]
  %v1235 = vld [vmem:[%s10 + $0xf8] sm:$0xff]
  %v1236 = vld [vmem:[%s11] sm:$0x1]
  %1237 = vmatprep.subr.mxu0 0.0
  %1238 = vmatpush1.msra.mxu0 %v924
  %1239 = vmatprep.subr.mxu0 0.0
  %1240 = vmatpush1.msra.mxu0 %v925
  %1241 = vmatprep.subr.mxu0 0.0
  %1242 = vmatpush1.msra.mxu0 %v926
  %1243 = vmatprep.subr.mxu0 0.0
  %1244 = vmatpush1.msra.mxu0 %v927
  %1245 = vmatprep.subr.mxu0 0.0
  %1246 = vmatpush1.msra.mxu0 %v928
  %1247 = vmatprep.subr.mxu0 0.0
  %1248 = vmatpush1.msra.mxu0 %v929
  %1249 = vmatprep.subr.mxu0 0.0
  %1250 = vmatpush1.msra.mxu0 %v930
  %1251 = vmatprep.subr.mxu0 0.0
  %1252 = vmatpush1.msra.mxu0 %v931
  %1253 = vmatprep.subr.mxu0 0.0
  %1254 = vmatpush1.msra.mxu0 %v932
  %1255 = vmatprep.subr.mxu0 0.0
  %1256 = vmatpush1.msra.mxu0 %v933
  %1257 = vmatprep.subr.mxu0 0.0
  %1258 = vmatpush1.msra.mxu0 %v934
  %1259 = vmatprep.subr.mxu0 0.0
  %1260 = vmatpush1.msra.mxu0 %v935
  %1261 = vmatprep.subr.mxu0 0.0
  %1262 = vmatpush1.msra.mxu0 %v936
  %1263 = vmatprep.subr.mxu0 0.0
  %1264 = vmatpush1.msra.mxu0 %v937
  %1265 = vmatprep.subr.mxu0 0.0
  %1266 = vmatpush1.msra.mxu0 %v938
  %1267 = vmatprep.subr.mxu0 0.0
  %1268 = vmatpush1.msra.mxu0 %v939
  %1269 = vmatprep.subr.mxu0 0.0
  %1270 = vmatpush1.msra.mxu0 0.0
  %1271 = vmatprep.subr.mxu0 0.0
  %1272 = vmatpush1.msra.mxu0 0.0
  %1273 = vmatprep.subr.mxu0 0.0
  %1274 = vmatpush1.msra.mxu0 0.0
  %1275 = vmatprep.subr.mxu0 0.0
  %1276 = vmatpush1.msra.mxu0 0.0
  %1277 = vmatprep.subr.mxu0 0.0
  %1278 = vmatpush1.msra.mxu0 0.0
  %1279 = vmatprep.subr.mxu0 0.0
  %1280 = vmatpush1.msra.mxu0 0.0
  %1281 = vmatprep.subr.mxu0 0.0
  %1282 = vmatpush1.msra.mxu0 0.0
  %1283 = vmatprep.subr.mxu0 0.0
  %1284 = vmatpush1.msra.mxu0 0.0
  %1285 = vmatprep.subr.mxu0 0.0
  %1286 = vmatpush1.msra.mxu0 0.0
  %1287 = vmatprep.subr.mxu0 0.0
  %1288 = vmatpush1.msra.mxu0 0.0
  %1289 = vmatprep.subr.mxu0 0.0
  %1290 = vmatpush1.msra.mxu0 0.0
  %1291 = vmatprep.subr.mxu0 0.0
  %1292 = vmatpush1.msra.mxu0 0.0
  %1293 = vmatprep.subr.mxu0 0.0
  %1294 = vmatpush1.msra.mxu0 0.0
  %1295 = vmatprep.subr.mxu0 0.0
  %1296 = vmatpush1.msra.mxu0 0.0
  %1297 = vmatprep.subr.mxu0 0.0
  %1298 = vmatpush1.msra.mxu0 0.0
  %1299 = vmatprep.subr.mxu0 0.0
  %1300 = vmatpush1.msra.mxu0 0.0
  %1301 = vmatprep.mubr.f32.mxu0 0.0
  %1302 = vmatmul.mubr.f32.gmra.mrb[0].mxu0 %v1188
  %v1303 = vpop.f32.mrb[0].mxu0
  %v1304 = vadd.f32 0.0, %v1303
  %v1305 = vpop.f32.mrb[0].mxu0
  %1306 = vmatprep.mubr.f32.mxu0 0.0
  %1307 = vmatmul.mubr.f32.gmra.mrb[0].mxu0 %v1189
  %v1308 = vpop.f32.mrb[0].mxu0
  %v1309 = vadd.f32 0.0, %v1308
  %v1310 = vpop.f32.mrb[0].mxu0
  %1311 = vmatprep.mubr.f32.mxu0 0.0
  %1312 = vmatmul.mubr.f32.gmra.mrb[0].mxu0 %v1190
  %v1313 = vpop.f32.mrb[0].mxu0
  %v1314 = vadd.f32 0.0, %v1313
  %v1315 = vpop.f32.mrb[0].mxu0
  %1316 = vmatprep.mubr.f32.mxu0 0.0
  %1317 = vmatmul.mubr.f32.gmra.mrb[0].mxu0 %v1191
  %v1318 = vpop.f32.mrb[0].mxu0
  %v1319 = vadd.f32 0.0, %v1318
  %v1320 = vpop.f32.mrb[0].mxu0
  %1321 = vmatprep.mubr.f32.mxu0 0.0
  %1322 = vmatmul.mubr.f32.gmra.mrb[0].mxu0 %v1192
  %v1323 = vpop.f32.mrb[0].mxu0
  %v1324 = vadd.f32 0.0, %v1323
  %v1325 = vpop.f32.mrb[0].mxu0
  %1326 = vmatprep.mubr.f32.mxu0 0.0
  %1327 = vmatmul.mubr.f32.gmra.mrb[0].mxu0 %v1193
  %v1328 = vpop.f32.mrb[0].mxu0
  %v1329 = vadd.f32 0.0, %v1328
  %v1330 = vpop.f32.mrb[0].mxu0
  %1331 = vmatprep.mubr.f32.mxu0 0.0
  %1332 = vmatmul.mubr.f32.gmra.mrb[0].mxu0 %v1194
  %v1333 = vpop.f32.mrb[0].mxu0
  %v1334 = vadd.f32 0.0, %v1333
  %v1335 = vpop.f32.mrb[0].mxu0
  %1336 = vmatprep.mubr.f32.mxu0 0.0
  %1337 = vmatmul.mubr.f32.gmra.mrb[0].mxu0 %v1195
  %v1338 = vpop.f32.mrb[0].mxu0
  %v1339 = vadd.f32 0.0, %v1338
  %v1340 = vpop.f32.mrb[0].mxu0
  %1341 = vmatprep.mubr.f32.mxu0 0.0
  %1342 = vmatmul.mubr.f32.gmra.mrb[0].mxu0 %v1196
  %v1343 = vpop.f32.mrb[0].mxu0
  %v1344 = vadd.f32 0.0, %v1343
  %v1345 = vpop.f32.mrb[0].mxu0
  %1346 = vmatprep.mubr.f32.mxu0 0.0
  %1347 = vmatmul.mubr.f32.gmra.mrb[0].mxu0 %v1197
  %v1348 = vpop.f32.mrb[0].mxu0
  %v1349 = vadd.f32 0.0, %v1348
  %v1350 = vpop.f32.mrb[0].mxu0
  %1351 = vmatprep.mubr.f32.mxu0 0.0
  %1352 = vmatmul.mubr.f32.gmra.mrb[0].mxu0 %v1198
  %v1353 = vpop.f32.mrb[0].mxu0
  %v1354 = vadd.f32 0.0, %v1353
  %v1355 = vpop.f32.mrb[0].mxu0
  %1356 = vmatprep.mubr.f32.mxu0 0.0
  %1357 = vmatmul.mubr.f32.gmra.mrb[0].mxu0 %v1199
  %v1358 = vpop.f32.mrb[0].mxu0
  %v1359 = vadd.f32 0.0, %v1358
  %v1360 = vpop.f32.mrb[0].mxu0
  %1361 = vmatprep.mubr.f32.mxu0 0.0
  %1362 = vmatmul.mubr.f32.gmra.mrb[0].mxu0 %v1200
  %v1363 = vpop.f32.mrb[0].mxu0
  %v1364 = vadd.f32 0.0, %v1363
  %v1365 = vpop.f32.mrb[0].mxu0
  %1366 = vmatprep.mubr.f32.mxu0 0.0
  %1367 = vmatmul.mubr.f32.gmra.mrb[0].mxu0 %v1201
  %v1368 = vpop.f32.mrb[0].mxu0
  %v1369 = vadd.f32 0.0, %v1368
  %v1370 = vpop.f32.mrb[0].mxu0
  %1371 = vmatprep.mubr.f32.mxu0 0.0
  %1372 = vmatmul.mubr.f32.gmra.mrb[0].mxu0 %v1202
  %v1373 = vpop.f32.mrb[0].mxu0
  %v1374 = vadd.f32 0.0, %v1373
  %v1375 = vpop.f32.mrb[0].mxu0
  %1376 = vmatprep.mubr.f32.mxu0 0.0
  %1377 = vmatmul.mubr.f32.gmra.mrb[0].mxu0 %v1203
  %v1378 = vpop.f32.mrb[0].mxu0
  %v1379 = vadd.f32 0.0, %v1378
  %v1380 = vpop.f32.mrb[0].mxu0
  %1381 = vdwg.mxu0
  %v1383 = vlaneseq
  %v1384 = vshrl.u32 %v1383, 7
  %v1385 = vsub.s32 0, %v1384
  %v1386 = vrot.slane %v1236, %v1385
  %1388 = vmatprep.subr.mxu0 0.0
  %1389 = vmatpush1.msra.mxu0 %v1204
  %1390 = vmatprep.subr.mxu0 0.0
  %1391 = vmatpush1.msra.mxu0 %v1205
  %1392 = vmatprep.subr.mxu0 0.0
  %1393 = vmatpush1.msra.mxu0 %v1206
  %1394 = vmatprep.subr.mxu0 0.0
  %1395 = vmatpush1.msra.mxu0 %v1207
  %1396 = vmatprep.subr.mxu0 0.0
  %1397 = vmatpush1.msra.mxu0 %v1208
  %1398 = vmatprep.subr.mxu0 0.0
  %1399 = vmatpush1.msra.mxu0 %v1209
  %1400 = vmatprep.subr.mxu0 0.0
  %1401 = vmatpush1.msra.mxu0 %v1210
  %1402 = vmatprep.subr.mxu0 0.0
  %1403 = vmatpush1.msra.mxu0 %v1211
  %1404 = vmatprep.subr.mxu0 0.0
  %1405 = vmatpush1.msra.mxu0 %v1212
  %1406 = vmatprep.subr.mxu0 0.0
  %1407 = vmatpush1.msra.mxu0 %v1213
  %1408 = vmatprep.subr.mxu0 0.0
  %1409 = vmatpush1.msra.mxu0 %v1214
  %1410 = vmatprep.subr.mxu0 0.0
  %1411 = vmatpush1.msra.mxu0 %v1215
  %1412 = vmatprep.subr.mxu0 0.0
  %1413 = vmatpush1.msra.mxu0 %v1216
  %1414 = vmatprep.subr.mxu0 0.0
  %1415 = vmatpush1.msra.mxu0 %v1217
  %1416 = vmatprep.subr.mxu0 0.0
  %1417 = vmatpush1.msra.mxu0 %v1218
  %1418 = vmatprep.subr.mxu0 0.0
  %1419 = vmatpush1.msra.mxu0 %v1219
  %1420 = vmatprep.subr.mxu0 0.0
  %1421 = vmatpush1.msra.mxu0 %v1220
  %1422 = vmatprep.subr.mxu0 0.0
  %1423 = vmatpush1.msra.mxu0 %v1221
  %1424 = vmatprep.subr.mxu0 0.0
  %1425 = vmatpush1.msra.mxu0 %v1222
  %1426 = vmatprep.subr.mxu0 0.0
  %1427 = vmatpush1.msra.mxu0 %v1223
  %1428 = vmatprep.subr.mxu0 0.0
  %1429 = vmatpush1.msra.mxu0 %v1224
  %1430 = vmatprep.subr.mxu0 0.0
  %1431 = vmatpush1.msra.mxu0 %v1225
  %1432 = vmatprep.subr.mxu0 0.0
  %1433 = vmatpush1.msra.mxu0 %v1226
  %1434 = vmatprep.subr.mxu0 0.0
  %1435 = vmatpush1.msra.mxu0 %v1227
  %1436 = vmatprep.subr.mxu0 0.0
  %1437 = vmatpush1.msra.mxu0 %v1228
  %1438 = vmatprep.subr.mxu0 0.0
  %1439 = vmatpush1.msra.mxu0 %v1229
  %1440 = vmatprep.subr.mxu0 0.0
  %1441 = vmatpush1.msra.mxu0 %v1230
  %1442 = vmatprep.subr.mxu0 0.0
  %1443 = vmatpush1.msra.mxu0 %v1231
  %1444 = vmatprep.subr.mxu0 0.0
  %1445 = vmatpush1.msra.mxu0 %v1232
  %1446 = vmatprep.subr.mxu0 0.0
  %1447 = vmatpush1.msra.mxu0 %v1233
  %1448 = vmatprep.subr.mxu0 0.0
  %1449 = vmatpush1.msra.mxu0 %v1234
  %1450 = vmatprep.subr.mxu0 0.0
  %1451 = vmatpush1.msra.mxu0 %v1235
  %1452 = vmatprep.mubr.f32.mxu0 %v1172
  %1453 = vmatmul.mubr.f32.gmra.mrb[0].mxu0 %v1304
  %v1454 = vpop.f32.mrb[0].mxu0
  %v1455 = vadd.f32 %v1386, %v1454
  %v1456 = vpop.f32.mrb[0].mxu0
  %1457 = vmatprep.mubr.f32.mxu0 %v1173
  %1458 = vmatmul.mubr.f32.gmra.mrb[0].mxu0 %v1309
  %v1459 = vpop.f32.mrb[0].mxu0
  %v1460 = vadd.f32 %v1386, %v1459
  %v1461 = vpop.f32.mrb[0].mxu0
  %1462 = vmatprep.mubr.f32.mxu0 %v1174
  %1463 = vmatmul.mubr.f32.gmra.mrb[0].mxu0 %v1314
  %v1464 = vpop.f32.mrb[0].mxu0
  %v1465 = vadd.f32 %v1386, %v1464
  %v1466 = vpop.f32.mrb[0].mxu0
  %1467 = vmatprep.mubr.f32.mxu0 %v1175
  %1468 = vmatmul.mubr.f32.gmra.mrb[0].mxu0 %v1319
  %v1469 = vpop.f32.mrb[0].mxu0
  %v1470 = vadd.f32 %v1386, %v1469
  %v1471 = vpop.f32.mrb[0].mxu0
  %1472 = vmatprep.mubr.f32.mxu0 %v1176
  %1473 = vmatmul.mubr.f32.gmra.mrb[0].mxu0 %v1324
  %v1474 = vpop.f32.mrb[0].mxu0
  %v1475 = vadd.f32 %v1386, %v1474
  %v1476 = vpop.f32.mrb[0].mxu0
  %1477 = vmatprep.mubr.f32.mxu0 %v1177
  %1478 = vmatmul.mubr.f32.gmra.mrb[0].mxu0 %v1329
  %v1479 = vpop.f32.mrb[0].mxu0
  %v1480 = vadd.f32 %v1386, %v1479
  %v1481 = vpop.f32.mrb[0].mxu0
  %1482 = vmatprep.mubr.f32.mxu0 %v1178
  %1483 = vmatmul.mubr.f32.gmra.mrb[0].mxu0 %v1334
  %v1484 = vpop.f32.mrb[0].mxu0
  %v1485 = vadd.f32 %v1386, %v1484
  %v1486 = vpop.f32.mrb[0].mxu0
  %1487 = vmatprep.mubr.f32.mxu0 %v1179
  %1488 = vmatmul.mubr.f32.gmra.mrb[0].mxu0 %v1339
  %v1489 = vpop.f32.mrb[0].mxu0
  %v1490 = vadd.f32 %v1386, %v1489
  %v1491 = vpop.f32.mrb[0].mxu0
  %1492 = vmatprep.mubr.f32.mxu0 %v1180
  %1493 = vmatmul.mubr.f32.gmra.mrb[0].mxu0 %v1344
  %v1494 = vpop.f32.mrb[0].mxu0
  %v1495 = vadd.f32 %v1386, %v1494
  %v1496 = vpop.f32.mrb[0].mxu0
  %1497 = vmatprep.mubr.f32.mxu0 %v1181
  %1498 = vmatmul.mubr.f32.gmra.mrb[0].mxu0 %v1349
  %v1499 = vpop.f32.mrb[0].mxu0
  %v1500 = vadd.f32 %v1386, %v1499
  %v1501 = vpop.f32.mrb[0].mxu0
  %1502 = vmatprep.mubr.f32.mxu0 %v1182
  %1503 = vmatmul.mubr.f32.gmra.mrb[0].mxu0 %v1354
  %v1504 = vpop.f32.mrb[0].mxu0
  %v1505 = vadd.f32 %v1386, %v1504
  %v1506 = vpop.f32.mrb[0].mxu0
  %1507 = vmatprep.mubr.f32.mxu0 %v1183
  %1508 = vmatmul.mubr.f32.gmra.mrb[0].mxu0 %v1359
  %v1509 = vpop.f32.mrb[0].mxu0
  %v1510 = vadd.f32 %v1386, %v1509
  %v1511 = vpop.f32.mrb[0].mxu0
  %1512 = vmatprep.mubr.f32.mxu0 %v1184
  %1513 = vmatmul.mubr.f32.gmra.mrb[0].mxu0 %v1364
  %v1514 = vpop.f32.mrb[0].mxu0
  %v1515 = vadd.f32 %v1386, %v1514
  %v1516 = vpop.f32.mrb[0].mxu0
  %1517 = vmatprep.mubr.f32.mxu0 %v1185
  %1518 = vmatmul.mubr.f32.gmra.mrb[0].mxu0 %v1369
  %v1519 = vpop.f32.mrb[0].mxu0
  %v1520 = vadd.f32 %v1386, %v1519
  %v1521 = vpop.f32.mrb[0].mxu0
  %1522 = vmatprep.mubr.f32.mxu0 %v1186
  %1523 = vmatmul.mubr.f32.gmra.mrb[0].mxu0 %v1374
  %v1524 = vpop.f32.mrb[0].mxu0
  %v1525 = vadd.f32 %v1386, %v1524
  %v1526 = vpop.f32.mrb[0].mxu0
  %1527 = vmatprep.mubr.f32.mxu0 %v1187
  %1528 = vmatmul.mubr.f32.gmra.mrb[0].mxu0 %v1379
  %v1529 = vpop.f32.mrb[0].mxu0
  %v1530 = vadd.f32 %v1386, %v1529
  %v1531 = vpop.f32.mrb[0].mxu0
  %1532 = vdwg.mxu0
  %v1533 = vmax.f32 %v1455, 0.0
  %v1534 = vmax.f32 %v1460, 0.0
  %v1535 = vmax.f32 %v1465, 0.0
  %v1536 = vmax.f32 %v1470, 0.0
  %v1537 = vmax.f32 %v1475, 0.0
  %v1538 = vmax.f32 %v1480, 0.0
  %v1539 = vmax.f32 %v1485, 0.0
  %v1540 = vmax.f32 %v1490, 0.0
  %v1541 = vmax.f32 %v1495, 0.0
  %v1542 = vmax.f32 %v1500, 0.0
  %v1543 = vmax.f32 %v1505, 0.0
  %v1544 = vmax.f32 %v1510, 0.0
  %v1545 = vmax.f32 %v1515, 0.0
  %v1546 = vmax.f32 %v1520, 0.0
  %v1547 = vmax.f32 %v1525, 0.0
  %v1548 = vmax.f32 %v1530, 0.0
  %v1549 = vld [vmem:[%s9] sm:$0xff]
  %v1550 = vld [vmem:[%s9 + $0x8] sm:$0xff]
  %v1551 = vld [vmem:[%s9 + $0x10] sm:$0xff]
  %v1552 = vld [vmem:[%s9 + $0x18] sm:$0xff]
  %v1553 = vld [vmem:[%s9 + $0x20] sm:$0xff]
  %v1554 = vld [vmem:[%s9 + $0x28] sm:$0xff]
  %v1555 = vld [vmem:[%s9 + $0x30] sm:$0xff]
  %v1556 = vld [vmem:[%s9 + $0x38] sm:$0xff]
  %v1557 = vld [vmem:[%s9 + $0x40] sm:$0xff]
  %v1558 = vld [vmem:[%s9 + $0x48] sm:$0xff]
  %v1559 = vld [vmem:[%s9 + $0x50] sm:$0xff]
  %v1560 = vld [vmem:[%s9 + $0x58] sm:$0xff]
  %v1561 = vld [vmem:[%s9 + $0x60] sm:$0xff]
  %v1562 = vld [vmem:[%s9 + $0x68] sm:$0xff]
  %v1563 = vld [vmem:[%s9 + $0x70] sm:$0xff]
  %v1564 = vld [vmem:[%s9 + $0x78] sm:$0xff]
  %v1565 = vld [vmem:[%s12] sm:$0xff]
  %v1566 = vld [vmem:[%s12 + $0x8] sm:$0xff]
  %v1567 = vld [vmem:[%s12 + $0x10] sm:$0xff]
  %v1568 = vld [vmem:[%s12 + $0x18] sm:$0xff]
  %v1569 = vld [vmem:[%s12 + $0x20] sm:$0xff]
  %v1570 = vld [vmem:[%s12 + $0x28] sm:$0xff]
  %v1571 = vld [vmem:[%s12 + $0x30] sm:$0xff]
  %v1572 = vld [vmem:[%s12 + $0x38] sm:$0xff]
  %v1573 = vld [vmem:[%s12 + $0x40] sm:$0xff]
  %v1574 = vld [vmem:[%s12 + $0x48] sm:$0xff]
  %v1575 = vld [vmem:[%s12 + $0x50] sm:$0xff]
  %v1576 = vld [vmem:[%s12 + $0x58] sm:$0xff]
  %v1577 = vld [vmem:[%s12 + $0x60] sm:$0xff]
  %v1578 = vld [vmem:[%s12 + $0x68] sm:$0xff]
  %v1579 = vld [vmem:[%s12 + $0x70] sm:$0xff]
  %v1580 = vld [vmem:[%s12 + $0x78] sm:$0xff]
  %v1581 = vld [vmem:[%s12 + $0x80] sm:$0xff]
  %v1582 = vld [vmem:[%s12 + $0x88] sm:$0xff]
  %v1583 = vld [vmem:[%s12 + $0x90] sm:$0xff]
  %v1584 = vld [vmem:[%s12 + $0x98] sm:$0xff]
  %v1585 = vld [vmem:[%s12 + $0xa0] sm:$0xff]
  %v1586 = vld [vmem:[%s12 + $0xa8] sm:$0xff]
  %v1587 = vld [vmem:[%s12 + $0xb0] sm:$0xff]
  %v1588 = vld [vmem:[%s12 + $0xb8] sm:$0xff]
  %v1589 = vld [vmem:[%s12 + $0xc0] sm:$0xff]
  %v1590 = vld [vmem:[%s12 + $0xc8] sm:$0xff]
  %v1591 = vld [vmem:[%s12 + $0xd0] sm:$0xff]
  %v1592 = vld [vmem:[%s12 + $0xd8] sm:$0xff]
  %v1593 = vld [vmem:[%s12 + $0xe0] sm:$0xff]
  %v1594 = vld [vmem:[%s12 + $0xe8] sm:$0xff]
  %v1595 = vld [vmem:[%s12 + $0xf0] sm:$0xff]
  %v1596 = vld [vmem:[%s12 + $0xf8] sm:$0xff]
  %v1597 = vld [vmem:[%s13] sm:$0x1]
  %1598 = vmatprep.subr.mxu0 0.0
  %1599 = vmatpush1.msra.mxu0 %v1172
  %1600 = vmatprep.subr.mxu0 0.0
  %1601 = vmatpush1.msra.mxu0 %v1173
  %1602 = vmatprep.subr.mxu0 0.0
  %1603 = vmatpush1.msra.mxu0 %v1174
  %1604 = vmatprep.subr.mxu0 0.0
  %1605 = vmatpush1.msra.mxu0 %v1175
  %1606 = vmatprep.subr.mxu0 0.0
  %1607 = vmatpush1.msra.mxu0 %v1176
  %1608 = vmatprep.subr.mxu0 0.0
  %1609 = vmatpush1.msra.mxu0 %v1177
  %1610 = vmatprep.subr.mxu0 0.0
  %1611 = vmatpush1.msra.mxu0 %v1178
  %1612 = vmatprep.subr.mxu0 0.0
  %1613 = vmatpush1.msra.mxu0 %v1179
  %1614 = vmatprep.subr.mxu0 0.0
  %1615 = vmatpush1.msra.mxu0 %v1180
  %1616 = vmatprep.subr.mxu0 0.0
  %1617 = vmatpush1.msra.mxu0 %v1181
  %1618 = vmatprep.subr.mxu0 0.0
  %1619 = vmatpush1.msra.mxu0 %v1182
  %1620 = vmatprep.subr.mxu0 0.0
  %1621 = vmatpush1.msra.mxu0 %v1183
  %1622 = vmatprep.subr.mxu0 0.0
  %1623 = vmatpush1.msra.mxu0 %v1184
  %1624 = vmatprep.subr.mxu0 0.0
  %1625 = vmatpush1.msra.mxu0 %v1185
  %1626 = vmatprep.subr.mxu0 0.0
  %1627 = vmatpush1.msra.mxu0 %v1186
  %1628 = vmatprep.subr.mxu0 0.0
  %1629 = vmatpush1.msra.mxu0 %v1187
  %1630 = vmatprep.subr.mxu0 0.0
  %1631 = vmatpush1.msra.mxu0 0.0
  %1632 = vmatprep.subr.mxu0 0.0
  %1633 = vmatpush1.msra.mxu0 0.0
  %1634 = vmatprep.subr.mxu0 0.0
  %1635 = vmatpush1.msra.mxu0 0.0
  %1636 = vmatprep.subr.mxu0 0.0
  %1637 = vmatpush1.msra.mxu0 0.0
  %1638 = vmatprep.subr.mxu0 0.0
  %1639 = vmatpush1.msra.mxu0 0.0
  %1640 = vmatprep.subr.mxu0 0.0
  %1641 = vmatpush1.msra.mxu0 0.0
  %1642 = vmatprep.subr.mxu0 0.0
  %1643 = vmatpush1.msra.mxu0 0.0
  %1644 = vmatprep.subr.mxu0 0.0
  %1645 = vmatpush1.msra.mxu0 0.0
  %1646 = vmatprep.subr.mxu0 0.0
  %1647 = vmatpush1.msra.mxu0 0.0
  %1648 = vmatprep.subr.mxu0 0.0
  %1649 = vmatpush1.msra.mxu0 0.0
  %1650 = vmatprep.subr.mxu0 0.0
  %1651 = vmatpush1.msra.mxu0 0.0
  %1652 = vmatprep.subr.mxu0 0.0
  %1653 = vmatpush1.msra.mxu0 0.0
  %1654 = vmatprep.subr.mxu0 0.0
  %1655 = vmatpush1.msra.mxu0 0.0
  %1656 = vmatprep.subr.mxu0 0.0
  %1657 = vmatpush1.msra.mxu0 0.0
  %1658 = vmatprep.subr.mxu0 0.0
  %1659 = vmatpush1.msra.mxu0 0.0
  %1660 = vmatprep.subr.mxu0 0.0
  %1661 = vmatpush1.msra.mxu0 0.0
  %1662 = vmatprep.mubr.f32.mxu0 0.0
  %1663 = vmatmul.mubr.f32.gmra.mrb[0].mxu0 %v1549
  %v1664 = vpop.f32.mrb[0].mxu0
  %v1665 = vadd.f32 0.0, %v1664
  %v1666 = vpop.f32.mrb[0].mxu0
  %1667 = vmatprep.mubr.f32.mxu0 0.0
  %1668 = vmatmul.mubr.f32.gmra.mrb[0].mxu0 %v1550
  %v1669 = vpop.f32.mrb[0].mxu0
  %v1670 = vadd.f32 0.0, %v1669
  %v1671 = vpop.f32.mrb[0].mxu0
  %1672 = vmatprep.mubr.f32.mxu0 0.0
  %1673 = vmatmul.mubr.f32.gmra.mrb[0].mxu0 %v1551
  %v1674 = vpop.f32.mrb[0].mxu0
  %v1675 = vadd.f32 0.0, %v1674
  %v1676 = vpop.f32.mrb[0].mxu0
  %1677 = vmatprep.mubr.f32.mxu0 0.0
  %1678 = vmatmul.mubr.f32.gmra.mrb[0].mxu0 %v1552
  %v1679 = vpop.f32.mrb[0].mxu0
  %v1680 = vadd.f32 0.0, %v1679
  %v1681 = vpop.f32.mrb[0].mxu0
  %1682 = vmatprep.mubr.f32.mxu0 0.0
  %1683 = vmatmul.mubr.f32.gmra.mrb[0].mxu0 %v1553
  %v1684 = vpop.f32.mrb[0].mxu0
  %v1685 = vadd.f32 0.0, %v1684
  %v1686 = vpop.f32.mrb[0].mxu0
  %1687 = vmatprep.mubr.f32.mxu0 0.0
  %1688 = vmatmul.mubr.f32.gmra.mrb[0].mxu0 %v1554
  %v1689 = vpop.f32.mrb[0].mxu0
  %v1690 = vadd.f32 0.0, %v1689
  %v1691 = vpop.f32.mrb[0].mxu0
  %1692 = vmatprep.mubr.f32.mxu0 0.0
  %1693 = vmatmul.mubr.f32.gmra.mrb[0].mxu0 %v1555
  %v1694 = vpop.f32.mrb[0].mxu0
  %v1695 = vadd.f32 0.0, %v1694
  %v1696 = vpop.f32.mrb[0].mxu0
  %1697 = vmatprep.mubr.f32.mxu0 0.0
  %1698 = vmatmul.mubr.f32.gmra.mrb[0].mxu0 %v1556
  %v1699 = vpop.f32.mrb[0].mxu0
  %v1700 = vadd.f32 0.0, %v1699
  %v1701 = vpop.f32.mrb[0].mxu0
  %1702 = vmatprep.mubr.f32.mxu0 0.0
  %1703 = vmatmul.mubr.f32.gmra.mrb[0].mxu0 %v1557
  %v1704 = vpop.f32.mrb[0].mxu0
  %v1705 = vadd.f32 0.0, %v1704
  %v1706 = vpop.f32.mrb[0].mxu0
  %1707 = vmatprep.mubr.f32.mxu0 0.0
  %1708 = vmatmul.mubr.f32.gmra.mrb[0].mxu0 %v1558
  %v1709 = vpop.f32.mrb[0].mxu0
  %v1710 = vadd.f32 0.0, %v1709
  %v1711 = vpop.f32.mrb[0].mxu0
  %1712 = vmatprep.mubr.f32.mxu0 0.0
  %1713 = vmatmul.mubr.f32.gmra.mrb[0].mxu0 %v1559
  %v1714 = vpop.f32.mrb[0].mxu0
  %v1715 = vadd.f32 0.0, %v1714
  %v1716 = vpop.f32.mrb[0].mxu0
  %1717 = vmatprep.mubr.f32.mxu0 0.0
  %1718 = vmatmul.mubr.f32.gmra.mrb[0].mxu0 %v1560
  %v1719 = vpop.f32.mrb[0].mxu0
  %v1720 = vadd.f32 0.0, %v1719
  %v1721 = vpop.f32.mrb[0].mxu0
  %1722 = vmatprep.mubr.f32.mxu0 0.0
  %1723 = vmatmul.mubr.f32.gmra.mrb[0].mxu0 %v1561
  %v1724 = vpop.f32.mrb[0].mxu0
  %v1725 = vadd.f32 0.0, %v1724
  %v1726 = vpop.f32.mrb[0].mxu0
  %1727 = vmatprep.mubr.f32.mxu0 0.0
  %1728 = vmatmul.mubr.f32.gmra.mrb[0].mxu0 %v1562
  %v1729 = vpop.f32.mrb[0].mxu0
  %v1730 = vadd.f32 0.0, %v1729
  %v1731 = vpop.f32.mrb[0].mxu0
  %1732 = vmatprep.mubr.f32.mxu0 0.0
  %1733 = vmatmul.mubr.f32.gmra.mrb[0].mxu0 %v1563
  %v1734 = vpop.f32.mrb[0].mxu0
  %v1735 = vadd.f32 0.0, %v1734
  %v1736 = vpop.f32.mrb[0].mxu0
  %1737 = vmatprep.mubr.f32.mxu0 0.0
  %1738 = vmatmul.mubr.f32.gmra.mrb[0].mxu0 %v1564
  %v1739 = vpop.f32.mrb[0].mxu0
  %v1740 = vadd.f32 0.0, %v1739
  %v1741 = vpop.f32.mrb[0].mxu0
  %1742 = vdwg.mxu0
  %v1744 = vlaneseq
  %v1745 = vshrl.u32 %v1744, 7
  %v1746 = vsub.s32 0, %v1745
  %v1747 = vrot.slane %v1597, %v1746
  %1749 = vmatprep.subr.mxu0 0.0
  %1750 = vmatpush1.msra.mxu0 %v1565
  %1751 = vmatprep.subr.mxu0 0.0
  %1752 = vmatpush1.msra.mxu0 %v1566
  %1753 = vmatprep.subr.mxu0 0.0
  %1754 = vmatpush1.msra.mxu0 %v1567
  %1755 = vmatprep.subr.mxu0 0.0
  %1756 = vmatpush1.msra.mxu0 %v1568
  %1757 = vmatprep.subr.mxu0 0.0
  %1758 = vmatpush1.msra.mxu0 %v1569
  %1759 = vmatprep.subr.mxu0 0.0
  %1760 = vmatpush1.msra.mxu0 %v1570
  %1761 = vmatprep.subr.mxu0 0.0
  %1762 = vmatpush1.msra.mxu0 %v1571
  %1763 = vmatprep.subr.mxu0 0.0
  %1764 = vmatpush1.msra.mxu0 %v1572
  %1765 = vmatprep.subr.mxu0 0.0
  %1766 = vmatpush1.msra.mxu0 %v1573
  %1767 = vmatprep.subr.mxu0 0.0
  %1768 = vmatpush1.msra.mxu0 %v1574
  %1769 = vmatprep.subr.mxu0 0.0
  %1770 = vmatpush1.msra.mxu0 %v1575
  %1771 = vmatprep.subr.mxu0 0.0
  %1772 = vmatpush1.msra.mxu0 %v1576
  %1773 = vmatprep.subr.mxu0 0.0
  %1774 = vmatpush1.msra.mxu0 %v1577
  %1775 = vmatprep.subr.mxu0 0.0
  %1776 = vmatpush1.msra.mxu0 %v1578
  %1777 = vmatprep.subr.mxu0 0.0
  %1778 = vmatpush1.msra.mxu0 %v1579
  %1779 = vmatprep.subr.mxu0 0.0
  %1780 = vmatpush1.msra.mxu0 %v1580
  %1781 = vmatprep.subr.mxu0 0.0
  %1782 = vmatpush1.msra.mxu0 %v1581
  %1783 = vmatprep.subr.mxu0 0.0
  %1784 = vmatpush1.msra.mxu0 %v1582
  %1785 = vmatprep.subr.mxu0 0.0
  %1786 = vmatpush1.msra.mxu0 %v1583
  %1787 = vmatprep.subr.mxu0 0.0
  %1788 = vmatpush1.msra.mxu0 %v1584
  %1789 = vmatprep.subr.mxu0 0.0
  %1790 = vmatpush1.msra.mxu0 %v1585
  %1791 = vmatprep.subr.mxu0 0.0
  %1792 = vmatpush1.msra.mxu0 %v1586
  %1793 = vmatprep.subr.mxu0 0.0
  %1794 = vmatpush1.msra.mxu0 %v1587
  %1795 = vmatprep.subr.mxu0 0.0
  %1796 = vmatpush1.msra.mxu0 %v1588
  %1797 = vmatprep.subr.mxu0 0.0
  %1798 = vmatpush1.msra.mxu0 %v1589
  %1799 = vmatprep.subr.mxu0 0.0
  %1800 = vmatpush1.msra.mxu0 %v1590
  %1801 = vmatprep.subr.mxu0 0.0
  %1802 = vmatpush1.msra.mxu0 %v1591
  %1803 = vmatprep.subr.mxu0 0.0
  %1804 = vmatpush1.msra.mxu0 %v1592
  %1805 = vmatprep.subr.mxu0 0.0
  %1806 = vmatpush1.msra.mxu0 %v1593
  %1807 = vmatprep.subr.mxu0 0.0
  %1808 = vmatpush1.msra.mxu0 %v1594
  %1809 = vmatprep.subr.mxu0 0.0
  %1810 = vmatpush1.msra.mxu0 %v1595
  %1811 = vmatprep.subr.mxu0 0.0
  %1812 = vmatpush1.msra.mxu0 %v1596
  %1813 = vmatprep.mubr.f32.mxu0 %v924
  %1814 = vmatmul.mubr.f32.gmra.mrb[0].mxu0 %v1665
  %v1815 = vpop.f32.mrb[0].mxu0
  %v1816 = vadd.f32 %v1747, %v1815
  %v1817 = vpop.f32.mrb[0].mxu0
  %1818 = vmatprep.mubr.f32.mxu0 %v925
  %1819 = vmatmul.mubr.f32.gmra.mrb[0].mxu0 %v1670
  %v1820 = vpop.f32.mrb[0].mxu0
  %v1821 = vadd.f32 %v1747, %v1820
  %v1822 = vpop.f32.mrb[0].mxu0
  %1823 = vmatprep.mubr.f32.mxu0 %v926
  %1824 = vmatmul.mubr.f32.gmra.mrb[0].mxu0 %v1675
  %v1825 = vpop.f32.mrb[0].mxu0
  %v1826 = vadd.f32 %v1747, %v1825
  %v1827 = vpop.f32.mrb[0].mxu0
  %1828 = vmatprep.mubr.f32.mxu0 %v927
  %1829 = vmatmul.mubr.f32.gmra.mrb[0].mxu0 %v1680
  %v1830 = vpop.f32.mrb[0].mxu0
  %v1831 = vadd.f32 %v1747, %v1830
  %v1832 = vpop.f32.mrb[0].mxu0
  %1833 = vmatprep.mubr.f32.mxu0 %v928
  %1834 = vmatmul.mubr.f32.gmra.mrb[0].mxu0 %v1685
  %v1835 = vpop.f32.mrb[0].mxu0
  %v1836 = vadd.f32 %v1747, %v1835
  %v1837 = vpop.f32.mrb[0].mxu0
  %1838 = vmatprep.mubr.f32.mxu0 %v929
  %1839 = vmatmul.mubr.f32.gmra.mrb[0].mxu0 %v1690
  %v1840 = vpop.f32.mrb[0].mxu0
  %v1841 = vadd.f32 %v1747, %v1840
  %v1842 = vpop.f32.mrb[0].mxu0
  %1843 = vmatprep.mubr.f32.mxu0 %v930
  %1844 = vmatmul.mubr.f32.gmra.mrb[0].mxu0 %v1695
  %v1845 = vpop.f32.mrb[0].mxu0
  %v1846 = vadd.f32 %v1747, %v1845
  %v1847 = vpop.f32.mrb[0].mxu0
  %1848 = vmatprep.mubr.f32.mxu0 %v931
  %1849 = vmatmul.mubr.f32.gmra.mrb[0].mxu0 %v1700
  %v1850 = vpop.f32.mrb[0].mxu0
  %v1851 = vadd.f32 %v1747, %v1850
  %v1852 = vpop.f32.mrb[0].mxu0
  %1853 = vmatprep.mubr.f32.mxu0 %v932
  %1854 = vmatmul.mubr.f32.gmra.mrb[0].mxu0 %v1705
  %v1855 = vpop.f32.mrb[0].mxu0
  %v1856 = vadd.f32 %v1747, %v1855
  %v1857 = vpop.f32.mrb[0].mxu0
  %1858 = vmatprep.mubr.f32.mxu0 %v933
  %1859 = vmatmul.mubr.f32.gmra.mrb[0].mxu0 %v1710
  %v1860 = vpop.f32.mrb[0].mxu0
  %v1861 = vadd.f32 %v1747, %v1860
  %v1862 = vpop.f32.mrb[0].mxu0
  %1863 = vmatprep.mubr.f32.mxu0 %v934
  %1864 = vmatmul.mubr.f32.gmra.mrb[0].mxu0 %v1715
  %v1865 = vpop.f32.mrb[0].mxu0
  %v1866 = vadd.f32 %v1747, %v1865
  %v1867 = vpop.f32.mrb[0].mxu0
  %1868 = vmatprep.mubr.f32.mxu0 %v935
  %1869 = vmatmul.mubr.f32.gmra.mrb[0].mxu0 %v1720
  %v1870 = vpop.f32.mrb[0].mxu0
  %v1871 = vadd.f32 %v1747, %v1870
  %v1872 = vpop.f32.mrb[0].mxu0
  %1873 = vmatprep.mubr.f32.mxu0 %v936
  %1874 = vmatmul.mubr.f32.gmra.mrb[0].mxu0 %v1725
  %v1875 = vpop.f32.mrb[0].mxu0
  %v1876 = vadd.f32 %v1747, %v1875
  %v1877 = vpop.f32.mrb[0].mxu0
  %1878 = vmatprep.mubr.f32.mxu0 %v937
  %1879 = vmatmul.mubr.f32.gmra.mrb[0].mxu0 %v1730
  %v1880 = vpop.f32.mrb[0].mxu0
  %v1881 = vadd.f32 %v1747, %v1880
  %v1882 = vpop.f32.mrb[0].mxu0
  %1883 = vmatprep.mubr.f32.mxu0 %v938
  %1884 = vmatmul.mubr.f32.gmra.mrb[0].mxu0 %v1735
  %v1885 = vpop.f32.mrb[0].mxu0
  %v1886 = vadd.f32 %v1747, %v1885
  %v1887 = vpop.f32.mrb[0].mxu0
  %1888 = vmatprep.mubr.f32.mxu0 %v939
  %1889 = vmatmul.mubr.f32.gmra.mrb[0].mxu0 %v1740
  %v1890 = vpop.f32.mrb[0].mxu0
  %v1891 = vadd.f32 %v1747, %v1890
  %v1892 = vpop.f32.mrb[0].mxu0
  %1893 = vdwg.mxu0
  %v1894 = vmax.f32 %v1816, 0.0
  %v1895 = vmax.f32 %v1821, 0.0
  %v1896 = vmax.f32 %v1826, 0.0
  %v1897 = vmax.f32 %v1831, 0.0
  %v1898 = vmax.f32 %v1836, 0.0
  %v1899 = vmax.f32 %v1841, 0.0
  %v1900 = vmax.f32 %v1846, 0.0
  %v1901 = vmax.f32 %v1851, 0.0
  %v1902 = vmax.f32 %v1856, 0.0
  %v1903 = vmax.f32 %v1861, 0.0
  %v1904 = vmax.f32 %v1866, 0.0
  %v1905 = vmax.f32 %v1871, 0.0
  %v1906 = vmax.f32 %v1876, 0.0
  %v1907 = vmax.f32 %v1881, 0.0
  %v1908 = vmax.f32 %v1886, 0.0
  %v1909 = vmax.f32 %v1891, 0.0
  %v1910 = vld [vmem:[%s14] sm:$0xff]
  %v1911 = vld [vmem:[%s14 + $0x8] sm:$0xff]
  %v1912 = vld [vmem:[%s14 + $0x10] sm:$0xff]
  %v1913 = vld [vmem:[%s14 + $0x18] sm:$0xff]
  %v1914 = vld [vmem:[%s14 + $0x20] sm:$0xff]
  %v1915 = vld [vmem:[%s14 + $0x28] sm:$0xff]
  %v1916 = vld [vmem:[%s14 + $0x30] sm:$0xff]
  %v1917 = vld [vmem:[%s14 + $0x38] sm:$0xff]
  %v1918 = vld [vmem:[%s14 + $0x40] sm:$0xff]
  %v1919 = vld [vmem:[%s14 + $0x48] sm:$0xff]
  %v1920 = vld [vmem:[%s14 + $0x50] sm:$0xff]
  %v1921 = vld [vmem:[%s14 + $0x58] sm:$0xff]
  %v1922 = vld [vmem:[%s14 + $0x60] sm:$0xff]
  %v1923 = vld [vmem:[%s14 + $0x68] sm:$0xff]
  %v1924 = vld [vmem:[%s14 + $0x70] sm:$0xff]
  %v1925 = vld [vmem:[%s14 + $0x78] sm:$0xff]
  %v1926 = vld [vmem:[%s14 + $0x80] sm:$0xff]
  %v1927 = vld [vmem:[%s14 + $0x88] sm:$0xff]
  %v1928 = vld [vmem:[%s14 + $0x90] sm:$0xff]
  %v1929 = vld [vmem:[%s14 + $0x98] sm:$0xff]
  %v1930 = vld [vmem:[%s14 + $0xa0] sm:$0xff]
  %v1931 = vld [vmem:[%s14 + $0xa8] sm:$0xff]
  %v1932 = vld [vmem:[%s14 + $0xb0] sm:$0xff]
  %v1933 = vld [vmem:[%s14 + $0xb8] sm:$0xff]
  %v1934 = vld [vmem:[%s14 + $0xc0] sm:$0xff]
  %v1935 = vld [vmem:[%s14 + $0xc8] sm:$0xff]
  %v1936 = vld [vmem:[%s14 + $0xd0] sm:$0xff]
  %v1937 = vld [vmem:[%s14 + $0xd8] sm:$0xff]
  %v1938 = vld [vmem:[%s14 + $0xe0] sm:$0xff]
  %v1939 = vld [vmem:[%s14 + $0xe8] sm:$0xff]
  %v1940 = vld [vmem:[%s14 + $0xf0] sm:$0xff]
  %v1941 = vld [vmem:[%s14 + $0xf8] sm:$0xff]
  %v1942 = vld [vmem:[%s15] sm:$0x1]
  %1943 = vmatprep.subr.mxu0 0.0
  %1944 = vmatpush1.msra.mxu0 %v1894
  %1945 = vmatprep.subr.mxu0 0.0
  %1946 = vmatpush1.msra.mxu0 %v1895
  %1947 = vmatprep.subr.mxu0 0.0
  %1948 = vmatpush1.msra.mxu0 %v1896
  %1949 = vmatprep.subr.mxu0 0.0
  %1950 = vmatpush1.msra.mxu0 %v1897
  %1951 = vmatprep.subr.mxu0 0.0
  %1952 = vmatpush1.msra.mxu0 %v1898
  %1953 = vmatprep.subr.mxu0 0.0
  %1954 = vmatpush1.msra.mxu0 %v1899
  %1955 = vmatprep.subr.mxu0 0.0
  %1956 = vmatpush1.msra.mxu0 %v1900
  %1957 = vmatprep.subr.mxu0 0.0
  %1958 = vmatpush1.msra.mxu0 %v1901
  %1959 = vmatprep.subr.mxu0 0.0
  %1960 = vmatpush1.msra.mxu0 %v1902
  %1961 = vmatprep.subr.mxu0 0.0
  %1962 = vmatpush1.msra.mxu0 %v1903
  %1963 = vmatprep.subr.mxu0 0.0
  %1964 = vmatpush1.msra.mxu0 %v1904
  %1965 = vmatprep.subr.mxu0 0.0
  %1966 = vmatpush1.msra.mxu0 %v1905
  %1967 = vmatprep.subr.mxu0 0.0
  %1968 = vmatpush1.msra.mxu0 %v1906
  %1969 = vmatprep.subr.mxu0 0.0
  %1970 = vmatpush1.msra.mxu0 %v1907
  %1971 = vmatprep.subr.mxu0 0.0
  %1972 = vmatpush1.msra.mxu0 %v1908
  %1973 = vmatprep.subr.mxu0 0.0
  %1974 = vmatpush1.msra.mxu0 %v1909
  %1975 = vmatprep.subr.mxu0 0.0
  %1976 = vmatpush1.msra.mxu0 0.0
  %1977 = vmatprep.subr.mxu0 0.0
  %1978 = vmatpush1.msra.mxu0 0.0
  %1979 = vmatprep.subr.mxu0 0.0
  %1980 = vmatpush1.msra.mxu0 0.0
  %1981 = vmatprep.subr.mxu0 0.0
  %1982 = vmatpush1.msra.mxu0 0.0
  %1983 = vmatprep.subr.mxu0 0.0
  %1984 = vmatpush1.msra.mxu0 0.0
  %1985 = vmatprep.subr.mxu0 0.0
  %1986 = vmatpush1.msra.mxu0 0.0
  %1987 = vmatprep.subr.mxu0 0.0
  %1988 = vmatpush1.msra.mxu0 0.0
  %1989 = vmatprep.subr.mxu0 0.0
  %1990 = vmatpush1.msra.mxu0 0.0
  %1991 = vmatprep.subr.mxu0 0.0
  %1992 = vmatpush1.msra.mxu0 0.0
  %1993 = vmatprep.subr.mxu0 0.0
  %1994 = vmatpush1.msra.mxu0 0.0
  %1995 = vmatprep.subr.mxu0 0.0
  %1996 = vmatpush1.msra.mxu0 0.0
  %1997 = vmatprep.subr.mxu0 0.0
  %1998 = vmatpush1.msra.mxu0 0.0
  %1999 = vmatprep.subr.mxu0 0.0
  %2000 = vmatpush1.msra.mxu0 0.0
  %2001 = vmatprep.subr.mxu0 0.0
  %2002 = vmatpush1.msra.mxu0 0.0
  %2003 = vmatprep.subr.mxu0 0.0
  %2004 = vmatpush1.msra.mxu0 0.0
  %2005 = vmatprep.subr.mxu0 0.0
  %2006 = vmatpush1.msra.mxu0 0.0
  %2007 = vmatprep.mubr.f32.mxu0 0.0
  %2008 = vmatmul.mubr.f32.gmra.mrb[0].mxu0 %v1188
  %v2009 = vpop.f32.mrb[0].mxu0
  %v2010 = vadd.f32 0.0, %v2009
  %v2011 = vpop.f32.mrb[0].mxu0
  %2012 = vmatprep.mubr.f32.mxu0 0.0
  %2013 = vmatmul.mubr.f32.gmra.mrb[0].mxu0 %v1189
  %v2014 = vpop.f32.mrb[0].mxu0
  %v2015 = vadd.f32 0.0, %v2014
  %v2016 = vpop.f32.mrb[0].mxu0
  %2017 = vmatprep.mubr.f32.mxu0 0.0
  %2018 = vmatmul.mubr.f32.gmra.mrb[0].mxu0 %v1190
  %v2019 = vpop.f32.mrb[0].mxu0
  %v2020 = vadd.f32 0.0, %v2019
  %v2021 = vpop.f32.mrb[0].mxu0
  %2022 = vmatprep.mubr.f32.mxu0 0.0
  %2023 = vmatmul.mubr.f32.gmra.mrb[0].mxu0 %v1191
  %v2024 = vpop.f32.mrb[0].mxu0
  %v2025 = vadd.f32 0.0, %v2024
  %v2026 = vpop.f32.mrb[0].mxu0
  %2027 = vmatprep.mubr.f32.mxu0 0.0
  %2028 = vmatmul.mubr.f32.gmra.mrb[0].mxu0 %v1192
  %v2029 = vpop.f32.mrb[0].mxu0
  %v2030 = vadd.f32 0.0, %v2029
  %v2031 = vpop.f32.mrb[0].mxu0
  %2032 = vmatprep.mubr.f32.mxu0 0.0
  %2033 = vmatmul.mubr.f32.gmra.mrb[0].mxu0 %v1193
  %v2034 = vpop.f32.mrb[0].mxu0
  %v2035 = vadd.f32 0.0, %v2034
  %v2036 = vpop.f32.mrb[0].mxu0
  %2037 = vmatprep.mubr.f32.mxu0 0.0
  %2038 = vmatmul.mubr.f32.gmra.mrb[0].mxu0 %v1194
  %v2039 = vpop.f32.mrb[0].mxu0
  %v2040 = vadd.f32 0.0, %v2039
  %v2041 = vpop.f32.mrb[0].mxu0
  %2042 = vmatprep.mubr.f32.mxu0 0.0
  %2043 = vmatmul.mubr.f32.gmra.mrb[0].mxu0 %v1195
  %v2044 = vpop.f32.mrb[0].mxu0
  %v2045 = vadd.f32 0.0, %v2044
  %v2046 = vpop.f32.mrb[0].mxu0
  %2047 = vmatprep.mubr.f32.mxu0 0.0
  %2048 = vmatmul.mubr.f32.gmra.mrb[0].mxu0 %v1196
  %v2049 = vpop.f32.mrb[0].mxu0
  %v2050 = vadd.f32 0.0, %v2049
  %v2051 = vpop.f32.mrb[0].mxu0
  %2052 = vmatprep.mubr.f32.mxu0 0.0
  %2053 = vmatmul.mubr.f32.gmra.mrb[0].mxu0 %v1197
  %v2054 = vpop.f32.mrb[0].mxu0
  %v2055 = vadd.f32 0.0, %v2054
  %v2056 = vpop.f32.mrb[0].mxu0
  %2057 = vmatprep.mubr.f32.mxu0 0.0
  %2058 = vmatmul.mubr.f32.gmra.mrb[0].mxu0 %v1198
  %v2059 = vpop.f32.mrb[0].mxu0
  %v2060 = vadd.f32 0.0, %v2059
  %v2061 = vpop.f32.mrb[0].mxu0
  %2062 = vmatprep.mubr.f32.mxu0 0.0
  %2063 = vmatmul.mubr.f32.gmra.mrb[0].mxu0 %v1199
  %v2064 = vpop.f32.mrb[0].mxu0
  %v2065 = vadd.f32 0.0, %v2064
  %v2066 = vpop.f32.mrb[0].mxu0
  %2067 = vmatprep.mubr.f32.mxu0 0.0
  %2068 = vmatmul.mubr.f32.gmra.mrb[0].mxu0 %v1200
  %v2069 = vpop.f32.mrb[0].mxu0
  %v2070 = vadd.f32 0.0, %v2069
  %v2071 = vpop.f32.mrb[0].mxu0
  %2072 = vmatprep.mubr.f32.mxu0 0.0
  %2073 = vmatmul.mubr.f32.gmra.mrb[0].mxu0 %v1201
  %v2074 = vpop.f32.mrb[0].mxu0
  %v2075 = vadd.f32 0.0, %v2074
  %v2076 = vpop.f32.mrb[0].mxu0
  %2077 = vmatprep.mubr.f32.mxu0 0.0
  %2078 = vmatmul.mubr.f32.gmra.mrb[0].mxu0 %v1202
  %v2079 = vpop.f32.mrb[0].mxu0
  %v2080 = vadd.f32 0.0, %v2079
  %v2081 = vpop.f32.mrb[0].mxu0
  %2082 = vmatprep.mubr.f32.mxu0 0.0
  %2083 = vmatmul.mubr.f32.gmra.mrb[0].mxu0 %v1203
  %v2084 = vpop.f32.mrb[0].mxu0
  %v2085 = vadd.f32 0.0, %v2084
  %v2086 = vpop.f32.mrb[0].mxu0
  %2087 = vdwg.mxu0
  %v2089 = vlaneseq
  %v2090 = vshrl.u32 %v2089, 7
  %v2091 = vsub.s32 0, %v2090
  %v2092 = vrot.slane %v1942, %v2091
  %2094 = vmatprep.subr.mxu0 0.0
  %2095 = vmatpush1.msra.mxu0 %v1910
  %2096 = vmatprep.subr.mxu0 0.0
  %2097 = vmatpush1.msra.mxu0 %v1911
  %2098 = vmatprep.subr.mxu0 0.0
  %2099 = vmatpush1.msra.mxu0 %v1912
  %2100 = vmatprep.subr.mxu0 0.0
  %2101 = vmatpush1.msra.mxu0 %v1913
  %2102 = vmatprep.subr.mxu0 0.0
  %2103 = vmatpush1.msra.mxu0 %v1914
  %2104 = vmatprep.subr.mxu0 0.0
  %2105 = vmatpush1.msra.mxu0 %v1915
  %2106 = vmatprep.subr.mxu0 0.0
  %2107 = vmatpush1.msra.mxu0 %v1916
  %2108 = vmatprep.subr.mxu0 0.0
  %2109 = vmatpush1.msra.mxu0 %v1917
  %2110 = vmatprep.subr.mxu0 0.0
  %2111 = vmatpush1.msra.mxu0 %v1918
  %2112 = vmatprep.subr.mxu0 0.0
  %2113 = vmatpush1.msra.mxu0 %v1919
  %2114 = vmatprep.subr.mxu0 0.0
  %2115 = vmatpush1.msra.mxu0 %v1920
  %2116 = vmatprep.subr.mxu0 0.0
  %2117 = vmatpush1.msra.mxu0 %v1921
  %2118 = vmatprep.subr.mxu0 0.0
  %2119 = vmatpush1.msra.mxu0 %v1922
  %2120 = vmatprep.subr.mxu0 0.0
  %2121 = vmatpush1.msra.mxu0 %v1923
  %2122 = vmatprep.subr.mxu0 0.0
  %2123 = vmatpush1.msra.mxu0 %v1924
  %2124 = vmatprep.subr.mxu0 0.0
  %2125 = vmatpush1.msra.mxu0 %v1925
  %2126 = vmatprep.subr.mxu0 0.0
  %2127 = vmatpush1.msra.mxu0 %v1926
  %2128 = vmatprep.subr.mxu0 0.0
  %2129 = vmatpush1.msra.mxu0 %v1927
  %2130 = vmatprep.subr.mxu0 0.0
  %2131 = vmatpush1.msra.mxu0 %v1928
  %2132 = vmatprep.subr.mxu0 0.0
  %2133 = vmatpush1.msra.mxu0 %v1929
  %2134 = vmatprep.subr.mxu0 0.0
  %2135 = vmatpush1.msra.mxu0 %v1930
  %2136 = vmatprep.subr.mxu0 0.0
  %2137 = vmatpush1.msra.mxu0 %v1931
  %2138 = vmatprep.subr.mxu0 0.0
  %2139 = vmatpush1.msra.mxu0 %v1932
  %2140 = vmatprep.subr.mxu0 0.0
  %2141 = vmatpush1.msra.mxu0 %v1933
  %2142 = vmatprep.subr.mxu0 0.0
  %2143 = vmatpush1.msra.mxu0 %v1934
  %2144 = vmatprep.subr.mxu0 0.0
  %2145 = vmatpush1.msra.mxu0 %v1935
  %2146 = vmatprep.subr.mxu0 0.0
  %2147 = vmatpush1.msra.mxu0 %v1936
  %2148 = vmatprep.subr.mxu0 0.0
  %2149 = vmatpush1.msra.mxu0 %v1937
  %2150 = vmatprep.subr.mxu0 0.0
  %2151 = vmatpush1.msra.mxu0 %v1938
  %2152 = vmatprep.subr.mxu0 0.0
  %2153 = vmatpush1.msra.mxu0 %v1939
  %2154 = vmatprep.subr.mxu0 0.0
  %2155 = vmatpush1.msra.mxu0 %v1940
  %2156 = vmatprep.subr.mxu0 0.0
  %2157 = vmatpush1.msra.mxu0 %v1941
  %2158 = vmatprep.mubr.f32.mxu0 %v1533
  %2159 = vmatmul.mubr.f32.gmra.mrb[0].mxu0 %v2010
  %v2160 = vpop.f32.mrb[0].mxu0
  %v2161 = vadd.f32 %v2092, %v2160
  %v2162 = vpop.f32.mrb[0].mxu0
  %2163 = vmatprep.mubr.f32.mxu0 %v1534
  %2164 = vmatmul.mubr.f32.gmra.mrb[0].mxu0 %v2015
  %v2165 = vpop.f32.mrb[0].mxu0
  %v2166 = vadd.f32 %v2092, %v2165
  %v2167 = vpop.f32.mrb[0].mxu0
  %2168 = vmatprep.mubr.f32.mxu0 %v1535
  %2169 = vmatmul.mubr.f32.gmra.mrb[0].mxu0 %v2020
  %v2170 = vpop.f32.mrb[0].mxu0
  %v2171 = vadd.f32 %v2092, %v2170
  %v2172 = vpop.f32.mrb[0].mxu0
  %2173 = vmatprep.mubr.f32.mxu0 %v1536
  %2174 = vmatmul.mubr.f32.gmra.mrb[0].mxu0 %v2025
  %v2175 = vpop.f32.mrb[0].mxu0
  %v2176 = vadd.f32 %v2092, %v2175
  %v2177 = vpop.f32.mrb[0].mxu0
  %2178 = vmatprep.mubr.f32.mxu0 %v1537
  %2179 = vmatmul.mubr.f32.gmra.mrb[0].mxu0 %v2030
  %v2180 = vpop.f32.mrb[0].mxu0
  %v2181 = vadd.f32 %v2092, %v2180
  %v2182 = vpop.f32.mrb[0].mxu0
  %2183 = vmatprep.mubr.f32.mxu0 %v1538
  %2184 = vmatmul.mubr.f32.gmra.mrb[0].mxu0 %v2035
  %v2185 = vpop.f32.mrb[0].mxu0
  %v2186 = vadd.f32 %v2092, %v2185
  %v2187 = vpop.f32.mrb[0].mxu0
  %2188 = vmatprep.mubr.f32.mxu0 %v1539
  %2189 = vmatmul.mubr.f32.gmra.mrb[0].mxu0 %v2040
  %v2190 = vpop.f32.mrb[0].mxu0
  %v2191 = vadd.f32 %v2092, %v2190
  %v2192 = vpop.f32.mrb[0].mxu0
  %2193 = vmatprep.mubr.f32.mxu0 %v1540
  %2194 = vmatmul.mubr.f32.gmra.mrb[0].mxu0 %v2045
  %v2195 = vpop.f32.mrb[0].mxu0
  %v2196 = vadd.f32 %v2092, %v2195
  %v2197 = vpop.f32.mrb[0].mxu0
  %2198 = vmatprep.mubr.f32.mxu0 %v1541
  %2199 = vmatmul.mubr.f32.gmra.mrb[0].mxu0 %v2050
  %v2200 = vpop.f32.mrb[0].mxu0
  %v2201 = vadd.f32 %v2092, %v2200
  %v2202 = vpop.f32.mrb[0].mxu0
  %2203 = vmatprep.mubr.f32.mxu0 %v1542
  %2204 = vmatmul.mubr.f32.gmra.mrb[0].mxu0 %v2055
  %v2205 = vpop.f32.mrb[0].mxu0
  %v2206 = vadd.f32 %v2092, %v2205
  %v2207 = vpop.f32.mrb[0].mxu0
  %2208 = vmatprep.mubr.f32.mxu0 %v1543
  %2209 = vmatmul.mubr.f32.gmra.mrb[0].mxu0 %v2060
  %v2210 = vpop.f32.mrb[0].mxu0
  %v2211 = vadd.f32 %v2092, %v2210
  %v2212 = vpop.f32.mrb[0].mxu0
  %2213 = vmatprep.mubr.f32.mxu0 %v1544
  %2214 = vmatmul.mubr.f32.gmra.mrb[0].mxu0 %v2065
  %v2215 = vpop.f32.mrb[0].mxu0
  %v2216 = vadd.f32 %v2092, %v2215
  %v2217 = vpop.f32.mrb[0].mxu0
  %2218 = vmatprep.mubr.f32.mxu0 %v1545
  %2219 = vmatmul.mubr.f32.gmra.mrb[0].mxu0 %v2070
  %v2220 = vpop.f32.mrb[0].mxu0
  %v2221 = vadd.f32 %v2092, %v2220
  %v2222 = vpop.f32.mrb[0].mxu0
  %2223 = vmatprep.mubr.f32.mxu0 %v1546
  %2224 = vmatmul.mubr.f32.gmra.mrb[0].mxu0 %v2075
  %v2225 = vpop.f32.mrb[0].mxu0
  %v2226 = vadd.f32 %v2092, %v2225
  %v2227 = vpop.f32.mrb[0].mxu0
  %2228 = vmatprep.mubr.f32.mxu0 %v1547
  %2229 = vmatmul.mubr.f32.gmra.mrb[0].mxu0 %v2080
  %v2230 = vpop.f32.mrb[0].mxu0
  %v2231 = vadd.f32 %v2092, %v2230
  %v2232 = vpop.f32.mrb[0].mxu0
  %2233 = vmatprep.mubr.f32.mxu0 %v1548
  %2234 = vmatmul.mubr.f32.gmra.mrb[0].mxu0 %v2085
  %v2235 = vpop.f32.mrb[0].mxu0
  %v2236 = vadd.f32 %v2092, %v2235
  %v2237 = vpop.f32.mrb[0].mxu0
  %2238 = vdwg.mxu0
  %v2239 = vld [vmem:[%s16] sm:$0xff]
  %v2240 = vld [vmem:[%s16 + $0x8] sm:$0xff]
  %v2241 = vld [vmem:[%s16 + $0x10] sm:$0xff]
  %v2242 = vld [vmem:[%s16 + $0x18] sm:$0xff]
  %v2243 = vld [vmem:[%s16 + $0x20] sm:$0xff]
  %v2244 = vld [vmem:[%s16 + $0x28] sm:$0xff]
  %v2245 = vld [vmem:[%s16 + $0x30] sm:$0xff]
  %v2246 = vld [vmem:[%s16 + $0x38] sm:$0xff]
  %v2247 = vld [vmem:[%s16 + $0x40] sm:$0xff]
  %v2248 = vld [vmem:[%s16 + $0x48] sm:$0xff]
  %v2249 = vld [vmem:[%s16 + $0x50] sm:$0xff]
  %v2250 = vld [vmem:[%s16 + $0x58] sm:$0xff]
  %v2251 = vld [vmem:[%s16 + $0x60] sm:$0xff]
  %v2252 = vld [vmem:[%s16 + $0x68] sm:$0xff]
  %v2253 = vld [vmem:[%s16 + $0x70] sm:$0xff]
  %v2254 = vld [vmem:[%s16 + $0x78] sm:$0xff]
  %v2255 = vld [vmem:[%s16 + $0x80] sm:$0xff]
  %v2256 = vld [vmem:[%s16 + $0x88] sm:$0xff]
  %v2257 = vld [vmem:[%s16 + $0x90] sm:$0xff]
  %v2258 = vld [vmem:[%s16 + $0x98] sm:$0xff]
  %v2259 = vld [vmem:[%s16 + $0xa0] sm:$0xff]
  %v2260 = vld [vmem:[%s16 + $0xa8] sm:$0xff]
  %v2261 = vld [vmem:[%s16 + $0xb0] sm:$0xff]
  %v2262 = vld [vmem:[%s16 + $0xb8] sm:$0xff]
  %v2263 = vld [vmem:[%s16 + $0xc0] sm:$0xff]
  %v2264 = vld [vmem:[%s16 + $0xc8] sm:$0xff]
  %v2265 = vld [vmem:[%s16 + $0xd0] sm:$0xff]
  %v2266 = vld [vmem:[%s16 + $0xd8] sm:$0xff]
  %v2267 = vld [vmem:[%s16 + $0xe0] sm:$0xff]
  %v2268 = vld [vmem:[%s16 + $0xe8] sm:$0xff]
  %v2269 = vld [vmem:[%s16 + $0xf0] sm:$0xff]
  %v2270 = vld [vmem:[%s16 + $0xf8] sm:$0xff]
  %v2271 = vld [vmem:[%s17] sm:$0x1]
  %2272 = vmatprep.subr.mxu0 0.0
  %2273 = vmatpush1.msra.mxu0 %v1533
  %2274 = vmatprep.subr.mxu0 0.0
  %2275 = vmatpush1.msra.mxu0 %v1534
  %2276 = vmatprep.subr.mxu0 0.0
  %2277 = vmatpush1.msra.mxu0 %v1535
  %2278 = vmatprep.subr.mxu0 0.0
  %2279 = vmatpush1.msra.mxu0 %v1536
  %2280 = vmatprep.subr.mxu0 0.0
  %2281 = vmatpush1.msra.mxu0 %v1537
  %2282 = vmatprep.subr.mxu0 0.0
  %2283 = vmatpush1.msra.mxu0 %v1538
  %2284 = vmatprep.subr.mxu0 0.0
  %2285 = vmatpush1.msra.mxu0 %v1539
  %2286 = vmatprep.subr.mxu0 0.0
  %2287 = vmatpush1.msra.mxu0 %v1540
  %2288 = vmatprep.subr.mxu0 0.0
  %2289 = vmatpush1.msra.mxu0 %v1541
  %2290 = vmatprep.subr.mxu0 0.0
  %2291 = vmatpush1.msra.mxu0 %v1542
  %2292 = vmatprep.subr.mxu0 0.0
  %2293 = vmatpush1.msra.mxu0 %v1543
  %2294 = vmatprep.subr.mxu0 0.0
  %2295 = vmatpush1.msra.mxu0 %v1544
  %2296 = vmatprep.subr.mxu0 0.0
  %2297 = vmatpush1.msra.mxu0 %v1545
  %2298 = vmatprep.subr.mxu0 0.0
  %2299 = vmatpush1.msra.mxu0 %v1546
  %2300 = vmatprep.subr.mxu0 0.0
  %2301 = vmatpush1.msra.mxu0 %v1547
  %2302 = vmatprep.subr.mxu0 0.0
  %2303 = vmatpush1.msra.mxu0 %v1548
  %2304 = vmatprep.subr.mxu0 0.0
  %2305 = vmatpush1.msra.mxu0 0.0
  %2306 = vmatprep.subr.mxu0 0.0
  %2307 = vmatpush1.msra.mxu0 0.0
  %2308 = vmatprep.subr.mxu0 0.0
  %2309 = vmatpush1.msra.mxu0 0.0
  %2310 = vmatprep.subr.mxu0 0.0
  %2311 = vmatpush1.msra.mxu0 0.0
  %2312 = vmatprep.subr.mxu0 0.0
  %2313 = vmatpush1.msra.mxu0 0.0
  %2314 = vmatprep.subr.mxu0 0.0
  %2315 = vmatpush1.msra.mxu0 0.0
  %2316 = vmatprep.subr.mxu0 0.0
  %2317 = vmatpush1.msra.mxu0 0.0
  %2318 = vmatprep.subr.mxu0 0.0
  %2319 = vmatpush1.msra.mxu0 0.0
  %2320 = vmatprep.subr.mxu0 0.0
  %2321 = vmatpush1.msra.mxu0 0.0
  %2322 = vmatprep.subr.mxu0 0.0
  %2323 = vmatpush1.msra.mxu0 0.0
  %2324 = vmatprep.subr.mxu0 0.0
  %2325 = vmatpush1.msra.mxu0 0.0
  %2326 = vmatprep.subr.mxu0 0.0
  %2327 = vmatpush1.msra.mxu0 0.0
  %2328 = vmatprep.subr.mxu0 0.0
  %2329 = vmatpush1.msra.mxu0 0.0
  %2330 = vmatprep.subr.mxu0 0.0
  %2331 = vmatpush1.msra.mxu0 0.0
  %2332 = vmatprep.subr.mxu0 0.0
  %2333 = vmatpush1.msra.mxu0 0.0
  %2334 = vmatprep.subr.mxu0 0.0
  %2335 = vmatpush1.msra.mxu0 0.0
  %2336 = vmatprep.mubr.f32.mxu0 0.0
  %2337 = vmatmul.mubr.f32.gmra.mrb[0].mxu0 %v1549
  %v2338 = vpop.f32.mrb[0].mxu0
  %v2339 = vadd.f32 0.0, %v2338
  %v2340 = vpop.f32.mrb[0].mxu0
  %2341 = vmatprep.mubr.f32.mxu0 0.0
  %2342 = vmatmul.mubr.f32.gmra.mrb[0].mxu0 %v1550
  %v2343 = vpop.f32.mrb[0].mxu0
  %v2344 = vadd.f32 0.0, %v2343
  %v2345 = vpop.f32.mrb[0].mxu0
  %2346 = vmatprep.mubr.f32.mxu0 0.0
  %2347 = vmatmul.mubr.f32.gmra.mrb[0].mxu0 %v1551
  %v2348 = vpop.f32.mrb[0].mxu0
  %v2349 = vadd.f32 0.0, %v2348
  %v2350 = vpop.f32.mrb[0].mxu0
  %2351 = vmatprep.mubr.f32.mxu0 0.0
  %2352 = vmatmul.mubr.f32.gmra.mrb[0].mxu0 %v1552
  %v2353 = vpop.f32.mrb[0].mxu0
  %v2354 = vadd.f32 0.0, %v2353
  %v2355 = vpop.f32.mrb[0].mxu0
  %2356 = vmatprep.mubr.f32.mxu0 0.0
  %2357 = vmatmul.mubr.f32.gmra.mrb[0].mxu0 %v1553
  %v2358 = vpop.f32.mrb[0].mxu0
  %v2359 = vadd.f32 0.0, %v2358
  %v2360 = vpop.f32.mrb[0].mxu0
  %2361 = vmatprep.mubr.f32.mxu0 0.0
  %2362 = vmatmul.mubr.f32.gmra.mrb[0].mxu0 %v1554
  %v2363 = vpop.f32.mrb[0].mxu0
  %v2364 = vadd.f32 0.0, %v2363
  %v2365 = vpop.f32.mrb[0].mxu0
  %2366 = vmatprep.mubr.f32.mxu0 0.0
  %2367 = vmatmul.mubr.f32.gmra.mrb[0].mxu0 %v1555
  %v2368 = vpop.f32.mrb[0].mxu0
  %v2369 = vadd.f32 0.0, %v2368
  %v2370 = vpop.f32.mrb[0].mxu0
  %2371 = vmatprep.mubr.f32.mxu0 0.0
  %2372 = vmatmul.mubr.f32.gmra.mrb[0].mxu0 %v1556
  %v2373 = vpop.f32.mrb[0].mxu0
  %v2374 = vadd.f32 0.0, %v2373
  %v2375 = vpop.f32.mrb[0].mxu0
  %2376 = vmatprep.mubr.f32.mxu0 0.0
  %2377 = vmatmul.mubr.f32.gmra.mrb[0].mxu0 %v1557
  %v2378 = vpop.f32.mrb[0].mxu0
  %v2379 = vadd.f32 0.0, %v2378
  %v2380 = vpop.f32.mrb[0].mxu0
  %2381 = vmatprep.mubr.f32.mxu0 0.0
  %2382 = vmatmul.mubr.f32.gmra.mrb[0].mxu0 %v1558
  %v2383 = vpop.f32.mrb[0].mxu0
  %v2384 = vadd.f32 0.0, %v2383
  %v2385 = vpop.f32.mrb[0].mxu0
  %2386 = vmatprep.mubr.f32.mxu0 0.0
  %2387 = vmatmul.mubr.f32.gmra.mrb[0].mxu0 %v1559
  %v2388 = vpop.f32.mrb[0].mxu0
  %v2389 = vadd.f32 0.0, %v2388
  %v2390 = vpop.f32.mrb[0].mxu0
  %2391 = vmatprep.mubr.f32.mxu0 0.0
  %2392 = vmatmul.mubr.f32.gmra.mrb[0].mxu0 %v1560
  %v2393 = vpop.f32.mrb[0].mxu0
  %v2394 = vadd.f32 0.0, %v2393
  %v2395 = vpop.f32.mrb[0].mxu0
  %2396 = vmatprep.mubr.f32.mxu0 0.0
  %2397 = vmatmul.mubr.f32.gmra.mrb[0].mxu0 %v1561
  %v2398 = vpop.f32.mrb[0].mxu0
  %v2399 = vadd.f32 0.0, %v2398
  %v2400 = vpop.f32.mrb[0].mxu0
  %2401 = vmatprep.mubr.f32.mxu0 0.0
  %2402 = vmatmul.mubr.f32.gmra.mrb[0].mxu0 %v1562
  %v2403 = vpop.f32.mrb[0].mxu0
  %v2404 = vadd.f32 0.0, %v2403
  %v2405 = vpop.f32.mrb[0].mxu0
  %2406 = vmatprep.mubr.f32.mxu0 0.0
  %2407 = vmatmul.mubr.f32.gmra.mrb[0].mxu0 %v1563
  %v2408 = vpop.f32.mrb[0].mxu0
  %v2409 = vadd.f32 0.0, %v2408
  %v2410 = vpop.f32.mrb[0].mxu0
  %2411 = vmatprep.mubr.f32.mxu0 0.0
  %2412 = vmatmul.mubr.f32.gmra.mrb[0].mxu0 %v1564
  %v2413 = vpop.f32.mrb[0].mxu0
  %v2414 = vadd.f32 0.0, %v2413
  %v2415 = vpop.f32.mrb[0].mxu0
  %2416 = vdwg.mxu0
  %v2418 = vlaneseq
  %v2419 = vshrl.u32 %v2418, 7
  %v2420 = vsub.s32 0, %v2419
  %v2421 = vrot.slane %v2271, %v2420
  %2423 = vmatprep.subr.mxu0 0.0
  %2424 = vmatpush1.msra.mxu0 %v2239
  %2425 = vmatprep.subr.mxu0 0.0
  %2426 = vmatpush1.msra.mxu0 %v2240
  %2427 = vmatprep.subr.mxu0 0.0
  %2428 = vmatpush1.msra.mxu0 %v2241
  %2429 = vmatprep.subr.mxu0 0.0
  %2430 = vmatpush1.msra.mxu0 %v2242
  %2431 = vmatprep.subr.mxu0 0.0
  %2432 = vmatpush1.msra.mxu0 %v2243
  %2433 = vmatprep.subr.mxu0 0.0
  %2434 = vmatpush1.msra.mxu0 %v2244
  %2435 = vmatprep.subr.mxu0 0.0
  %2436 = vmatpush1.msra.mxu0 %v2245
  %2437 = vmatprep.subr.mxu0 0.0
  %2438 = vmatpush1.msra.mxu0 %v2246
  %2439 = vmatprep.subr.mxu0 0.0
  %2440 = vmatpush1.msra.mxu0 %v2247
  %2441 = vmatprep.subr.mxu0 0.0
  %2442 = vmatpush1.msra.mxu0 %v2248
  %2443 = vmatprep.subr.mxu0 0.0
  %2444 = vmatpush1.msra.mxu0 %v2249
  %2445 = vmatprep.subr.mxu0 0.0
  %2446 = vmatpush1.msra.mxu0 %v2250
  %2447 = vmatprep.subr.mxu0 0.0
  %2448 = vmatpush1.msra.mxu0 %v2251
  %2449 = vmatprep.subr.mxu0 0.0
  %2450 = vmatpush1.msra.mxu0 %v2252
  %2451 = vmatprep.subr.mxu0 0.0
  %2452 = vmatpush1.msra.mxu0 %v2253
  %2453 = vmatprep.subr.mxu0 0.0
  %2454 = vmatpush1.msra.mxu0 %v2254
  %2455 = vmatprep.subr.mxu0 0.0
  %2456 = vmatpush1.msra.mxu0 %v2255
  %2457 = vmatprep.subr.mxu0 0.0
  %2458 = vmatpush1.msra.mxu0 %v2256
  %2459 = vmatprep.subr.mxu0 0.0
  %2460 = vmatpush1.msra.mxu0 %v2257
  %2461 = vmatprep.subr.mxu0 0.0
  %2462 = vmatpush1.msra.mxu0 %v2258
  %2463 = vmatprep.subr.mxu0 0.0
  %2464 = vmatpush1.msra.mxu0 %v2259
  %2465 = vmatprep.subr.mxu0 0.0
  %2466 = vmatpush1.msra.mxu0 %v2260
  %2467 = vmatprep.subr.mxu0 0.0
  %2468 = vmatpush1.msra.mxu0 %v2261
  %2469 = vmatprep.subr.mxu0 0.0
  %2470 = vmatpush1.msra.mxu0 %v2262
  %2471 = vmatprep.subr.mxu0 0.0
  %2472 = vmatpush1.msra.mxu0 %v2263
  %2473 = vmatprep.subr.mxu0 0.0
  %2474 = vmatpush1.msra.mxu0 %v2264
  %2475 = vmatprep.subr.mxu0 0.0
  %2476 = vmatpush1.msra.mxu0 %v2265
  %2477 = vmatprep.subr.mxu0 0.0
  %2478 = vmatpush1.msra.mxu0 %v2266
  %2479 = vmatprep.subr.mxu0 0.0
  %2480 = vmatpush1.msra.mxu0 %v2267
  %2481 = vmatprep.subr.mxu0 0.0
  %2482 = vmatpush1.msra.mxu0 %v2268
  %2483 = vmatprep.subr.mxu0 0.0
  %2484 = vmatpush1.msra.mxu0 %v2269
  %2485 = vmatprep.subr.mxu0 0.0
  %2486 = vmatpush1.msra.mxu0 %v2270
  %2487 = vmatprep.mubr.f32.mxu0 %v1894
  %2488 = vmatmul.mubr.f32.gmra.mrb[0].mxu0 %v2339
  %v2489 = vpop.f32.mrb[0].mxu0
  %v2490 = vadd.f32 %v2421, %v2489
  %v2491 = vpop.f32.mrb[0].mxu0
  %2492 = vmatprep.mubr.f32.mxu0 %v1895
  %2493 = vmatmul.mubr.f32.gmra.mrb[0].mxu0 %v2344
  %v2494 = vpop.f32.mrb[0].mxu0
  %v2495 = vadd.f32 %v2421, %v2494
  %v2496 = vpop.f32.mrb[0].mxu0
  %2497 = vmatprep.mubr.f32.mxu0 %v1896
  %2498 = vmatmul.mubr.f32.gmra.mrb[0].mxu0 %v2349
  %v2499 = vpop.f32.mrb[0].mxu0
  %v2500 = vadd.f32 %v2421, %v2499
  %v2501 = vpop.f32.mrb[0].mxu0
  %2502 = vmatprep.mubr.f32.mxu0 %v1897
  %2503 = vmatmul.mubr.f32.gmra.mrb[0].mxu0 %v2354
  %v2504 = vpop.f32.mrb[0].mxu0
  %v2505 = vadd.f32 %v2421, %v2504
  %v2506 = vpop.f32.mrb[0].mxu0
  %2507 = vmatprep.mubr.f32.mxu0 %v1898
  %2508 = vmatmul.mubr.f32.gmra.mrb[0].mxu0 %v2359
  %v2509 = vpop.f32.mrb[0].mxu0
  %v2510 = vadd.f32 %v2421, %v2509
  %v2511 = vpop.f32.mrb[0].mxu0
  %2512 = vmatprep.mubr.f32.mxu0 %v1899
  %2513 = vmatmul.mubr.f32.gmra.mrb[0].mxu0 %v2364
  %v2514 = vpop.f32.mrb[0].mxu0
  %v2515 = vadd.f32 %v2421, %v2514
  %v2516 = vpop.f32.mrb[0].mxu0
  %2517 = vmatprep.mubr.f32.mxu0 %v1900
  %2518 = vmatmul.mubr.f32.gmra.mrb[0].mxu0 %v2369
  %v2519 = vpop.f32.mrb[0].mxu0
  %v2520 = vadd.f32 %v2421, %v2519
  %v2521 = vpop.f32.mrb[0].mxu0
  %2522 = vmatprep.mubr.f32.mxu0 %v1901
  %2523 = vmatmul.mubr.f32.gmra.mrb[0].mxu0 %v2374
  %v2524 = vpop.f32.mrb[0].mxu0
  %v2525 = vadd.f32 %v2421, %v2524
  %v2526 = vpop.f32.mrb[0].mxu0
  %2527 = vmatprep.mubr.f32.mxu0 %v1902
  %2528 = vmatmul.mubr.f32.gmra.mrb[0].mxu0 %v2379
  %v2529 = vpop.f32.mrb[0].mxu0
  %v2530 = vadd.f32 %v2421, %v2529
  %v2531 = vpop.f32.mrb[0].mxu0
  %2532 = vmatprep.mubr.f32.mxu0 %v1903
  %2533 = vmatmul.mubr.f32.gmra.mrb[0].mxu0 %v2384
  %v2534 = vpop.f32.mrb[0].mxu0
  %v2535 = vadd.f32 %v2421, %v2534
  %v2536 = vpop.f32.mrb[0].mxu0
  %2537 = vmatprep.mubr.f32.mxu0 %v1904
  %2538 = vmatmul.mubr.f32.gmra.mrb[0].mxu0 %v2389
  %v2539 = vpop.f32.mrb[0].mxu0
  %v2540 = vadd.f32 %v2421, %v2539
  %v2541 = vpop.f32.mrb[0].mxu0
  %2542 = vmatprep.mubr.f32.mxu0 %v1905
  %2543 = vmatmul.mubr.f32.gmra.mrb[0].mxu0 %v2394
  %v2544 = vpop.f32.mrb[0].mxu0
  %v2545 = vadd.f32 %v2421, %v2544
  %v2546 = vpop.f32.mrb[0].mxu0
  %2547 = vmatprep.mubr.f32.mxu0 %v1906
  %2548 = vmatmul.mubr.f32.gmra.mrb[0].mxu0 %v2399
  %v2549 = vpop.f32.mrb[0].mxu0
  %v2550 = vadd.f32 %v2421, %v2549
  %v2551 = vpop.f32.mrb[0].mxu0
  %2552 = vmatprep.mubr.f32.mxu0 %v1907
  %2553 = vmatmul.mubr.f32.gmra.mrb[0].mxu0 %v2404
  %v2554 = vpop.f32.mrb[0].mxu0
  %v2555 = vadd.f32 %v2421, %v2554
  %v2556 = vpop.f32.mrb[0].mxu0
  %2557 = vmatprep.mubr.f32.mxu0 %v1908
  %2558 = vmatmul.mubr.f32.gmra.mrb[0].mxu0 %v2409
  %v2559 = vpop.f32.mrb[0].mxu0
  %v2560 = vadd.f32 %v2421, %v2559
  %v2561 = vpop.f32.mrb[0].mxu0
  %2562 = vmatprep.mubr.f32.mxu0 %v1909
  %2563 = vmatmul.mubr.f32.gmra.mrb[0].mxu0 %v2414
  %v2564 = vpop.f32.mrb[0].mxu0
  %v2565 = vadd.f32 %v2421, %v2564
  %v2566 = vpop.f32.mrb[0].mxu0
  %2567 = vdwg.mxu0
  %v2568 = vld [vmem:[%s18] sm:$0xff]
  %v2569 = vld [vmem:[%s18 + $0x8] sm:$0xff]
  %v2570 = vld [vmem:[%s18 + $0x10] sm:$0xff]
  %v2571 = vld [vmem:[%s18 + $0x18] sm:$0xff]
  %v2572 = vld [vmem:[%s18 + $0x20] sm:$0xff]
  %v2573 = vld [vmem:[%s18 + $0x28] sm:$0xff]
  %v2574 = vld [vmem:[%s18 + $0x30] sm:$0xff]
  %v2575 = vld [vmem:[%s18 + $0x38] sm:$0xff]
  %v2576 = vld [vmem:[%s18 + $0x40] sm:$0xff]
  %v2577 = vld [vmem:[%s18 + $0x48] sm:$0xff]
  %v2578 = vld [vmem:[%s18 + $0x50] sm:$0xff]
  %v2579 = vld [vmem:[%s18 + $0x58] sm:$0xff]
  %v2580 = vld [vmem:[%s18 + $0x60] sm:$0xff]
  %v2581 = vld [vmem:[%s18 + $0x68] sm:$0xff]
  %v2582 = vld [vmem:[%s18 + $0x70] sm:$0xff]
  %v2583 = vld [vmem:[%s18 + $0x78] sm:$0xff]
  %2584 = vmatprep.subr.mxu0 0.0
  %2585 = vmatpush1.msra.mxu0 %v2490
  %2586 = vmatprep.subr.mxu0 0.0
  %2587 = vmatpush1.msra.mxu0 %v2495
  %2588 = vmatprep.subr.mxu0 0.0
  %2589 = vmatpush1.msra.mxu0 %v2500
  %2590 = vmatprep.subr.mxu0 0.0
  %2591 = vmatpush1.msra.mxu0 %v2505
  %2592 = vmatprep.subr.mxu0 0.0
  %2593 = vmatpush1.msra.mxu0 %v2510
  %2594 = vmatprep.subr.mxu0 0.0
  %2595 = vmatpush1.msra.mxu0 %v2515
  %2596 = vmatprep.subr.mxu0 0.0
  %2597 = vmatpush1.msra.mxu0 %v2520
  %2598 = vmatprep.subr.mxu0 0.0
  %2599 = vmatpush1.msra.mxu0 %v2525
  %2600 = vmatprep.subr.mxu0 0.0
  %2601 = vmatpush1.msra.mxu0 %v2530
  %2602 = vmatprep.subr.mxu0 0.0
  %2603 = vmatpush1.msra.mxu0 %v2535
  %2604 = vmatprep.subr.mxu0 0.0
  %2605 = vmatpush1.msra.mxu0 %v2540
  %2606 = vmatprep.subr.mxu0 0.0
  %2607 = vmatpush1.msra.mxu0 %v2545
  %2608 = vmatprep.subr.mxu0 0.0
  %2609 = vmatpush1.msra.mxu0 %v2550
  %2610 = vmatprep.subr.mxu0 0.0
  %2611 = vmatpush1.msra.mxu0 %v2555
  %2612 = vmatprep.subr.mxu0 0.0
  %2613 = vmatpush1.msra.mxu0 %v2560
  %2614 = vmatprep.subr.mxu0 0.0
  %2615 = vmatpush1.msra.mxu0 %v2565
  %2616 = vmatprep.subr.mxu0 0.0
  %2617 = vmatpush1.msra.mxu0 0.0
  %2618 = vmatprep.subr.mxu0 0.0
  %2619 = vmatpush1.msra.mxu0 0.0
  %2620 = vmatprep.subr.mxu0 0.0
  %2621 = vmatpush1.msra.mxu0 0.0
  %2622 = vmatprep.subr.mxu0 0.0
  %2623 = vmatpush1.msra.mxu0 0.0
  %2624 = vmatprep.subr.mxu0 0.0
  %2625 = vmatpush1.msra.mxu0 0.0
  %2626 = vmatprep.subr.mxu0 0.0
  %2627 = vmatpush1.msra.mxu0 0.0
  %2628 = vmatprep.subr.mxu0 0.0
  %2629 = vmatpush1.msra.mxu0 0.0
  %2630 = vmatprep.subr.mxu0 0.0
  %2631 = vmatpush1.msra.mxu0 0.0
  %2632 = vmatprep.subr.mxu0 0.0
  %2633 = vmatpush1.msra.mxu0 0.0
  %2634 = vmatprep.subr.mxu0 0.0
  %2635 = vmatpush1.msra.mxu0 0.0
  %2636 = vmatprep.subr.mxu0 0.0
  %2637 = vmatpush1.msra.mxu0 0.0
  %2638 = vmatprep.subr.mxu0 0.0
  %2639 = vmatpush1.msra.mxu0 0.0
  %2640 = vmatprep.subr.mxu0 0.0
  %2641 = vmatpush1.msra.mxu0 0.0
  %2642 = vmatprep.subr.mxu0 0.0
  %2643 = vmatpush1.msra.mxu0 0.0
  %2644 = vmatprep.subr.mxu0 0.0
  %2645 = vmatpush1.msra.mxu0 0.0
  %2646 = vmatprep.subr.mxu0 0.0
  %2647 = vmatpush1.msra.mxu0 0.0
  %2648 = vmatprep.mubr.f32.mxu0 0.0
  %2649 = vmatmul.mubr.f32.gmra.mrb[0].mxu0 %v2568
  %v2650 = vpop.f32.mrb[0].mxu0
  %v2651 = vadd.f32 0.0, %v2650
  %v2652 = vpop.f32.mrb[0].mxu0
  %2653 = vmatprep.mubr.f32.mxu0 0.0
  %2654 = vmatmul.mubr.f32.gmra.mrb[0].mxu0 %v2569
  %v2655 = vpop.f32.mrb[0].mxu0
  %v2656 = vadd.f32 0.0, %v2655
  %v2657 = vpop.f32.mrb[0].mxu0
  %2658 = vmatprep.mubr.f32.mxu0 0.0
  %2659 = vmatmul.mubr.f32.gmra.mrb[0].mxu0 %v2570
  %v2660 = vpop.f32.mrb[0].mxu0
  %v2661 = vadd.f32 0.0, %v2660
  %v2662 = vpop.f32.mrb[0].mxu0
  %2663 = vmatprep.mubr.f32.mxu0 0.0
  %2664 = vmatmul.mubr.f32.gmra.mrb[0].mxu0 %v2571
  %v2665 = vpop.f32.mrb[0].mxu0
  %v2666 = vadd.f32 0.0, %v2665
  %v2667 = vpop.f32.mrb[0].mxu0
  %2668 = vmatprep.mubr.f32.mxu0 0.0
  %2669 = vmatmul.mubr.f32.gmra.mrb[0].mxu0 %v2572
  %v2670 = vpop.f32.mrb[0].mxu0
  %v2671 = vadd.f32 0.0, %v2670
  %v2672 = vpop.f32.mrb[0].mxu0
  %2673 = vmatprep.mubr.f32.mxu0 0.0
  %2674 = vmatmul.mubr.f32.gmra.mrb[0].mxu0 %v2573
  %v2675 = vpop.f32.mrb[0].mxu0
  %v2676 = vadd.f32 0.0, %v2675
  %v2677 = vpop.f32.mrb[0].mxu0
  %2678 = vmatprep.mubr.f32.mxu0 0.0
  %2679 = vmatmul.mubr.f32.gmra.mrb[0].mxu0 %v2574
  %v2680 = vpop.f32.mrb[0].mxu0
  %v2681 = vadd.f32 0.0, %v2680
  %v2682 = vpop.f32.mrb[0].mxu0
  %2683 = vmatprep.mubr.f32.mxu0 0.0
  %2684 = vmatmul.mubr.f32.gmra.mrb[0].mxu0 %v2575
  %v2685 = vpop.f32.mrb[0].mxu0
  %v2686 = vadd.f32 0.0, %v2685
  %v2687 = vpop.f32.mrb[0].mxu0
  %2688 = vmatprep.mubr.f32.mxu0 0.0
  %2689 = vmatmul.mubr.f32.gmra.mrb[0].mxu0 %v2576
  %v2690 = vpop.f32.mrb[0].mxu0
  %v2691 = vadd.f32 0.0, %v2690
  %v2692 = vpop.f32.mrb[0].mxu0
  %2693 = vmatprep.mubr.f32.mxu0 0.0
  %2694 = vmatmul.mubr.f32.gmra.mrb[0].mxu0 %v2577
  %v2695 = vpop.f32.mrb[0].mxu0
  %v2696 = vadd.f32 0.0, %v2695
  %v2697 = vpop.f32.mrb[0].mxu0
  %2698 = vmatprep.mubr.f32.mxu0 0.0
  %2699 = vmatmul.mubr.f32.gmra.mrb[0].mxu0 %v2578
  %v2700 = vpop.f32.mrb[0].mxu0
  %v2701 = vadd.f32 0.0, %v2700
  %v2702 = vpop.f32.mrb[0].mxu0
  %2703 = vmatprep.mubr.f32.mxu0 0.0
  %2704 = vmatmul.mubr.f32.gmra.mrb[0].mxu0 %v2579
  %v2705 = vpop.f32.mrb[0].mxu0
  %v2706 = vadd.f32 0.0, %v2705
  %v2707 = vpop.f32.mrb[0].mxu0
  %2708 = vmatprep.mubr.f32.mxu0 0.0
  %2709 = vmatmul.mubr.f32.gmra.mrb[0].mxu0 %v2580
  %v2710 = vpop.f32.mrb[0].mxu0
  %v2711 = vadd.f32 0.0, %v2710
  %v2712 = vpop.f32.mrb[0].mxu0
  %2713 = vmatprep.mubr.f32.mxu0 0.0
  %2714 = vmatmul.mubr.f32.gmra.mrb[0].mxu0 %v2581
  %v2715 = vpop.f32.mrb[0].mxu0
  %v2716 = vadd.f32 0.0, %v2715
  %v2717 = vpop.f32.mrb[0].mxu0
  %2718 = vmatprep.mubr.f32.mxu0 0.0
  %2719 = vmatmul.mubr.f32.gmra.mrb[0].mxu0 %v2582
  %v2720 = vpop.f32.mrb[0].mxu0
  %v2721 = vadd.f32 0.0, %v2720
  %v2722 = vpop.f32.mrb[0].mxu0
  %2723 = vmatprep.mubr.f32.mxu0 0.0
  %2724 = vmatmul.mubr.f32.gmra.mrb[0].mxu0 %v2583
  %v2725 = vpop.f32.mrb[0].mxu0
  %v2726 = vadd.f32 0.0, %v2725
  %v2727 = vpop.f32.mrb[0].mxu0
  %2728 = vdwg.mxu0
  %v2729 = vld [vmem:[%s19] sm:$0xff]
  %v2730 = vld [vmem:[%s19 + $0x8] sm:$0xff]
  %v2731 = vld [vmem:[%s19 + $0x10] sm:$0xff]
  %v2732 = vld [vmem:[%s19 + $0x18] sm:$0xff]
  %v2733 = vld [vmem:[%s19 + $0x20] sm:$0xff]
  %v2734 = vld [vmem:[%s19 + $0x28] sm:$0xff]
  %v2735 = vld [vmem:[%s19 + $0x30] sm:$0xff]
  %v2736 = vld [vmem:[%s19 + $0x38] sm:$0xff]
  %v2737 = vld [vmem:[%s19 + $0x40] sm:$0xff]
  %v2738 = vld [vmem:[%s19 + $0x48] sm:$0xff]
  %v2739 = vld [vmem:[%s19 + $0x50] sm:$0xff]
  %v2740 = vld [vmem:[%s19 + $0x58] sm:$0xff]
  %v2741 = vld [vmem:[%s19 + $0x60] sm:$0xff]
  %v2742 = vld [vmem:[%s19 + $0x68] sm:$0xff]
  %v2743 = vld [vmem:[%s19 + $0x70] sm:$0xff]
  %v2744 = vld [vmem:[%s19 + $0x78] sm:$0xff]
  %2745 = vmatprep.subr.mxu0 0.0
  %2746 = vmatpush1.msra.mxu0 %v2161
  %2747 = vmatprep.subr.mxu0 0.0
  %2748 = vmatpush1.msra.mxu0 %v2166
  %2749 = vmatprep.subr.mxu0 0.0
  %2750 = vmatpush1.msra.mxu0 %v2171
  %2751 = vmatprep.subr.mxu0 0.0
  %2752 = vmatpush1.msra.mxu0 %v2176
  %2753 = vmatprep.subr.mxu0 0.0
  %2754 = vmatpush1.msra.mxu0 %v2181
  %2755 = vmatprep.subr.mxu0 0.0
  %2756 = vmatpush1.msra.mxu0 %v2186
  %2757 = vmatprep.subr.mxu0 0.0
  %2758 = vmatpush1.msra.mxu0 %v2191
  %2759 = vmatprep.subr.mxu0 0.0
  %2760 = vmatpush1.msra.mxu0 %v2196
  %2761 = vmatprep.subr.mxu0 0.0
  %2762 = vmatpush1.msra.mxu0 %v2201
  %2763 = vmatprep.subr.mxu0 0.0
  %2764 = vmatpush1.msra.mxu0 %v2206
  %2765 = vmatprep.subr.mxu0 0.0
  %2766 = vmatpush1.msra.mxu0 %v2211
  %2767 = vmatprep.subr.mxu0 0.0
  %2768 = vmatpush1.msra.mxu0 %v2216
  %2769 = vmatprep.subr.mxu0 0.0
  %2770 = vmatpush1.msra.mxu0 %v2221
  %2771 = vmatprep.subr.mxu0 0.0
  %2772 = vmatpush1.msra.mxu0 %v2226
  %2773 = vmatprep.subr.mxu0 0.0
  %2774 = vmatpush1.msra.mxu0 %v2231
  %2775 = vmatprep.subr.mxu0 0.0
  %2776 = vmatpush1.msra.mxu0 %v2236
  %2777 = vmatprep.subr.mxu0 0.0
  %2778 = vmatpush1.msra.mxu0 0.0
  %2779 = vmatprep.subr.mxu0 0.0
  %2780 = vmatpush1.msra.mxu0 0.0
  %2781 = vmatprep.subr.mxu0 0.0
  %2782 = vmatpush1.msra.mxu0 0.0
  %2783 = vmatprep.subr.mxu0 0.0
  %2784 = vmatpush1.msra.mxu0 0.0
  %2785 = vmatprep.subr.mxu0 0.0
  %2786 = vmatpush1.msra.mxu0 0.0
  %2787 = vmatprep.subr.mxu0 0.0
  %2788 = vmatpush1.msra.mxu0 0.0
  %2789 = vmatprep.subr.mxu0 0.0
  %2790 = vmatpush1.msra.mxu0 0.0
  %2791 = vmatprep.subr.mxu0 0.0
  %2792 = vmatpush1.msra.mxu0 0.0
  %2793 = vmatprep.subr.mxu0 0.0
  %2794 = vmatpush1.msra.mxu0 0.0
  %2795 = vmatprep.subr.mxu0 0.0
  %2796 = vmatpush1.msra.mxu0 0.0
  %2797 = vmatprep.subr.mxu0 0.0
  %2798 = vmatpush1.msra.mxu0 0.0
  %2799 = vmatprep.subr.mxu0 0.0
  %2800 = vmatpush1.msra.mxu0 0.0
  %2801 = vmatprep.subr.mxu0 0.0
  %2802 = vmatpush1.msra.mxu0 0.0
  %2803 = vmatprep.subr.mxu0 0.0
  %2804 = vmatpush1.msra.mxu0 0.0
  %2805 = vmatprep.subr.mxu0 0.0
  %2806 = vmatpush1.msra.mxu0 0.0
  %2807 = vmatprep.subr.mxu0 0.0
  %2808 = vmatpush1.msra.mxu0 0.0
  %2809 = vmatprep.mubr.f32.mxu0 0.0
  %2810 = vmatmul.mubr.f32.gmra.mrb[0].mxu0 %v2729
  %v2811 = vpop.f32.mrb[0].mxu0
  %v2812 = vadd.f32 0.0, %v2811
  %v2813 = vpop.f32.mrb[0].mxu0
  %2814 = vmatprep.mubr.f32.mxu0 0.0
  %2815 = vmatmul.mubr.f32.gmra.mrb[0].mxu0 %v2730
  %v2816 = vpop.f32.mrb[0].mxu0
  %v2817 = vadd.f32 0.0, %v2816
  %v2818 = vpop.f32.mrb[0].mxu0
  %2819 = vmatprep.mubr.f32.mxu0 0.0
  %2820 = vmatmul.mubr.f32.gmra.mrb[0].mxu0 %v2731
  %v2821 = vpop.f32.mrb[0].mxu0
  %v2822 = vadd.f32 0.0, %v2821
  %v2823 = vpop.f32.mrb[0].mxu0
  %2824 = vmatprep.mubr.f32.mxu0 0.0
  %2825 = vmatmul.mubr.f32.gmra.mrb[0].mxu0 %v2732
  %v2826 = vpop.f32.mrb[0].mxu0
  %v2827 = vadd.f32 0.0, %v2826
  %v2828 = vpop.f32.mrb[0].mxu0
  %2829 = vmatprep.mubr.f32.mxu0 0.0
  %2830 = vmatmul.mubr.f32.gmra.mrb[0].mxu0 %v2733
  %v2831 = vpop.f32.mrb[0].mxu0
  %v2832 = vadd.f32 0.0, %v2831
  %v2833 = vpop.f32.mrb[0].mxu0
  %2834 = vmatprep.mubr.f32.mxu0 0.0
  %2835 = vmatmul.mubr.f32.gmra.mrb[0].mxu0 %v2734
  %v2836 = vpop.f32.mrb[0].mxu0
  %v2837 = vadd.f32 0.0, %v2836
  %v2838 = vpop.f32.mrb[0].mxu0
  %2839 = vmatprep.mubr.f32.mxu0 0.0
  %2840 = vmatmul.mubr.f32.gmra.mrb[0].mxu0 %v2735
  %v2841 = vpop.f32.mrb[0].mxu0
  %v2842 = vadd.f32 0.0, %v2841
  %v2843 = vpop.f32.mrb[0].mxu0
  %2844 = vmatprep.mubr.f32.mxu0 0.0
  %2845 = vmatmul.mubr.f32.gmra.mrb[0].mxu0 %v2736
  %v2846 = vpop.f32.mrb[0].mxu0
  %v2847 = vadd.f32 0.0, %v2846
  %v2848 = vpop.f32.mrb[0].mxu0
  %2849 = vmatprep.mubr.f32.mxu0 0.0
  %2850 = vmatmul.mubr.f32.gmra.mrb[0].mxu0 %v2737
  %v2851 = vpop.f32.mrb[0].mxu0
  %v2852 = vadd.f32 0.0, %v2851
  %v2853 = vpop.f32.mrb[0].mxu0
  %2854 = vmatprep.mubr.f32.mxu0 0.0
  %2855 = vmatmul.mubr.f32.gmra.mrb[0].mxu0 %v2738
  %v2856 = vpop.f32.mrb[0].mxu0
  %v2857 = vadd.f32 0.0, %v2856
  %v2858 = vpop.f32.mrb[0].mxu0
  %2859 = vmatprep.mubr.f32.mxu0 0.0
  %2860 = vmatmul.mubr.f32.gmra.mrb[0].mxu0 %v2739
  %v2861 = vpop.f32.mrb[0].mxu0
  %v2862 = vadd.f32 0.0, %v2861
  %v2863 = vpop.f32.mrb[0].mxu0
  %2864 = vmatprep.mubr.f32.mxu0 0.0
  %2865 = vmatmul.mubr.f32.gmra.mrb[0].mxu0 %v2740
  %v2866 = vpop.f32.mrb[0].mxu0
  %v2867 = vadd.f32 0.0, %v2866
  %v2868 = vpop.f32.mrb[0].mxu0
  %2869 = vmatprep.mubr.f32.mxu0 0.0
  %2870 = vmatmul.mubr.f32.gmra.mrb[0].mxu0 %v2741
  %v2871 = vpop.f32.mrb[0].mxu0
  %v2872 = vadd.f32 0.0, %v2871
  %v2873 = vpop.f32.mrb[0].mxu0
  %2874 = vmatprep.mubr.f32.mxu0 0.0
  %2875 = vmatmul.mubr.f32.gmra.mrb[0].mxu0 %v2742
  %v2876 = vpop.f32.mrb[0].mxu0
  %v2877 = vadd.f32 0.0, %v2876
  %v2878 = vpop.f32.mrb[0].mxu0
  %2879 = vmatprep.mubr.f32.mxu0 0.0
  %2880 = vmatmul.mubr.f32.gmra.mrb[0].mxu0 %v2743
  %v2881 = vpop.f32.mrb[0].mxu0
  %v2882 = vadd.f32 0.0, %v2881
  %v2883 = vpop.f32.mrb[0].mxu0
  %2884 = vmatprep.mubr.f32.mxu0 0.0
  %2885 = vmatmul.mubr.f32.gmra.mrb[0].mxu0 %v2744
  %v2886 = vpop.f32.mrb[0].mxu0
  %v2887 = vadd.f32 0.0, %v2886
  %v2888 = vpop.f32.mrb[0].mxu0
  %2889 = vdwg.mxu0
  %v2890 = vmul.f32 %v2651, %v2812
  %v2891 = vmul.f32 %v2656, %v2817
  %v2892 = vmul.f32 %v2661, %v2822
  %v2893 = vmul.f32 %v2666, %v2827
  %v2894 = vmul.f32 %v2671, %v2832
  %v2895 = vmul.f32 %v2676, %v2837
  %v2896 = vmul.f32 %v2681, %v2842
  %v2897 = vmul.f32 %v2686, %v2847
  %v2898 = vmul.f32 %v2691, %v2852
  %v2899 = vmul.f32 %v2696, %v2857
  %v2900 = vmul.f32 %v2701, %v2862
  %v2901 = vmul.f32 %v2706, %v2867
  %v2902 = vmul.f32 %v2711, %v2872
  %v2903 = vmul.f32 %v2716, %v2877
  %v2904 = vmul.f32 %v2721, %v2882
  %v2905 = vmul.f32 %v2726, %v2887
  %2906 = vadd.xlane.f32.xlu0 %v2890
  %v2907 = vpop.xlane.xlu0 %2906
  %2908 = vadd.xlane.f32.xlu0 %v2891
  %v2909 = vpop.xlane.xlu0 %2908
  %2910 = vadd.xlane.f32.xlu0 %v2892
  %v2911 = vpop.xlane.xlu0 %2910
  %2912 = vadd.xlane.f32.xlu0 %v2893
  %v2913 = vpop.xlane.xlu0 %2912
  %2914 = vadd.xlane.f32.xlu0 %v2894
  %v2915 = vpop.xlane.xlu0 %2914
  %2916 = vadd.xlane.f32.xlu0 %v2895
  %v2917 = vpop.xlane.xlu0 %2916
  %2918 = vadd.xlane.f32.xlu0 %v2896
  %v2919 = vpop.xlane.xlu0 %2918
  %2920 = vadd.xlane.f32.xlu0 %v2897
  %v2921 = vpop.xlane.xlu0 %2920
  %2922 = vadd.xlane.f32.xlu0 %v2898
  %v2923 = vpop.xlane.xlu0 %2922
  %2924 = vadd.xlane.f32.xlu0 %v2899
  %v2925 = vpop.xlane.xlu0 %2924
  %2926 = vadd.xlane.f32.xlu0 %v2900
  %v2927 = vpop.xlane.xlu0 %2926
  %2928 = vadd.xlane.f32.xlu0 %v2901
  %v2929 = vpop.xlane.xlu0 %2928
  %2930 = vadd.xlane.f32.xlu0 %v2902
  %v2931 = vpop.xlane.xlu0 %2930
  %2932 = vadd.xlane.f32.xlu0 %v2903
  %v2933 = vpop.xlane.xlu0 %2932
  %2934 = vadd.xlane.f32.xlu0 %v2904
  %v2935 = vpop.xlane.xlu0 %2934
  %2936 = vadd.xlane.f32.xlu0 %v2905
  %v2937 = vpop.xlane.xlu0 %2936
  %v2938 = vxor.u32 %v2907, 2147483648
  %v2939 = vxor.u32 %v2909, 2147483648
  %v2940 = vxor.u32 %v2911, 2147483648
  %v2941 = vxor.u32 %v2913, 2147483648
  %v2942 = vxor.u32 %v2915, 2147483648
  %v2943 = vxor.u32 %v2917, 2147483648
  %v2944 = vxor.u32 %v2919, 2147483648
  %v2945 = vxor.u32 %v2921, 2147483648
  %v2946 = vxor.u32 %v2923, 2147483648
  %v2947 = vxor.u32 %v2925, 2147483648
  %v2948 = vxor.u32 %v2927, 2147483648
  %v2949 = vxor.u32 %v2929, 2147483648
  %v2950 = vxor.u32 %v2931, 2147483648
  %v2951 = vxor.u32 %v2933, 2147483648
  %v2952 = vxor.u32 %v2935, 2147483648
  %v2953 = vxor.u32 %v2937, 2147483648
  %v2954 = vmul.f32 %v2938, 1.442695
  %v2955 = vpow.pop %v2954
  %v2956 = vmul.f32 %v2939, 1.442695
  %v2957 = vpow.pop %v2956
  %v2958 = vmul.f32 %v2940, 1.442695
  %v2959 = vpow.pop %v2958
  %v2960 = vmul.f32 %v2941, 1.442695
  %v2961 = vpow.pop %v2960
  %v2962 = vmul.f32 %v2942, 1.442695
  %v2963 = vpow.pop %v2962
  %v2964 = vmul.f32 %v2943, 1.442695
  %v2965 = vpow.pop %v2964
  %v2966 = vmul.f32 %v2944, 1.442695
  %v2967 = vpow.pop %v2966
  %v2968 = vmul.f32 %v2945, 1.442695
  %v2969 = vpow.pop %v2968
  %v2970 = vmul.f32 %v2946, 1.442695
  %v2971 = vpow.pop %v2970
  %v2972 = vmul.f32 %v2947, 1.442695
  %v2973 = vpow.pop %v2972
  %v2974 = vmul.f32 %v2948, 1.442695
  %v2975 = vpow.pop %v2974
  %v2976 = vmul.f32 %v2949, 1.442695
  %v2977 = vpow.pop %v2976
  %v2978 = vmul.f32 %v2950, 1.442695
  %v2979 = vpow.pop %v2978
  %v2980 = vmul.f32 %v2951, 1.442695
  %v2981 = vpow.pop %v2980
  %v2982 = vmul.f32 %v2952, 1.442695
  %v2983 = vpow.pop %v2982
  %v2984 = vmul.f32 %v2953, 1.442695
  %v2985 = vpow.pop %v2984
  %v2986 = vadd.f32 %v2955, 1.0
  %v2987 = vadd.f32 %v2957, 1.0
  %v2988 = vadd.f32 %v2959, 1.0
  %v2989 = vadd.f32 %v2961, 1.0
  %v2990 = vadd.f32 %v2963, 1.0
  %v2991 = vadd.f32 %v2965, 1.0
  %v2992 = vadd.f32 %v2967, 1.0
  %v2993 = vadd.f32 %v2969, 1.0
  %v2994 = vadd.f32 %v2971, 1.0
  %v2995 = vadd.f32 %v2973, 1.0
  %v2996 = vadd.f32 %v2975, 1.0
  %v2997 = vadd.f32 %v2977, 1.0
  %v2998 = vadd.f32 %v2979, 1.0
  %v2999 = vadd.f32 %v2981, 1.0
  %v3000 = vadd.f32 %v2983, 1.0
  %v3001 = vadd.f32 %v2985, 1.0
  %v3002 = vrcp.pop %v2986
  %v3003 = vmul.f32 1.0, %v3002
  %v3004 = vrcp.pop %v2987
  %v3005 = vmul.f32 1.0, %v3004
  %v3006 = vrcp.pop %v2988
  %v3007 = vmul.f32 1.0, %v3006
  %v3008 = vrcp.pop %v2989
  %v3009 = vmul.f32 1.0, %v3008
  %v3010 = vrcp.pop %v2990
  %v3011 = vmul.f32 1.0, %v3010
  %v3012 = vrcp.pop %v2991
  %v3013 = vmul.f32 1.0, %v3012
  %v3014 = vrcp.pop %v2992
  %v3015 = vmul.f32 1.0, %v3014
  %v3016 = vrcp.pop %v2993
  %v3017 = vmul.f32 1.0, %v3016
  %v3018 = vrcp.pop %v2994
  %v3019 = vmul.f32 1.0, %v3018
  %v3020 = vrcp.pop %v2995
  %v3021 = vmul.f32 1.0, %v3020
  %v3022 = vrcp.pop %v2996
  %v3023 = vmul.f32 1.0, %v3022
  %v3024 = vrcp.pop %v2997
  %v3025 = vmul.f32 1.0, %v3024
  %v3026 = vrcp.pop %v2998
  %v3027 = vmul.f32 1.0, %v3026
  %v3028 = vrcp.pop %v2999
  %v3029 = vmul.f32 1.0, %v3028
  %v3030 = vrcp.pop %v3000
  %v3031 = vmul.f32 1.0, %v3030
  %v3032 = vrcp.pop %v3001
  %v3033 = vmul.f32 1.0, %v3032
  %vm3034 = vcmask 7168
  %3035 = vst.msk [vmem:[%s20] sm:$0xff] %vm3034, %v3003
  %3036 = vst.msk [vmem:[%s20 + $0x8] sm:$0xff] %vm3034, %v3005
  %3037 = vst.msk [vmem:[%s20 + $0x10] sm:$0xff] %vm3034, %v3007
  %3038 = vst.msk [vmem:[%s20 + $0x18] sm:$0xff] %vm3034, %v3009
  %3039 = vst.msk [vmem:[%s20 + $0x20] sm:$0xff] %vm3034, %v3011
  %3040 = vst.msk [vmem:[%s20 + $0x28] sm:$0xff] %vm3034, %v3013
  %3041 = vst.msk [vmem:[%s20 + $0x30] sm:$0xff] %vm3034, %v3015
  %3042 = vst.msk [vmem:[%s20 + $0x38] sm:$0xff] %vm3034, %v3017
  %3043 = vst.msk [vmem:[%s20 + $0x40] sm:$0xff] %vm3034, %v3019
  %3044 = vst.msk [vmem:[%s20 + $0x48] sm:$0xff] %vm3034, %v3021
  %3045 = vst.msk [vmem:[%s20 + $0x50] sm:$0xff] %vm3034, %v3023
  %3046 = vst.msk [vmem:[%s20 + $0x58] sm:$0xff] %vm3034, %v3025
  %3047 = vst.msk [vmem:[%s20 + $0x60] sm:$0xff] %vm3034, %v3027
  %3048 = vst.msk [vmem:[%s20 + $0x68] sm:$0xff] %vm3034, %v3029
  %3049 = vst.msk [vmem:[%s20 + $0x70] sm:$0xff] %vm3034, %v3031
  %3050 = vst.msk [vmem:[%s20 + $0x78] sm:$0xff] %vm3034, %v3033
  // Predicated region
  $region82: #{model_forward.1} parent=0 // pred_check
    _
  $region83: #{model_forward.1} parent=0 // pred_check_branch
    %3052 = sbr.rel (0) target = $region85
  $region84: #{model_forward.1} parent=0 // pred_region
    _
  $region85: #{model_forward.1} parent=0 // pred_fallthru
    _
  // Predicated region
  $region86: #{model_forward.1} parent=0 // pred_check
    _
  $region87: #{model_forward.1} parent=0 // pred_check_branch
    %3054 = sbr.rel (0) target = $region89
  $region88: #{model_forward.1} parent=0 // pred_region
    _
  $region89: #{model_forward.1} parent=0 // pred_fallthru
    _

</llo_original>
